<compile_context>
chip_gen: v7x
topology: tpu7x:2x2x1
jax: 0.10.0
libtpu: 0.0.40
codegen_flags: <defaults>
</compile_context>

<pallas_src>
import jax
import jax.numpy as jnp
from jax.experimental import pallas as pl
from jax.experimental.pallas import tpu as pltpu

K_EXPERTS = 4
TEMPERATURE = 34.0
BN_EPS = 1e-5


def _round_up(v, m):
    return ((v + m - 1) // m) * m


def _pick_tile_m(hw):
    if hw >= 2048:
        return 1024            # v6e: amortize per-step overhead on big images
    if hw >= 1024:
        return 512
    if hw >= 256:
        return 256
    return _round_up(hw, 8)    # tiny images: one (sublane-aligned) tile


# ----------------------------- Pallas kernels ------------------------------

def _make_static_dyn_kernel(G, n_exp):
    """Static columns: +bias, ReLU, bf16 store (lane-dense, 128-padded).
    Dynamic expert columns: attention combine + combined bias + ReLU in-kernel,
    so only G columns ever reach HBM."""
    def kernel(x_ref, ws_ref, bs_ref, wd_ref, attx_ref, bcomb_ref,
               ys_ref, yd_ref):
        x = x_ref[0]                                            # (tm, Kd) bf16
        ys = jnp.dot(x, ws_ref[...], preferred_element_type=jnp.float32)
        ys = ys + bs_ref[...]
        ys_ref[0] = jnp.maximum(ys, 0.0).astype(ys_ref.dtype)

        yexp = jnp.dot(x, wd_ref[...], preferred_element_type=jnp.float32)
        yexp = yexp * attx_ref[0]                               # (tm,K*G)*(1,K*G)
        acc = yexp[:, 0:G]
        for k in range(1, n_exp):                               # static unroll
            acc = acc + yexp[:, k * G:(k + 1) * G]
        acc = acc + bcomb_ref[0]                                # (1, G) broadcast
        yd_ref[0] = jnp.maximum(acc, 0.0)
    return kernel


def _make_dyn_kernel(G, n_exp):
    """Dynamic-conv-only variant (expert matmul + in-kernel attention combine)."""
    def kernel(x_ref, wd_ref, attx_ref, bcomb_ref, yd_ref):
        yexp = jnp.dot(x_ref[0], wd_ref[...],
                       preferred_element_type=jnp.float32)
        yexp = yexp * attx_ref[0]
        acc = yexp[:, 0:G]
        for k in range(1, n_exp):
            acc = acc + yexp[:, k * G:(k + 1) * G]
        acc = acc + bcomb_ref[0]
        yd_ref[0] = jnp.maximum(acc, 0.0)
    return kernel


# ------------------------------ kernel wrappers -----------------------------

def fused_static_dyn_matmul(x3d, w_static, b_static, w_dyn, att, bias_k, G):
    """x3d: (B, HW, Kd) bf16.  Returns (ys bf16 (B,HW,Ns), yd f32 (B,HW,G))."""
    B, HW, Kd = x3d.shape
    Ns = w_static.shape[1]
    Ns_pad = _round_up(Ns, 128)          # lane-dense output store
    KG = w_dyn.shape[1]
    tile_m = _pick_tile_m(HW)
    HWp = _round_up(HW, tile_m)
    if HWp != HW:
        x3d = jnp.pad(x3d, ((0, 0), (0, HWp - HW), (0, 0)))
    if Ns_pad != Ns:
        w_static = jnp.pad(w_static, ((0, 0), (0, Ns_pad - Ns)))
        b_static = jnp.pad(b_static, (0, Ns_pad - Ns))
    att_x = jnp.repeat(att, G, axis=-1).reshape(B, 1, KG)   # per-lane expert wts
    bcomb = (att @ bias_k).reshape(B, 1, G)                 # combined expert bias

    ys, yd = pl.pallas_call(
        _make_static_dyn_kernel(G, K_EXPERTS),
        out_shape=(jax.ShapeDtypeStruct((B, HWp, Ns_pad), jnp.bfloat16),
                   jax.ShapeDtypeStruct((B, HWp, G), jnp.float32)),
        grid=(B, HWp // tile_m),
        in_specs=[pl.BlockSpec((1, tile_m, Kd), lambda b, i: (b, i, 0)),
                  pl.BlockSpec((Kd, Ns_pad), lambda b, i: (0, 0)),
                  pl.BlockSpec((1, Ns_pad), lambda b, i: (0, 0)),
                  pl.BlockSpec((Kd, KG), lambda b, i: (0, 0)),
                  pl.BlockSpec((1, 1, KG), lambda b, i: (b, 0, 0)),
                  pl.BlockSpec((1, 1, G), lambda b, i: (b, 0, 0))],
        out_specs=(pl.BlockSpec((1, tile_m, Ns_pad), lambda b, i: (b, i, 0)),
                   pl.BlockSpec((1, tile_m, G), lambda b, i: (b, i, 0))),
        compiler_params=pltpu.CompilerParams(
            dimension_semantics=("parallel", "parallel")),
    )(x3d.astype(jnp.bfloat16),
      w_static.astype(jnp.bfloat16),
      b_static.reshape(1, Ns_pad).astype(jnp.float32),
      w_dyn.astype(jnp.bfloat16),
      att_x.astype(jnp.float32),
      bcomb.astype(jnp.float32))
    return ys[:, :HW, :Ns], yd[:, :HW]


def fused_dyn_matmul(x3d, w_dyn, att, bias_k, G):
    """Dynamic conv (experts matmul + attention combine) only.  x3d bf16."""
    B, HW, Kd = x3d.shape
    KG = w_dyn.shape[1]
    tile_m = _pick_tile_m(HW)
    HWp = _round_up(HW, tile_m)
    if HWp != HW:
        x3d = jnp.pad(x3d, ((0, 0), (0, HWp - HW), (0, 0)))
    att_x = jnp.repeat(att, G, axis=-1).reshape(B, 1, KG)
    bcomb = (att @ bias_k).reshape(B, 1, G)

    yd = pl.pallas_call(
        _make_dyn_kernel(G, K_EXPERTS),
        out_shape=jax.ShapeDtypeStruct((B, HWp, G), jnp.float32),
        grid=(B, HWp // tile_m),
        in_specs=[pl.BlockSpec((1, tile_m, Kd), lambda b, i: (b, i, 0)),
                  pl.BlockSpec((Kd, KG), lambda b, i: (0, 0)),
                  pl.BlockSpec((1, 1, KG), lambda b, i: (b, 0, 0)),
                  pl.BlockSpec((1, 1, G), lambda b, i: (b, 0, 0))],
        out_specs=pl.BlockSpec((1, tile_m, G), lambda b, i: (b, i, 0)),
        compiler_params=pltpu.CompilerParams(
            dimension_semantics=("parallel", "parallel")),
    )(x3d.astype(jnp.bfloat16), w_dyn.astype(jnp.bfloat16),
      att_x.astype(jnp.float32), bcomb.astype(jnp.float32))
    return yd[:, :HW]


# ------------------------------ JAX glue ------------------------------------

def im2col_3x3(x_nhwc):
    """3x3 / pad=1 / stride=1 im2col, tap-major columns, bf16: (B, H*W, 9*C)."""
    B, H, W, C = x_nhwc.shape
    xp = jnp.pad(x_nhwc.astype(jnp.bfloat16), ((0, 0), (1, 1), (1, 1), (0, 0)))
    taps = [xp[:, dh:dh + H, dw:dw + W, :] for dh in range(3) for dw in range(3)]
    # TODO(synk): for large Cin, switch to width-only partial im2col + a
    # halo-tiled kernel (3 accumulated matmuls) to avoid the 9x slab traffic.
    return jnp.concatenate(taps, axis=-1).reshape(B, H * W, 9 * C)


def conv_weight_to_mat(w):
    """PyTorch conv weight (out,in,kh,kw) -> matmul weight (kh*kw*in, out)."""
    o, i, kh, kw = w.shape
    return jnp.transpose(w, (2, 3, 1, 0)).reshape(kh * kw * i, o)


def dyn_expert_weight_mat(w):
    """Dynamic-conv expert weights (K,out,in,kh,kw) -> (kh*kw*in, K*out)."""
    K, o, i, kh, kw = w.shape
    return jnp.transpose(w, (3, 4, 2, 0, 1)).reshape(kh * kw * i, K * o)


def embed_center_tap(w_mat, cin):
    """Embed a 1x1 weight (cin, N) into the center-tap rows of a 3x3 im2col
    weight (9*cin, N) so it can ride the same fused matmul."""
    z = jnp.zeros((4 * cin, w_mat.shape[1]), w_mat.dtype)
    return jnp.concatenate([z, w_mat, z], axis=0)


def dyn_attention(x_nhwc, p):
    """attention2d: GAP -> 1x1 (no bias) -> ReLU -> 1x1 -> softmax(./T)."""
    pooled = jnp.mean(x_nhwc, axis=(1, 2))                    # (B, Cin)
    h = jnp.maximum(pooled @ p['att_fc1_w'], 0.0)             # (B, hidden)
    logits = h @ p['att_fc2_w'] + p['att_fc2_b']              # (B, K)
    return jax.nn.softmax(logits / TEMPERATURE, axis=-1)


def coord_att(x_nhwc, p):
    """CoordAtt(G, G).  BatchNorm2d in eval mode (fresh running stats)."""
    B, H, W, C = x_nhwc.shape
    x_h = jnp.mean(x_nhwc, axis=2)                            # (B, H, C)
    x_w = jnp.mean(x_nhwc, axis=1)                            # (B, W, C)
    y = jnp.concatenate([x_h, x_w], axis=1)                   # (B, H+W, C)
    y = y @ p['conv1_w'] + p['conv1_b']                       # 1x1 conv C -> mip
    y = (y - p['bn_mean']) / jnp.sqrt(p['bn_var'] + BN_EPS) * p['bn_gamma'] + p['bn_beta']
    y = y * (jnp.clip(y + 3.0, 0.0, 6.0) / 6.0)               # h_swish
    y_h, y_w = y[:, :H, :], y[:, H:, :]
    a_h = jax.nn.sigmoid(y_h @ p['convh_w'] + p['convh_b'])   # (B, H, C)
    a_w = jax.nn.sigmoid(y_w @ p['convw_w'] + p['convw_b'])   # (B, W, C)
    return x_nhwc * a_h[:, :, None, :] * a_w[:, None, :, :]


# ------------------------------ parameters ----------------------------------

def init_params(key, C, G):
    ks = iter(jax.random.split(key, 64))

    def nrm(shape, s=0.1):
        return jax.random.normal(next(ks), shape, jnp.float32) * s

    def dyn_params(cin, cout, ksz):
        hidden = int(cin * 0.25) + 1
        return dict(
            att_fc1_w=nrm((cin, hidden)),
            att_fc2_w=nrm((hidden, K_EXPERTS)),
            att_fc2_b=nrm((K_EXPERTS,), 0.01),
            weight=nrm((K_EXPERTS, cout, cin, ksz, ksz)),
            bias=nrm((K_EXPERTS, cout), 0.01),
        )

    mip = max(8, G // 32)
    return dict(
        dyn0=dyn_params(C, G, 1),
        conv1_w=nrm((G, C, 1, 1)), conv1_b=nrm((G,), 0.01),
        dyn1=dyn_params(G, G, 1),
        conv2_w=nrm((G, C, 3, 3)), conv2_b=nrm((G,), 0.01),
        dyn2=dyn_params(G, G, 3),
        conv3_w=nrm((G, C, 1, 1)), conv3_b=nrm((G,), 0.01),
        coord=dict(
            conv1_w=nrm((G, mip)), conv1_b=nrm((mip,), 0.01),
            bn_gamma=jnp.ones((mip,), jnp.float32),
            bn_beta=jnp.zeros((mip,), jnp.float32),
            bn_mean=jnp.zeros((mip,), jnp.float32),
            bn_var=jnp.ones((mip,), jnp.float32),
            convh_w=nrm((mip, G)), convh_b=nrm((G,), 0.01),
            convw_w=nrm((mip, G)), convw_b=nrm((G,), 0.01),
        ),
    )


# ------------------------------ forward pass --------------------------------

def one_conv_forward(x_nchw, params):
    x = jnp.transpose(x_nchw, (0, 2, 3, 1)).astype(jnp.float32)   # NCHW -> NHWC
    B, H, W, C = x.shape
    G = params['conv1_w'].shape[0]

    # ---- fused first stage on x's im2col slab: conv1 / conv3 / conv2(3x3)
    #      as static ReLU columns + dyn0 experts combined in-kernel ----------
    cols_x = im2col_3x3(x)                                        # (B, HW, 9C) bf16
    w_static = jnp.concatenate(
        [embed_center_tap(conv_weight_to_mat(params['conv1_w']), C),
         embed_center_tap(conv_weight_to_mat(params['conv3_w']), C),
         conv_weight_to_mat(params['conv2_w'])], axis=1)          # (9C, 3G)
    b_static = jnp.concatenate(
        [params['conv1_b'], params['conv3_b'], params['conv2_b']])
    w_dyn0 = embed_center_tap(dyn_expert_weight_mat(params['dyn0']['weight']), C)
    att0 = dyn_attention(x, params['dyn0'])
    ys, b0 = fused_static_dyn_matmul(cols_x, w_static, b_static, w_dyn0,
                                     att0, params['dyn0']['bias'], G)
    t1 = ys[..., 0:G]                                             # bf16 (B, HW, G)
    t3 = ys[..., G:2 * G]
    t2 = ys[..., 2 * G:3 * G]

    # ---- branch1: conv1 -> ReLU -> Dynamic(G->G, k=1) -> ReLU ---------------
    att1 = dyn_attention(t1.astype(jnp.float32).reshape(B, H, W, G),
                         params['dyn1'])
    b1 = fused_dyn_matmul(t1, dyn_expert_weight_mat(params['dyn1']['weight']),
                          att1, params['dyn1']['bias'], G)

    # ---- branch2: conv2(3x3) -> ReLU -> Dynamic(G->G, k=3, pad=1) -> ReLU ---
    t2_img = t2.reshape(B, H, W, G)
    att2 = dyn_attention(t2_img.astype(jnp.float32), params['dyn2'])
    b2 = fused_dyn_matmul(im2col_3x3(t2_img),
                          dyn_expert_weight_mat(params['dyn2']['weight']),
                          att2, params['dyn2']['bias'], G)

    # ---- branch3: conv3 -> ReLU -> CoordAtt(G, G) ---------------------------
    b3 = coord_att(t3.astype(jnp.float32).reshape(B, H, W, G), params['coord'])

    out = jnp.concatenate([b0.reshape(B, H, W, G),
                           b1.reshape(B, H, W, G),
                           b2.reshape(B, H, W, G),
                           b3, x], axis=-1)                       # torch.cat(dim=1)
    return jnp.transpose(out, (0, 3, 1, 2))                       # NHWC -> NCHW


if __name__ == "__main__":
    B, C, H, W = 2, 4, 16, 16   # batch, inchanels, spatial
    G = 8                       # growth_rate
    key = jax.random.PRNGKey(0)
    kx, kp = jax.random.split(key)
    x = jax.random.normal(kx, (B, C, H, W), jnp.float32)
    params = init_params(kp, C, G)

    out = jax.jit(one_conv_forward)(x, params)
    jax.block_until_ready(out)
    assert out.shape == (B, 4 * G + C, H, W), out.shape
    assert bool(jnp.all(jnp.isfinite(out)))
    print("KERNEL_OK")
</pallas_src>

<mosaic_0001>
module attributes {stable_mosaic.version = 11 : i64} {
  func.func @kernel(%arg0: i32, %arg1: i32, %arg2: memref<1x256x36xbf16, #tpu.memory_space<vmem>>, %arg3: memref<36x128xbf16, #tpu.memory_space<vmem>>, %arg4: memref<1x128xf32, #tpu.memory_space<vmem>>, %arg5: memref<36x32xbf16, #tpu.memory_space<vmem>>, %arg6: memref<1x1x32xf32, #tpu.memory_space<vmem>>, %arg7: memref<1x1x8xf32, #tpu.memory_space<vmem>>, %arg8: memref<1x256x128xbf16, #tpu.memory_space<vmem>>, %arg9: memref<1x256x8xf32, #tpu.memory_space<vmem>>) attributes {dimension_semantics = [#tpu.dimension_semantics<parallel>, #tpu.dimension_semantics<parallel>], iteration_bounds = array<i64: 2, 1>, scalar_prefetch = 0 : i64, scratch_operands = 0 : i64, tpu.core_type = #tpu.core_type<tc>, window_params = [{transform_indices = @transform_0, window_bounds = array<i64: 1, 256, 36>}, {pipeline_mode = #tpu.pipeline_mode<synchronous>, transform_indices = @transform_1, window_bounds = array<i64: 36, 128>}, {pipeline_mode = #tpu.pipeline_mode<synchronous>, transform_indices = @transform_2, window_bounds = array<i64: 1, 128>}, {pipeline_mode = #tpu.pipeline_mode<synchronous>, transform_indices = @transform_3, window_bounds = array<i64: 36, 32>}, {transform_indices = @transform_4, window_bounds = array<i64: 1, 1, 32>}, {transform_indices = @transform_5, window_bounds = array<i64: 1, 1, 8>}, {transform_indices = @transform_6, window_bounds = array<i64: 1, 256, 128>}, {transform_indices = @transform_7, window_bounds = array<i64: 1, 256, 8>}]} {
    %c0 = arith.constant 0 : index
    %c0_0 = arith.constant 0 : index
    %c0_1 = arith.constant 0 : index
    %0 = vector.load %arg2[%c0, %c0_0, %c0_1] : memref<1x256x36xbf16, #tpu.memory_space<vmem>>, vector<1x256x36xbf16>
    %1 = vector.shape_cast %0 : vector<1x256x36xbf16> to vector<256x36xbf16>
    %c0_2 = arith.constant 0 : index
    %c0_3 = arith.constant 0 : index
    %2 = vector.load %arg3[%c0_2, %c0_3] : memref<36x128xbf16, #tpu.memory_space<vmem>>, vector<36x128xbf16>
    %cst = arith.constant dense<0.000000e+00> : vector<256x128xf32>
    %3 = tpu.matmul %1, %2, %cst {dimension_numbers = #tpu.dot_dimension_numbers<[1], [0], [0], [1], [0, 0, 1, 1], [], []>} : vector<256x36xbf16>, vector<36x128xbf16>, vector<256x128xf32> -> vector<256x128xf32>
    %c0_4 = arith.constant 0 : index
    %c0_5 = arith.constant 0 : index
    %4 = vector.load %arg4[%c0_4, %c0_5] : memref<1x128xf32, #tpu.memory_space<vmem>>, vector<1x128xf32>
    %5 = vector.broadcast %4 : vector<1x128xf32> to vector<256x128xf32>
    %6 = arith.addf %3, %5 : vector<256x128xf32>
    %cst_6 = arith.constant 0.000000e+00 : f32
    %7 = vector.broadcast %cst_6 : f32 to vector<256x128xf32>
    %8 = arith.maximumf %6, %7 : vector<256x128xf32>
    %9 = arith.truncf %8 : vector<256x128xf32> to vector<256x128xbf16>
    %c0_7 = arith.constant 0 : index
    %c0_8 = arith.constant 0 : index
    %c0_9 = arith.constant 0 : index
    %10 = vector.load %arg8[%c0_7, %c0_8, %c0_9] : memref<1x256x128xbf16, #tpu.memory_space<vmem>>, vector<1x256x128xbf16>
    %11 = vector.shape_cast %10 : vector<1x256x128xbf16> to vector<256x128xbf16>
    %12 = vector.shape_cast %9 : vector<256x128xbf16> to vector<1x256x128xbf16>
    tpu.vector_store %arg8[%c0_7, %c0_8, %c0_9], %12 {strides = array<i32>} : memref<1x256x128xbf16, #tpu.memory_space<vmem>>, vector<1x256x128xbf16>,
    %c0_10 = arith.constant 0 : index
    %c0_11 = arith.constant 0 : index
    %13 = vector.load %arg5[%c0_10, %c0_11] : memref<36x32xbf16, #tpu.memory_space<vmem>>, vector<36x32xbf16>
    %cst_12 = arith.constant dense<0.000000e+00> : vector<256x32xf32>
    %14 = tpu.matmul %1, %13, %cst_12 {dimension_numbers = #tpu.dot_dimension_numbers<[1], [0], [0], [1], [0, 0, 1, 1], [], []>} : vector<256x36xbf16>, vector<36x32xbf16>, vector<256x32xf32> -> vector<256x32xf32>
    %c0_13 = arith.constant 0 : index
    %c0_14 = arith.constant 0 : index
    %c0_15 = arith.constant 0 : index
    %15 = vector.load %arg6[%c0_13, %c0_14, %c0_15] : memref<1x1x32xf32, #tpu.memory_space<vmem>>, vector<1x1x32xf32>
    %16 = vector.shape_cast %15 : vector<1x1x32xf32> to vector<1x32xf32>
    %17 = vector.broadcast %16 : vector<1x32xf32> to vector<256x32xf32>
    %18 = arith.mulf %14, %17 : vector<256x32xf32>
    %19 = vector.extract_strided_slice %18 {offsets = [0, 0], sizes = [256, 8], strides = [1, 1]} : vector<256x32xf32> to vector<256x8xf32>
    %20 = vector.extract_strided_slice %18 {offsets = [0, 8], sizes = [256, 8], strides = [1, 1]} : vector<256x32xf32> to vector<256x8xf32>
    %21 = arith.addf %19, %20 : vector<256x8xf32>
    %22 = vector.extract_strided_slice %18 {offsets = [0, 16], sizes = [256, 8], strides = [1, 1]} : vector<256x32xf32> to vector<256x8xf32>
    %23 = arith.addf %21, %22 : vector<256x8xf32>
    %24 = vector.extract_strided_slice %18 {offsets = [0, 24], sizes = [256, 8], strides = [1, 1]} : vector<256x32xf32> to vector<256x8xf32>
    %25 = arith.addf %23, %24 : vector<256x8xf32>
    %c0_16 = arith.constant 0 : index
    %c0_17 = arith.constant 0 : index
    %c0_18 = arith.constant 0 : index
    %26 = vector.load %arg7[%c0_16, %c0_17, %c0_18] : memref<1x1x8xf32, #tpu.memory_space<vmem>>, vector<1x1x8xf32>
    %27 = vector.shape_cast %26 : vector<1x1x8xf32> to vector<1x8xf32>
    %28 = vector.broadcast %27 : vector<1x8xf32> to vector<256x8xf32>
    %29 = arith.addf %25, %28 : vector<256x8xf32>
    %cst_19 = arith.constant 0.000000e+00 : f32
    %30 = vector.broadcast %cst_19 : f32 to vector<256x8xf32>
    %31 = arith.maximumf %29, %30 : vector<256x8xf32>
    %c0_20 = arith.constant 0 : index
    %c0_21 = arith.constant 0 : index
    %c0_22 = arith.constant 0 : index
    %32 = vector.load %arg9[%c0_20, %c0_21, %c0_22] : memref<1x256x8xf32, #tpu.memory_space<vmem>>, vector<1x256x8xf32>
    %33 = vector.shape_cast %32 : vector<1x256x8xf32> to vector<256x8xf32>
    %34 = vector.shape_cast %31 : vector<256x8xf32> to vector<1x256x8xf32>
    tpu.vector_store %arg9[%c0_20, %c0_21, %c0_22], %34 {strides = array<i32>} : memref<1x256x8xf32, #tpu.memory_space<vmem>>, vector<1x256x8xf32>,
    return
  }
  func.func @transform_0(%arg0: i32, %arg1: i32) -> (i32, i32, i32) {
    %c0_i32 = arith.constant 0 : i32
    %c0_i32_0 = arith.constant 0 : i32
    return %arg0, %arg1, %c0_i32 : i32, i32, i32
  }
  func.func @transform_1(%arg0: i32, %arg1: i32) -> (i32, i32) {
    %c0_i32 = arith.constant 0 : i32
    %c0_i32_0 = arith.constant 0 : i32
    %c0_i32_1 = arith.constant 0 : i32
    return %c0_i32, %c0_i32_0 : i32, i32
  }
  func.func @transform_2(%arg0: i32, %arg1: i32) -> (i32, i32) {
    %c0_i32 = arith.constant 0 : i32
    %c0_i32_0 = arith.constant 0 : i32
    %c0_i32_1 = arith.constant 0 : i32
    return %c0_i32, %c0_i32_0 : i32, i32
  }
  func.func @transform_3(%arg0: i32, %arg1: i32) -> (i32, i32) {
    %c0_i32 = arith.constant 0 : i32
    %c0_i32_0 = arith.constant 0 : i32
    %c0_i32_1 = arith.constant 0 : i32
    return %c0_i32, %c0_i32_0 : i32, i32
  }
  func.func @transform_4(%arg0: i32, %arg1: i32) -> (i32, i32, i32) {
    %c0_i32 = arith.constant 0 : i32
    %c0_i32_0 = arith.constant 0 : i32
    %c0_i32_1 = arith.constant 0 : i32
    return %arg0, %c0_i32, %c0_i32_0 : i32, i32, i32
  }
  func.func @transform_5(%arg0: i32, %arg1: i32) -> (i32, i32, i32) {
    %c0_i32 = arith.constant 0 : i32
    %c0_i32_0 = arith.constant 0 : i32
    %c0_i32_1 = arith.constant 0 : i32
    return %arg0, %c0_i32, %c0_i32_0 : i32, i32, i32
  }
  func.func @transform_6(%arg0: i32, %arg1: i32) -> (i32, i32, i32) {
    %c0_i32 = arith.constant 0 : i32
    %c0_i32_0 = arith.constant 0 : i32
    return %arg0, %arg1, %c0_i32 : i32, i32, i32
  }
  func.func @transform_7(%arg0: i32, %arg1: i32) -> (i32, i32, i32) {
    %c0_i32 = arith.constant 0 : i32
    %c0_i32_0 = arith.constant 0 : i32
    return %arg0, %arg1, %c0_i32 : i32, i32, i32
  }
}

module attributes {stable_mosaic.version = 11 : i64} {
  func.func @kernel(%arg0: i32, %arg1: i32, %arg2: memref<1x256x72xbf16, #tpu.memory_space<vmem>>, %arg3: memref<72x32xbf16, #tpu.memory_space<vmem>>, %arg4: memref<1x1x32xf32, #tpu.memory_space<vmem>>, %arg5: memref<1x1x8xf32, #tpu.memory_space<vmem>>, %arg6: memref<1x256x8xf32, #tpu.memory_space<vmem>>) attributes {dimension_semantics = [#tpu.dimension_semantics<parallel>, #tpu.dimension_semantics<parallel>], iteration_bounds = array<i64: 2, 1>, scalar_prefetch = 0 : i64, scratch_operands = 0 : i64, tpu.core_type = #tpu.core_type<tc>, window_params = [{transform_indices = @transform_0, window_bounds = array<i64: 1, 256, 72>}, {pipeline_mode = #tpu.pipeline_mode<synchronous>, transform_indices = @transform_1, window_bounds = array<i64: 72, 32>}, {transform_indices = @transform_2, window_bounds = array<i64: 1, 1, 32>}, {transform_indices = @transform_3, window_bounds = array<i64: 1, 1, 8>}, {transform_indices = @transform_4, window_bounds = array<i64: 1, 256, 8>}]} {
    %c0 = arith.constant 0 : index
    %c0_0 = arith.constant 0 : index
    %c0_1 = arith.constant 0 : index
    %0 = vector.load %arg2[%c0, %c0_0, %c0_1] : memref<1x256x72xbf16, #tpu.memory_space<vmem>>, vector<1x256x72xbf16>
    %1 = vector.shape_cast %0 : vector<1x256x72xbf16> to vector<256x72xbf16>
    %c0_2 = arith.constant 0 : index
    %c0_3 = arith.constant 0 : index
    %2 = vector.load %arg3[%c0_2, %c0_3] : memref<72x32xbf16, #tpu.memory_space<vmem>>, vector<72x32xbf16>
    %cst = arith.constant dense<0.000000e+00> : vector<256x32xf32>
    %3 = tpu.matmul %1, %2, %cst {dimension_numbers = #tpu.dot_dimension_numbers<[1], [0], [0], [1], [0, 0, 1, 1], [], []>} : vector<256x72xbf16>, vector<72x32xbf16>, vector<256x32xf32> -> vector<256x32xf32>
    %c0_4 = arith.constant 0 : index
    %c0_5 = arith.constant 0 : index
    %c0_6 = arith.constant 0 : index
    %4 = vector.load %arg4[%c0_4, %c0_5, %c0_6] : memref<1x1x32xf32, #tpu.memory_space<vmem>>, vector<1x1x32xf32>
    %5 = vector.shape_cast %4 : vector<1x1x32xf32> to vector<1x32xf32>
    %6 = vector.broadcast %5 : vector<1x32xf32> to vector<256x32xf32>
    %7 = arith.mulf %3, %6 : vector<256x32xf32>
    %8 = vector.extract_strided_slice %7 {offsets = [0, 0], sizes = [256, 8], strides = [1, 1]} : vector<256x32xf32> to vector<256x8xf32>
    %9 = vector.extract_strided_slice %7 {offsets = [0, 8], sizes = [256, 8], strides = [1, 1]} : vector<256x32xf32> to vector<256x8xf32>
    %10 = arith.addf %8, %9 : vector<256x8xf32>
    %11 = vector.extract_strided_slice %7 {offsets = [0, 16], sizes = [256, 8], strides = [1, 1]} : vector<256x32xf32> to vector<256x8xf32>
    %12 = arith.addf %10, %11 : vector<256x8xf32>
    %13 = vector.extract_strided_slice %7 {offsets = [0, 24], sizes = [256, 8], strides = [1, 1]} : vector<256x32xf32> to vector<256x8xf32>
    %14 = arith.addf %12, %13 : vector<256x8xf32>
    %c0_7 = arith.constant 0 : index
    %c0_8 = arith.constant 0 : index
    %c0_9 = arith.constant 0 : index
    %15 = vector.load %arg5[%c0_7, %c0_8, %c0_9] : memref<1x1x8xf32, #tpu.memory_space<vmem>>, vector<1x1x8xf32>
    %16 = vector.shape_cast %15 : vector<1x1x8xf32> to vector<1x8xf32>
    %17 = vector.broadcast %16 : vector<1x8xf32> to vector<256x8xf32>
    %18 = arith.addf %14, %17 : vector<256x8xf32>
    %cst_10 = arith.constant 0.000000e+00 : f32
    %19 = vector.broadcast %cst_10 : f32 to vector<256x8xf32>
    %20 = arith.maximumf %18, %19 : vector<256x8xf32>
    %c0_11 = arith.constant 0 : index
    %c0_12 = arith.constant 0 : index
    %c0_13 = arith.constant 0 : index
    %21 = vector.load %arg6[%c0_11, %c0_12, %c0_13] : memref<1x256x8xf32, #tpu.memory_space<vmem>>, vector<1x256x8xf32>
    %22 = vector.shape_cast %21 : vector<1x256x8xf32> to vector<256x8xf32>
    %23 = vector.shape_cast %20 : vector<256x8xf32> to vector<1x256x8xf32>
    tpu.vector_store %arg6[%c0_11, %c0_12, %c0_13], %23 {strides = array<i32>} : memref<1x256x8xf32, #tpu.memory_space<vmem>>, vector<1x256x8xf32>,
    return
  }
  func.func @transform_0(%arg0: i32, %arg1: i32) -> (i32, i32, i32) {
    %c0_i32 = arith.constant 0 : i32
    %c0_i32_0 = arith.constant 0 : i32
    return %arg0, %arg1, %c0_i32 : i32, i32, i32
  }
  func.func @transform_1(%arg0: i32, %arg1: i32) -> (i32, i32) {
    %c0_i32 = arith.constant 0 : i32
    %c0_i32_0 = arith.constant 0 : i32
    %c0_i32_1 = arith.constant 0 : i32
    return %c0_i32, %c0_i32_0 : i32, i32
  }
  func.func @transform_2(%arg0: i32, %arg1: i32) -> (i32, i32, i32) {
    %c0_i32 = arith.constant 0 : i32
    %c0_i32_0 = arith.constant 0 : i32
    %c0_i32_1 = arith.constant 0 : i32
    return %arg0, %c0_i32, %c0_i32_0 : i32, i32, i32
  }
  func.func @transform_3(%arg0: i32, %arg1: i32) -> (i32, i32, i32) {
    %c0_i32 = arith.constant 0 : i32
    %c0_i32_0 = arith.constant 0 : i32
    %c0_i32_1 = arith.constant 0 : i32
    return %arg0, %c0_i32, %c0_i32_0 : i32, i32, i32
  }
  func.func @transform_4(%arg0: i32, %arg1: i32) -> (i32, i32, i32) {
    %c0_i32 = arith.constant 0 : i32
    %c0_i32_0 = arith.constant 0 : i32
    return %arg0, %arg1, %c0_i32 : i32, i32, i32
  }
}

module attributes {stable_mosaic.version = 11 : i64} {
  func.func @kernel(%arg0: i32, %arg1: i32, %arg2: memref<1x256x8xbf16, #tpu.memory_space<vmem>>, %arg3: memref<8x32xbf16, #tpu.memory_space<vmem>>, %arg4: memref<1x1x32xf32, #tpu.memory_space<vmem>>, %arg5: memref<1x1x8xf32, #tpu.memory_space<vmem>>, %arg6: memref<1x256x8xf32, #tpu.memory_space<vmem>>) attributes {dimension_semantics = [#tpu.dimension_semantics<parallel>, #tpu.dimension_semantics<parallel>], iteration_bounds = array<i64: 2, 1>, scalar_prefetch = 0 : i64, scratch_operands = 0 : i64, tpu.core_type = #tpu.core_type<tc>, window_params = [{transform_indices = @transform_0, window_bounds = array<i64: 1, 256, 8>}, {pipeline_mode = #tpu.pipeline_mode<synchronous>, transform_indices = @transform_1, window_bounds = array<i64: 8, 32>}, {transform_indices = @transform_2, window_bounds = array<i64: 1, 1, 32>}, {transform_indices = @transform_3, window_bounds = array<i64: 1, 1, 8>}, {transform_indices = @transform_4, window_bounds = array<i64: 1, 256, 8>}]} {
    %c0 = arith.constant 0 : index
    %c0_0 = arith.constant 0 : index
    %c0_1 = arith.constant 0 : index
    %0 = vector.load %arg2[%c0, %c0_0, %c0_1] : memref<1x256x8xbf16, #tpu.memory_space<vmem>>, vector<1x256x8xbf16>
    %1 = vector.shape_cast %0 : vector<1x256x8xbf16> to vector<256x8xbf16>
    %c0_2 = arith.constant 0 : index
    %c0_3 = arith.constant 0 : index
    %2 = vector.load %arg3[%c0_2, %c0_3] : memref<8x32xbf16, #tpu.memory_space<vmem>>, vector<8x32xbf16>
    %cst = arith.constant dense<0.000000e+00> : vector<256x32xf32>
    %3 = tpu.matmul %1, %2, %cst {dimension_numbers = #tpu.dot_dimension_numbers<[1], [0], [0], [1], [0, 0, 1, 1], [], []>} : vector<256x8xbf16>, vector<8x32xbf16>, vector<256x32xf32> -> vector<256x32xf32>
    %c0_4 = arith.constant 0 : index
    %c0_5 = arith.constant 0 : index
    %c0_6 = arith.constant 0 : index
    %4 = vector.load %arg4[%c0_4, %c0_5, %c0_6] : memref<1x1x32xf32, #tpu.memory_space<vmem>>, vector<1x1x32xf32>
    %5 = vector.shape_cast %4 : vector<1x1x32xf32> to vector<1x32xf32>
    %6 = vector.broadcast %5 : vector<1x32xf32> to vector<256x32xf32>
    %7 = arith.mulf %3, %6 : vector<256x32xf32>
    %8 = vector.extract_strided_slice %7 {offsets = [0, 0], sizes = [256, 8], strides = [1, 1]} : vector<256x32xf32> to vector<256x8xf32>
    %9 = vector.extract_strided_slice %7 {offsets = [0, 8], sizes = [256, 8], strides = [1, 1]} : vector<256x32xf32> to vector<256x8xf32>
    %10 = arith.addf %8, %9 : vector<256x8xf32>
    %11 = vector.extract_strided_slice %7 {offsets = [0, 16], sizes = [256, 8], strides = [1, 1]} : vector<256x32xf32> to vector<256x8xf32>
    %12 = arith.addf %10, %11 : vector<256x8xf32>
    %13 = vector.extract_strided_slice %7 {offsets = [0, 24], sizes = [256, 8], strides = [1, 1]} : vector<256x32xf32> to vector<256x8xf32>
    %14 = arith.addf %12, %13 : vector<256x8xf32>
    %c0_7 = arith.constant 0 : index
    %c0_8 = arith.constant 0 : index
    %c0_9 = arith.constant 0 : index
    %15 = vector.load %arg5[%c0_7, %c0_8, %c0_9] : memref<1x1x8xf32, #tpu.memory_space<vmem>>, vector<1x1x8xf32>
    %16 = vector.shape_cast %15 : vector<1x1x8xf32> to vector<1x8xf32>
    %17 = vector.broadcast %16 : vector<1x8xf32> to vector<256x8xf32>
    %18 = arith.addf %14, %17 : vector<256x8xf32>
    %cst_10 = arith.constant 0.000000e+00 : f32
    %19 = vector.broadcast %cst_10 : f32 to vector<256x8xf32>
    %20 = arith.maximumf %18, %19 : vector<256x8xf32>
    %c0_11 = arith.constant 0 : index
    %c0_12 = arith.constant 0 : index
    %c0_13 = arith.constant 0 : index
    %21 = vector.load %arg6[%c0_11, %c0_12, %c0_13] : memref<1x256x8xf32, #tpu.memory_space<vmem>>, vector<1x256x8xf32>
    %22 = vector.shape_cast %21 : vector<1x256x8xf32> to vector<256x8xf32>
    %23 = vector.shape_cast %20 : vector<256x8xf32> to vector<1x256x8xf32>
    tpu.vector_store %arg6[%c0_11, %c0_12, %c0_13], %23 {strides = array<i32>} : memref<1x256x8xf32, #tpu.memory_space<vmem>>, vector<1x256x8xf32>,
    return
  }
  func.func @transform_0(%arg0: i32, %arg1: i32) -> (i32, i32, i32) {
    %c0_i32 = arith.constant 0 : i32
    %c0_i32_0 = arith.constant 0 : i32
    return %arg0, %arg1, %c0_i32 : i32, i32, i32
  }
  func.func @transform_1(%arg0: i32, %arg1: i32) -> (i32, i32) {
    %c0_i32 = arith.constant 0 : i32
    %c0_i32_0 = arith.constant 0 : i32
    %c0_i32_1 = arith.constant 0 : i32
    return %c0_i32, %c0_i32_0 : i32, i32
  }
  func.func @transform_2(%arg0: i32, %arg1: i32) -> (i32, i32, i32) {
    %c0_i32 = arith.constant 0 : i32
    %c0_i32_0 = arith.constant 0 : i32
    %c0_i32_1 = arith.constant 0 : i32
    return %arg0, %c0_i32, %c0_i32_0 : i32, i32, i32
  }
  func.func @transform_3(%arg0: i32, %arg1: i32) -> (i32, i32, i32) {
    %c0_i32 = arith.constant 0 : i32
    %c0_i32_0 = arith.constant 0 : i32
    %c0_i32_1 = arith.constant 0 : i32
    return %arg0, %c0_i32, %c0_i32_0 : i32, i32, i32
  }
  func.func @transform_4(%arg0: i32, %arg1: i32) -> (i32, i32, i32) {
    %c0_i32 = arith.constant 0 : i32
    %c0_i32_0 = arith.constant 0 : i32
    return %arg0, %arg1, %c0_i32 : i32, i32, i32
  }
}

</mosaic_0001>

<llo_original>
// kernel: one_conv_forward.3
$region0: #{one_conv_forward.3}
  #allocation0 [shape = 'u32[]', space=smem, size = 0x4, offset = 0x4, fixed_abs, tag = 'smem constant byte address 0x4 - core index']
  #allocation1 [shape = 'u32[144,128]{1,0:T(1,128)}', space=vmem, size = 0x12000, scoped, tag = 'internal scratch']
  %s0 = inlined_call_operand.vmem [shape: bf16[2,256,36], index: 0, kind: input, shape index: {}]
  %s1 = inlined_call_operand.vmem [shape: bf16[36,128], index: 1, kind: input, shape index: {}]
  %s2 = inlined_call_operand.vmem [shape: f32[1,128], index: 2, kind: input, shape index: {}]
  %s3 = inlined_call_operand.vmem [shape: bf16[36,32], index: 3, kind: input, shape index: {}]
  %s4 = inlined_call_operand.vmem [shape: f32[2,1,32], index: 4, kind: input, shape index: {}]
  %s5 = inlined_call_operand.vmem [shape: f32[2,1,8], index: 5, kind: input, shape index: {}]
  %s6 = inlined_call_operand.vmem [shape: bf16[2,256,128], index: 6, kind: output, shape index: {0}]
  %s7 = inlined_call_operand.vmem [shape: f32[2,256,8], index: 7, kind: output, shape index: {1}]
  %8 = xla_tuple %s6, %s7
  %s9 = sld [smem:[#allocation0]]
  $region65: #{one_conv_forward.3} parent=0
    _
  %s11 = ssub.s32 1, %s9
  %s12 = scalar_select 0, %s11, %s9
  loop: start=0, step=1, limit=4
  $region2: #{one_conv_forward.3} parent=0 // loop_pre_header
    _
  $region3: #{one_conv_forward.3} parent=0 // loop_header
    %s14 = sphi 0, %s18
    %p15 = scmp.ge.s32.totalorder %s14, 4
    %s21 = sphi 0, %s33
    %s22 = sphi 0, %s29
    %s23 = sphi 0, %s21
    %s24 = sphi 0, %s22
    %s25 = sphi 0, %s23
    %s26 = sphi 0, %s24
    %s38 = sphi 0, %s40
    %s41 = sphi 0, %s38
    %s42 = sphi 0, %s41
    %s58 = sphi 0, %s42
    %s62 = sphi 0, %s62
    %s64 = sphi 0, %s62
    %s65 = sphi 0, %s64
    %s79 = sphi 0, %s65
    %s83 = sphi 0, %s83
    %s85 = sphi 0, %s83
    %s86 = sphi 0, %s85
    %s100 = sphi 0, %s86
    %s104 = sphi 0, %s104
    %s106 = sphi 0, %s104
    %s107 = sphi 0, %s106
    %s121 = sphi 0, %s107
    %s127 = sphi 0, %s129
    %s130 = sphi 0, %s127
    %s131 = sphi 0, %s130
    %s147 = sphi 0, %s131
    %s153 = sphi 0, %s155
    %s156 = sphi 0, %s153
    %s157 = sphi 0, %s156
    %s173 = sphi 0, %s157
    %s181 = sphi 0, %s183
    %s184 = sphi 0, %s181
    %s185 = sphi 0, %s184
    %s201 = sphi 0, %s185
    %s209 = sphi 0, %s211
    %s212 = sphi 0, %s209
    %s213 = sphi 0, %s212
    %s229 = sphi 0, %s213
  $region4: #{one_conv_forward.3} parent=0 // loop_header_branch
    %17 = sbr.rel (%p15) target = $region8
  $region5: #{one_conv_forward.3} parent=0 // loop_body
    %s19 = ssub.s32 %s14, 1
    %s20 = ssub.s32 %s14, 2
    %s27 = sadd.s32 1, %s22
    %p28 = scmp.ge.s32.totalorder %s27, 1
    %s29 = scalar_select %p28, 0, %s27
    %s30 = sadd.s32 1, %s21
    %s31 = scalar_select %p28, %s30, %s21
    %p32 = scmp.ge.s32.totalorder %s31, 2
    %s33 = scalar_select %p32, 0, %s31
    %s34 = ssub.s32 %s21, %s33
    %s35 = ssub.s32 %s22, %s29
    %s36 = sor.u32 %s34, %s35
    %p37 = scmp.eq.s32.totalorder %s36, 0
    %s39 = sadd.s32 %s38, 1
    %s40 = scalar_select %p37, %s38, %s39
    %p43 = pneg %p37
    %p44 = scmp.eq.s32.totalorder %s14, 1
    %p45 = por %p43, %p44
    %p46 = scmp.ne.s32.totalorder %s38, %s41
    %p47 = scmp.eq.s32.totalorder %s14, 0
    %p48 = por %p46, %p47
    %p49 = scmp.ne.s32.totalorder %s38, %s41
    %p50 = scmp.eq.s32.totalorder %s19, 1
    %p51 = por %p49, %p50
    %p52 = scmp.ne.s32.totalorder %s41, %s42
    %p53 = scmp.eq.s32.totalorder %s19, 0
    %p54 = por %p52, %p53
    %p55 = scmp.ne.s32.totalorder %s41, %s42
    %p56 = scmp.eq.s32.totalorder %s20, 1
    %p57 = por %p55, %p56
    %p59 = scmp.ne.s32.totalorder %s42, %s58
    %p60 = scmp.eq.s32.totalorder %s20, 0
    %p61 = por %p59, %p60
    %s63 = sadd.s32 %s62, 1
    %p66 = scmp.eq.s32.totalorder %s14, 1
    %p67 = scmp.ne.s32.totalorder %s62, %s64
    %p68 = scmp.eq.s32.totalorder %s14, 0
    %p69 = por %p67, %p68
    %p70 = scmp.ne.s32.totalorder %s62, %s64
    %p71 = scmp.eq.s32.totalorder %s19, 1
    %p72 = por %p70, %p71
    %p73 = scmp.ne.s32.totalorder %s64, %s65
    %p74 = scmp.eq.s32.totalorder %s19, 0
    %p75 = por %p73, %p74
    %p76 = scmp.ne.s32.totalorder %s64, %s65
    %p77 = scmp.eq.s32.totalorder %s20, 1
    %p78 = por %p76, %p77
    %p80 = scmp.ne.s32.totalorder %s65, %s79
    %p81 = scmp.eq.s32.totalorder %s20, 0
    %p82 = por %p80, %p81
    %s84 = sadd.s32 %s83, 1
    %p87 = scmp.eq.s32.totalorder %s14, 1
    %p88 = scmp.ne.s32.totalorder %s83, %s85
    %p89 = scmp.eq.s32.totalorder %s14, 0
    %p90 = por %p88, %p89
    %p91 = scmp.ne.s32.totalorder %s83, %s85
    %p92 = scmp.eq.s32.totalorder %s19, 1
    %p93 = por %p91, %p92
    %p94 = scmp.ne.s32.totalorder %s85, %s86
    %p95 = scmp.eq.s32.totalorder %s19, 0
    %p96 = por %p94, %p95
    %p97 = scmp.ne.s32.totalorder %s85, %s86
    %p98 = scmp.eq.s32.totalorder %s20, 1
    %p99 = por %p97, %p98
    %p101 = scmp.ne.s32.totalorder %s86, %s100
    %p102 = scmp.eq.s32.totalorder %s20, 0
    %p103 = por %p101, %p102
    %s105 = sadd.s32 %s104, 1
    %p108 = scmp.eq.s32.totalorder %s14, 1
    %p109 = scmp.ne.s32.totalorder %s104, %s106
    %p110 = scmp.eq.s32.totalorder %s14, 0
    %p111 = por %p109, %p110
    %p112 = scmp.ne.s32.totalorder %s104, %s106
    %p113 = scmp.eq.s32.totalorder %s19, 1
    %p114 = por %p112, %p113
    %p115 = scmp.ne.s32.totalorder %s106, %s107
    %p116 = scmp.eq.s32.totalorder %s19, 0
    %p117 = por %p115, %p116
    %p118 = scmp.ne.s32.totalorder %s106, %s107
    %p119 = scmp.eq.s32.totalorder %s20, 1
    %p120 = por %p118, %p119
    %p122 = scmp.ne.s32.totalorder %s107, %s121
    %p123 = scmp.eq.s32.totalorder %s20, 0
    %p124 = por %p122, %p123
    %s125 = ssub.s32 %s21, %s33
    %p126 = scmp.eq.s32.totalorder %s125, 0
    %s128 = sadd.s32 %s127, 1
    %s129 = scalar_select %p126, %s127, %s128
    %p132 = pneg %p126
    %p133 = scmp.eq.s32.totalorder %s14, 1
    %p134 = por %p132, %p133
    %p135 = scmp.ne.s32.totalorder %s127, %s130
    %p136 = scmp.eq.s32.totalorder %s14, 0
    %p137 = por %p135, %p136
    %p138 = scmp.ne.s32.totalorder %s127, %s130
    %p139 = scmp.eq.s32.totalorder %s19, 1
    %p140 = por %p138, %p139
    %p141 = scmp.ne.s32.totalorder %s130, %s131
    %p142 = scmp.eq.s32.totalorder %s19, 0
    %p143 = por %p141, %p142
    %p144 = scmp.ne.s32.totalorder %s130, %s131
    %p145 = scmp.eq.s32.totalorder %s20, 1
    %p146 = por %p144, %p145
    %p148 = scmp.ne.s32.totalorder %s131, %s147
    %p149 = scmp.eq.s32.totalorder %s20, 0
    %p150 = por %p148, %p149
    %s151 = ssub.s32 %s21, %s33
    %p152 = scmp.eq.s32.totalorder %s151, 0
    %s154 = sadd.s32 %s153, 1
    %s155 = scalar_select %p152, %s153, %s154
    %p158 = pneg %p152
    %p159 = scmp.eq.s32.totalorder %s14, 1
    %p160 = por %p158, %p159
    %p161 = scmp.ne.s32.totalorder %s153, %s156
    %p162 = scmp.eq.s32.totalorder %s14, 0
    %p163 = por %p161, %p162
    %p164 = scmp.ne.s32.totalorder %s153, %s156
    %p165 = scmp.eq.s32.totalorder %s19, 1
    %p166 = por %p164, %p165
    %p167 = scmp.ne.s32.totalorder %s156, %s157
    %p168 = scmp.eq.s32.totalorder %s19, 0
    %p169 = por %p167, %p168
    %p170 = scmp.ne.s32.totalorder %s156, %s157
    %p171 = scmp.eq.s32.totalorder %s20, 1
    %p172 = por %p170, %p171
    %p174 = scmp.ne.s32.totalorder %s157, %s173
    %p175 = scmp.eq.s32.totalorder %s20, 0
    %p176 = por %p174, %p175
    %s177 = ssub.s32 %s21, %s33
    %s178 = ssub.s32 %s22, %s29
    %s179 = sor.u32 %s177, %s178
    %p180 = scmp.eq.s32.totalorder %s179, 0
    %s182 = sadd.s32 %s181, 1
    %s183 = scalar_select %p180, %s181, %s182
    %p186 = pneg %p180
    %p187 = scmp.eq.s32.totalorder %s14, 1
    %p188 = por %p186, %p187
    %p189 = scmp.ne.s32.totalorder %s181, %s184
    %p190 = scmp.eq.s32.totalorder %s14, 0
    %p191 = por %p189, %p190
    %p192 = scmp.ne.s32.totalorder %s181, %s184
    %p193 = scmp.eq.s32.totalorder %s19, 1
    %p194 = por %p192, %p193
    %p195 = scmp.ne.s32.totalorder %s184, %s185
    %p196 = scmp.eq.s32.totalorder %s19, 0
    %p197 = por %p195, %p196
    %p198 = scmp.ne.s32.totalorder %s184, %s185
    %p199 = scmp.eq.s32.totalorder %s20, 1
    %p200 = por %p198, %p199
    %p202 = scmp.ne.s32.totalorder %s185, %s201
    %p203 = scmp.eq.s32.totalorder %s20, 0
    %p204 = por %p202, %p203
    %s205 = ssub.s32 %s21, %s33
    %s206 = ssub.s32 %s22, %s29
    %s207 = sor.u32 %s205, %s206
    %p208 = scmp.eq.s32.totalorder %s207, 0
    %s210 = sadd.s32 %s209, 1
    %s211 = scalar_select %p208, %s209, %s210
    %p214 = pneg %p208
    %p215 = scmp.eq.s32.totalorder %s14, 1
    %p216 = por %p214, %p215
    %p217 = scmp.ne.s32.totalorder %s209, %s212
    %p218 = scmp.eq.s32.totalorder %s14, 0
    %p219 = por %p217, %p218
    %p220 = scmp.ne.s32.totalorder %s209, %s212
    %p221 = scmp.eq.s32.totalorder %s19, 1
    %p222 = por %p220, %p221
    %p223 = scmp.ne.s32.totalorder %s212, %s213
    %p224 = scmp.eq.s32.totalorder %s19, 0
    %p225 = por %p223, %p224
    %p226 = scmp.ne.s32.totalorder %s212, %s213
    %p227 = scmp.eq.s32.totalorder %s20, 1
    %p228 = por %p226, %p227
    %p230 = scmp.ne.s32.totalorder %s213, %s229
    %p231 = scmp.eq.s32.totalorder %s20, 0
    %p232 = por %p230, %p231
    %p233 = scmp.le.s32.totalorder 1, %s14
    %p234 = scmp.lt.s32.totalorder %s14, 3
    %p235 = pnand %p233, %p234
    %p236 = pneg %p235
    // Predicated region
    $region9: #{one_conv_forward.3} parent=5 // pred_check
      _
    $region10: #{one_conv_forward.3} parent=5 // pred_check_branch
      %238 = sbr.rel (%p235) target = $region12
    $region11: #{one_conv_forward.3} parent=5 // pred_region
      %s239 = ssub.s32 %s14, 1
      // Predicated region
      $region13: #{one_conv_forward.3} parent=11 // pred_check
        %p240 = pneg %p75
      $region14: #{one_conv_forward.3} parent=11 // pred_check_branch
        %242 = sbr.rel (%p240) target = $region16
      $region15: #{one_conv_forward.3} parent=11 // pred_region
        _
      $region16: #{one_conv_forward.3} parent=11 // pred_fallthru
        _
      // Predicated region
      $region17: #{one_conv_forward.3} parent=11 // pred_check
        %p243 = pneg %p96
      $region18: #{one_conv_forward.3} parent=11 // pred_check_branch
        %245 = sbr.rel (%p243) target = $region20
      $region19: #{one_conv_forward.3} parent=11 // pred_region
        _
      $region20: #{one_conv_forward.3} parent=11 // pred_fallthru
        _
      // Predicated region
      $region21: #{one_conv_forward.3} parent=11 // pred_check
        %p246 = pneg %p117
      $region22: #{one_conv_forward.3} parent=11 // pred_check_branch
        %248 = sbr.rel (%p246) target = $region24
      $region23: #{one_conv_forward.3} parent=11 // pred_region
        _
      $region24: #{one_conv_forward.3} parent=11 // pred_fallthru
        _
    $region12: #{one_conv_forward.3} parent=5 // pred_fallthru
      _
    %p249 = scmp.lt.s32.totalorder %s14, 2
    // Predicated region
    $region25: #{one_conv_forward.3} parent=5 // pred_check
      %p250 = pneg %p249
    $region26: #{one_conv_forward.3} parent=5 // pred_check_branch
      %252 = sbr.rel (%p250) target = $region28
    $region27: #{one_conv_forward.3} parent=5 // pred_region
      // Predicated region
      $region29: #{one_conv_forward.3} parent=27 // pred_check
        %p253 = pneg %p48
      $region30: #{one_conv_forward.3} parent=27 // pred_check_branch
        %255 = sbr.rel (%p253) target = $region32
      $region31: #{one_conv_forward.3} parent=27 // pred_region
        %s256 = smul.u32 32, %s22
        %p257 = scmp.lt.s32.totalorder %s21, 1
        %s258 = scalar_select %p257, %s21, 1
        %p259 = scmp.lt.s32.totalorder %s256, 31
        %s260 = scalar_select %p259, %s256, 31
        %s261 = smul.addr %s258, 32
        %s262 = sadd.s32 %s260, %s261
        %s263 = smul.addr %s262, 4
        %s264 = scalar_lea.vmem %s0, %s263
        %s265 = smul.u32 32, %s22
      $region32: #{one_conv_forward.3} parent=27 // pred_fallthru
        _
      // Predicated region
      $region33: #{one_conv_forward.3} parent=27 // pred_check
        %p266 = pneg %p137
      $region34: #{one_conv_forward.3} parent=27 // pred_check_branch
        %268 = sbr.rel (%p266) target = $region36
      $region35: #{one_conv_forward.3} parent=27 // pred_region
        %p269 = scmp.lt.s32.totalorder %s21, 1
        %s270 = scalar_select %p269, %s21, 1
        %s271 = scalar_lea.vmem %s4, %s270
      $region36: #{one_conv_forward.3} parent=27 // pred_fallthru
        _
      // Predicated region
      $region37: #{one_conv_forward.3} parent=27 // pred_check
        %p272 = pneg %p163
      $region38: #{one_conv_forward.3} parent=27 // pred_check_branch
        %274 = sbr.rel (%p272) target = $region40
      $region39: #{one_conv_forward.3} parent=27 // pred_region
        %p275 = scmp.lt.s32.totalorder %s21, 1
        %s276 = scalar_select %p275, %s21, 1
        %s277 = scalar_lea.vmem %s5, %s276
      $region40: #{one_conv_forward.3} parent=27 // pred_fallthru
        _
    $region28: #{one_conv_forward.3} parent=5 // pred_fallthru
      _
    %p278 = scmp.le.s32.totalorder 1, %s14
    %p279 = scmp.lt.s32.totalorder %s14, 3
    %p280 = pnand %p278, %p279
    %p281 = pneg %p280
    // Predicated region
    $region41: #{one_conv_forward.3} parent=5 // pred_check
      _
    $region42: #{one_conv_forward.3} parent=5 // pred_check_branch
      %283 = sbr.rel (%p280) target = $region44
    $region43: #{one_conv_forward.3} parent=5 // pred_region
      %s284 = ssub.s32 %s14, 1
      %s285 = smul.u32 32, %s24
      %p286 = scmp.lt.s32.totalorder %s23, 1
      %s287 = scalar_select %p286, %s23, 1
      %p288 = scmp.lt.s32.totalorder %s285, 31
      %s289 = scalar_select %p288, %s285, 31
      %s290 = smul.addr %s287, 32
      %s291 = sadd.s32 %s289, %s290
      %s292 = smul.addr %s291, 4
      %s293 = scalar_lea.vmem %s0, %s292
      %p294 = pneg %p54
      %p295 = pneg %p51
      %p296 = pneg %p75
      %p297 = pneg %p72
      %p298 = pneg %p96
      %p299 = pneg %p93
      %p300 = pneg %p117
      %p301 = pneg %p114
      %p302 = scmp.lt.s32.totalorder %s23, 1
      %s303 = scalar_select %p302, %s23, 1
      %s304 = scalar_lea.vmem %s4, %s303
      %p305 = pneg %p143
      %p306 = pneg %p140
      %p307 = scmp.lt.s32.totalorder %s23, 1
      %s308 = scalar_select %p307, %s23, 1
      %s309 = scalar_lea.vmem %s5, %s308
      %p310 = pneg %p169
      %p311 = pneg %p166
      %p312 = pneg %p197
      %p313 = pneg %p194
      %s314 = smul.u32 32, %s24
      %p315 = scmp.lt.s32.totalorder %s23, 1
      %s316 = scalar_select %p315, %s23, 1
      %p317 = scmp.lt.s32.totalorder %s314, 31
      %s318 = scalar_select %p317, %s314, 31
      %s319 = smul.addr %s316, 32
      %s320 = sadd.s32 %s318, %s319
      %s321 = smul.addr %s320, 4
      %s322 = scalar_lea.vmem %s6, %s321
      %p323 = pneg %p225
      %p324 = pneg %p222
      %s325 = smul.u32 32, %s24
      %p326 = scmp.lt.s32.totalorder %s23, 1
      %s327 = scalar_select %p326, %s23, 1
      %p328 = scmp.lt.s32.totalorder %s325, 31
      %s329 = scalar_select %p328, %s325, 31
      %s330 = smul.addr %s327, 32
      %s331 = sadd.s32 %s329, %s330
      %s332 = smul.addr %s331, 8
      %s333 = scalar_lea.vmem %s7, %s332
      %s334 = smul.u32 32, %s24
      %p335 = scmp.lt.s32.totalorder %s23, 1
      %s336 = scalar_select %p335, %s23, 1
      %p337 = scmp.lt.s32.totalorder %s334, 31
      %s338 = scalar_select %p337, %s334, 31
      %s339 = smul.addr %s336, 32
      %s340 = sadd.s32 %s338, %s339
      %s341 = smul.addr %s340, 4
      %s342 = scalar_lea.vmem %s0, %s341
      %s343 = smul.u32 32, %s24
      %p344 = scmp.lt.s32.totalorder %s23, 1
      %s345 = scalar_select %p344, %s23, 1
      %s346 = scalar_lea.vmem %s4, %s345
      %p347 = scmp.lt.s32.totalorder %s23, 1
      %s348 = scalar_select %p347, %s23, 1
      %s349 = scalar_lea.vmem %s5, %s348
      %s350 = smul.u32 32, %s24
      %p351 = scmp.lt.s32.totalorder %s23, 1
      %s352 = scalar_select %p351, %s23, 1
      %p353 = scmp.lt.s32.totalorder %s350, 31
      %s354 = scalar_select %p353, %s350, 31
      %s355 = smul.addr %s352, 32
      %s356 = sadd.s32 %s354, %s355
      %s357 = smul.addr %s356, 4
      %s358 = scalar_lea.vmem %s6, %s357
      %s359 = smul.u32 32, %s24
      %s360 = smul.u32 32, %s24
      %p361 = scmp.lt.s32.totalorder %s23, 1
      %s362 = scalar_select %p361, %s23, 1
      %p363 = scmp.lt.s32.totalorder %s360, 31
      %s364 = scalar_select %p363, %s360, 31
      %s365 = smul.addr %s362, 32
      %s366 = sadd.s32 %s364, %s365
      %s367 = smul.addr %s366, 8
      %s368 = scalar_lea.vmem %s7, %s367
      %s369 = smul.u32 32, %s24
      %v371 = vld [vmem:[%s342] sm:$0xf]
      %v372 = vld [vmem:[%s342 + $0x4] sm:$0xf]
      %v373 = vld [vmem:[%s342 + $0x8] sm:$0xf]
      %v374 = vld [vmem:[%s342 + $0xc] sm:$0xf]
      %v375 = vld [vmem:[%s342 + $0x10] sm:$0xf]
      %v376 = vld [vmem:[%s342 + $0x14] sm:$0xf]
      %v377 = vld [vmem:[%s342 + $0x18] sm:$0xf]
      %v378 = vld [vmem:[%s342 + $0x1c] sm:$0xf]
      %v379 = vld [vmem:[%s342 + $0x20] sm:$0xf]
      %v380 = vld [vmem:[%s342 + $0x24] sm:$0xf]
      %v381 = vld [vmem:[%s342 + $0x28] sm:$0xf]
      %v382 = vld [vmem:[%s342 + $0x2c] sm:$0xf]
      %v383 = vld [vmem:[%s342 + $0x30] sm:$0xf]
      %v384 = vld [vmem:[%s342 + $0x34] sm:$0xf]
      %v385 = vld [vmem:[%s342 + $0x38] sm:$0xf]
      %v386 = vld [vmem:[%s342 + $0x3c] sm:$0xf]
      %v387 = vld [vmem:[%s342 + $0x40] sm:$0xf]
      %v388 = vld [vmem:[%s342 + $0x44] sm:$0xf]
      %v389 = vld [vmem:[%s342 + $0x48] sm:$0xf]
      %v390 = vld [vmem:[%s342 + $0x4c] sm:$0xf]
      %v391 = vld [vmem:[%s342 + $0x50] sm:$0xf]
      %v392 = vld [vmem:[%s342 + $0x54] sm:$0xf]
      %v393 = vld [vmem:[%s342 + $0x58] sm:$0xf]
      %v394 = vld [vmem:[%s342 + $0x5c] sm:$0xf]
      %v395 = vld [vmem:[%s342 + $0x60] sm:$0xf]
      %v396 = vld [vmem:[%s342 + $0x64] sm:$0xf]
      %v397 = vld [vmem:[%s342 + $0x68] sm:$0xf]
      %v398 = vld [vmem:[%s342 + $0x6c] sm:$0xf]
      %v399 = vld [vmem:[%s342 + $0x70] sm:$0xf]
      %v400 = vld [vmem:[%s342 + $0x74] sm:$0xf]
      %v401 = vld [vmem:[%s342 + $0x78] sm:$0xf]
      %v402 = vld [vmem:[%s342 + $0x7c] sm:$0xf]
      %v403 = vld [vmem:[%s1] sm:$0xf]
      %v404 = vld [vmem:[%s1 + $0x4] sm:$0xf]
      %v405 = vld [vmem:[%s1 + $0x8] sm:$0xf]
      %v406 = vld [vmem:[%s1 + $0xc] sm:$0xf]
      %v407 = vld [vmem:[%s1 + $0x10] sm:$0x3]
      %v408 = vld [vmem:[%s2] sm:$0x1]
      %v410 = vlaneseq
      %v411 = vshrl.u32 %v410, 7
      %v412 = vsub.s32 0, %v411
      %v413 = vrot.slane %v408, %v412
      %v447 = vunpack.c.l.b16 %v371
      %v448 = vunpack.c.l.b16 %v372
      %v449 = vunpack.c.l.b16 %v373
      %v450 = vunpack.c.l.b16 %v374
      %v451 = vunpack.c.l.b16 %v375
      %v452 = vunpack.c.l.b16 %v376
      %v453 = vunpack.c.l.b16 %v377
      %v454 = vunpack.c.l.b16 %v378
      %v455 = vunpack.c.l.b16 %v379
      %v456 = vunpack.c.l.b16 %v380
      %v457 = vunpack.c.l.b16 %v381
      %v458 = vunpack.c.l.b16 %v382
      %v459 = vunpack.c.l.b16 %v383
      %v460 = vunpack.c.l.b16 %v384
      %v461 = vunpack.c.l.b16 %v385
      %v462 = vunpack.c.l.b16 %v386
      %v463 = vunpack.c.l.b16 %v387
      %v464 = vunpack.c.l.b16 %v388
      %v465 = vunpack.c.l.b16 %v389
      %v466 = vunpack.c.l.b16 %v390
      %v467 = vunpack.c.l.b16 %v391
      %v468 = vunpack.c.l.b16 %v392
      %v469 = vunpack.c.l.b16 %v393
      %v470 = vunpack.c.l.b16 %v394
      %v471 = vunpack.c.l.b16 %v395
      %v472 = vunpack.c.l.b16 %v396
      %v473 = vunpack.c.l.b16 %v397
      %v474 = vunpack.c.l.b16 %v398
      %v475 = vunpack.c.l.b16 %v399
      %v476 = vunpack.c.l.b16 %v400
      %v477 = vunpack.c.l.b16 %v401
      %v478 = vunpack.c.l.b16 %v402
      %v479 = vpack.c.b16 %v448, %v447
      %v480 = vpack.c.b16 %v450, %v449
      %v481 = vpack.c.b16 %v452, %v451
      %v482 = vpack.c.b16 %v454, %v453
      %v483 = vpack.c.b16 %v456, %v455
      %v484 = vpack.c.b16 %v458, %v457
      %v485 = vpack.c.b16 %v460, %v459
      %v486 = vpack.c.b16 %v462, %v461
      %v487 = vpack.c.b16 %v464, %v463
      %v488 = vpack.c.b16 %v466, %v465
      %v489 = vpack.c.b16 %v468, %v467
      %v490 = vpack.c.b16 %v470, %v469
      %v491 = vpack.c.b16 %v472, %v471
      %v492 = vpack.c.b16 %v474, %v473
      %v493 = vpack.c.b16 %v476, %v475
      %v494 = vpack.c.b16 %v478, %v477
      %v500 = vunpack.c.l.b16 %v403
      %v501 = vunpack.c.l.b16 %v404
      %v502 = vunpack.c.l.b16 %v405
      %v503 = vunpack.c.l.b16 %v406
      %v504 = vunpack.c.l.b16 %v407
      %v505 = vpack.c.b16 %v501, %v500
      %v506 = vpack.c.b16 %v503, %v502
      %v507 = vpack.c.b16 %v504, %v504
      %vm510 = vcmask 293888
      %v512 = vsel %vm510, %v479, 0
      %v515 = vsel %vm510, %v480, 0
      %v518 = vsel %vm510, %v481, 0
      %v521 = vsel %vm510, %v482, 0
      %v524 = vsel %vm510, %v483, 0
      %v527 = vsel %vm510, %v484, 0
      %v530 = vsel %vm510, %v485, 0
      %v533 = vsel %vm510, %v486, 0
      %v536 = vsel %vm510, %v487, 0
      %v539 = vsel %vm510, %v488, 0
      %v542 = vsel %vm510, %v489, 0
      %v545 = vsel %vm510, %v490, 0
      %v548 = vsel %vm510, %v491, 0
      %v551 = vsel %vm510, %v492, 0
      %v554 = vsel %vm510, %v493, 0
      %v557 = vsel %vm510, %v494, 0
      %vm559 = vcmask 1041408
      %v561 = vsel %vm559, %v507, 0
      %563 = vmatprep.subr.bf16.mxu0 0
      %564 = vmatpush1.bf16.msra.mxu0 %v505
      %565 = vmatprep.subr.bf16.mxu0 0
      %566 = vmatpush1.bf16.msra.mxu0 %v506
      %567 = vmatprep.subr.bf16.mxu0 0
      %568 = vmatpush1.bf16.msra.mxu0 %v561
      %569 = vmatprep.subr.bf16.mxu0 0
      %570 = vmatpush1.bf16.msra.mxu0 0
      %571 = vmatprep.subr.bf16.mxu0 0
      %572 = vmatpush1.bf16.msra.mxu0 0
      %573 = vmatprep.subr.bf16.mxu0 0
      %574 = vmatpush1.bf16.msra.mxu0 0
      %575 = vmatprep.subr.bf16.mxu0 0
      %576 = vmatpush1.bf16.msra.mxu0 0
      %577 = vmatprep.subr.bf16.mxu0 0
      %578 = vmatpush1.bf16.msra.mxu0 0
      %579 = vmatprep.subr.bf16.mxu0 0
      %580 = vmatpush1.bf16.msra.mxu0 0
      %581 = vmatprep.subr.bf16.mxu0 0
      %582 = vmatpush1.bf16.msra.mxu0 0
      %583 = vmatprep.subr.bf16.mxu0 0
      %584 = vmatpush1.bf16.msra.mxu0 0
      %585 = vmatprep.subr.bf16.mxu0 0
      %586 = vmatpush1.bf16.msra.mxu0 0
      %587 = vmatprep.subr.bf16.mxu0 0
      %588 = vmatpush1.bf16.msra.mxu0 0
      %589 = vmatprep.subr.bf16.mxu0 0
      %590 = vmatpush1.bf16.msra.mxu0 0
      %591 = vmatprep.subr.bf16.mxu0 0
      %592 = vmatpush1.bf16.msra.mxu0 0
      %593 = vmatprep.subr.bf16.mxu0 0
      %594 = vmatpush1.bf16.msra.mxu0 0
      %595 = vmatprep.mubr.bf16.mxu0 0
      %596 = vmatmul.mubr.bf16.gmra.mrb[0].mxu0 %v512
      %v597 = vpop.f32.mrb[0].mxu0
      %v598 = vadd.f32 %v413, %v597
      %v599 = vpop.f32.mrb[0].mxu0
      %v600 = vpop.f32.mrb[0].mxu0
      %v601 = vadd.f32 %v413, %v600
      %v602 = vpop.f32.mrb[0].mxu0
      %603 = vmatprep.mubr.bf16.mxu0 0
      %604 = vmatmul.mubr.bf16.gmra.mrb[0].mxu0 %v515
      %v605 = vpop.f32.mrb[0].mxu0
      %v606 = vadd.f32 %v413, %v605
      %v607 = vpop.f32.mrb[0].mxu0
      %v608 = vpop.f32.mrb[0].mxu0
      %v609 = vadd.f32 %v413, %v608
      %v610 = vpop.f32.mrb[0].mxu0
      %611 = vmatprep.mubr.bf16.mxu0 0
      %612 = vmatmul.mubr.bf16.gmra.mrb[0].mxu0 %v518
      %v613 = vpop.f32.mrb[0].mxu0
      %v614 = vadd.f32 %v413, %v613
      %v615 = vpop.f32.mrb[0].mxu0
      %v616 = vpop.f32.mrb[0].mxu0
      %v617 = vadd.f32 %v413, %v616
      %v618 = vpop.f32.mrb[0].mxu0
      %619 = vmatprep.mubr.bf16.mxu0 0
      %620 = vmatmul.mubr.bf16.gmra.mrb[0].mxu0 %v521
      %v621 = vpop.f32.mrb[0].mxu0
      %v622 = vadd.f32 %v413, %v621
      %v623 = vpop.f32.mrb[0].mxu0
      %v624 = vpop.f32.mrb[0].mxu0
      %v625 = vadd.f32 %v413, %v624
      %v626 = vpop.f32.mrb[0].mxu0
      %627 = vmatprep.mubr.bf16.mxu0 0
      %628 = vmatmul.mubr.bf16.gmra.mrb[0].mxu0 %v524
      %v629 = vpop.f32.mrb[0].mxu0
      %v630 = vadd.f32 %v413, %v629
      %v631 = vpop.f32.mrb[0].mxu0
      %v632 = vpop.f32.mrb[0].mxu0
      %v633 = vadd.f32 %v413, %v632
      %v634 = vpop.f32.mrb[0].mxu0
      %635 = vmatprep.mubr.bf16.mxu0 0
      %636 = vmatmul.mubr.bf16.gmra.mrb[0].mxu0 %v527
      %v637 = vpop.f32.mrb[0].mxu0
      %v638 = vadd.f32 %v413, %v637
      %v639 = vpop.f32.mrb[0].mxu0
      %v640 = vpop.f32.mrb[0].mxu0
      %v641 = vadd.f32 %v413, %v640
      %v642 = vpop.f32.mrb[0].mxu0
      %643 = vmatprep.mubr.bf16.mxu0 0
      %644 = vmatmul.mubr.bf16.gmra.mrb[0].mxu0 %v530
      %v645 = vpop.f32.mrb[0].mxu0
      %v646 = vadd.f32 %v413, %v645
      %v647 = vpop.f32.mrb[0].mxu0
      %v648 = vpop.f32.mrb[0].mxu0
      %v649 = vadd.f32 %v413, %v648
      %v650 = vpop.f32.mrb[0].mxu0
      %651 = vmatprep.mubr.bf16.mxu0 0
      %652 = vmatmul.mubr.bf16.gmra.mrb[0].mxu0 %v533
      %v653 = vpop.f32.mrb[0].mxu0
      %v654 = vadd.f32 %v413, %v653
      %v655 = vpop.f32.mrb[0].mxu0
      %v656 = vpop.f32.mrb[0].mxu0
      %v657 = vadd.f32 %v413, %v656
      %v658 = vpop.f32.mrb[0].mxu0
      %659 = vmatprep.mubr.bf16.mxu0 0
      %660 = vmatmul.mubr.bf16.gmra.mrb[0].mxu0 %v536
      %v661 = vpop.f32.mrb[0].mxu0
      %v662 = vadd.f32 %v413, %v661
      %v663 = vpop.f32.mrb[0].mxu0
      %v664 = vpop.f32.mrb[0].mxu0
      %v665 = vadd.f32 %v413, %v664
      %v666 = vpop.f32.mrb[0].mxu0
      %667 = vmatprep.mubr.bf16.mxu0 0
      %668 = vmatmul.mubr.bf16.gmra.mrb[0].mxu0 %v539
      %v669 = vpop.f32.mrb[0].mxu0
      %v670 = vadd.f32 %v413, %v669
      %v671 = vpop.f32.mrb[0].mxu0
      %v672 = vpop.f32.mrb[0].mxu0
      %v673 = vadd.f32 %v413, %v672
      %v674 = vpop.f32.mrb[0].mxu0
      %675 = vmatprep.mubr.bf16.mxu0 0
      %676 = vmatmul.mubr.bf16.gmra.mrb[0].mxu0 %v542
      %v677 = vpop.f32.mrb[0].mxu0
      %v678 = vadd.f32 %v413, %v677
      %v679 = vpop.f32.mrb[0].mxu0
      %v680 = vpop.f32.mrb[0].mxu0
      %v681 = vadd.f32 %v413, %v680
      %v682 = vpop.f32.mrb[0].mxu0
      %683 = vmatprep.mubr.bf16.mxu0 0
      %684 = vmatmul.mubr.bf16.gmra.mrb[0].mxu0 %v545
      %v685 = vpop.f32.mrb[0].mxu0
      %v686 = vadd.f32 %v413, %v685
      %v687 = vpop.f32.mrb[0].mxu0
      %v688 = vpop.f32.mrb[0].mxu0
      %v689 = vadd.f32 %v413, %v688
      %v690 = vpop.f32.mrb[0].mxu0
      %691 = vmatprep.mubr.bf16.mxu0 0
      %692 = vmatmul.mubr.bf16.gmra.mrb[0].mxu0 %v548
      %v693 = vpop.f32.mrb[0].mxu0
      %v694 = vadd.f32 %v413, %v693
      %v695 = vpop.f32.mrb[0].mxu0
      %v696 = vpop.f32.mrb[0].mxu0
      %v697 = vadd.f32 %v413, %v696
      %v698 = vpop.f32.mrb[0].mxu0
      %699 = vmatprep.mubr.bf16.mxu0 0
      %700 = vmatmul.mubr.bf16.gmra.mrb[0].mxu0 %v551
      %v701 = vpop.f32.mrb[0].mxu0
      %v702 = vadd.f32 %v413, %v701
      %v703 = vpop.f32.mrb[0].mxu0
      %v704 = vpop.f32.mrb[0].mxu0
      %v705 = vadd.f32 %v413, %v704
      %v706 = vpop.f32.mrb[0].mxu0
      %707 = vmatprep.mubr.bf16.mxu0 0
      %708 = vmatmul.mubr.bf16.gmra.mrb[0].mxu0 %v554
      %v709 = vpop.f32.mrb[0].mxu0
      %v710 = vadd.f32 %v413, %v709
      %v711 = vpop.f32.mrb[0].mxu0
      %v712 = vpop.f32.mrb[0].mxu0
      %v713 = vadd.f32 %v413, %v712
      %v714 = vpop.f32.mrb[0].mxu0
      %715 = vmatprep.mubr.bf16.mxu0 0
      %716 = vmatmul.mubr.bf16.gmra.mrb[0].mxu0 %v557
      %v717 = vpop.f32.mrb[0].mxu0
      %v718 = vadd.f32 %v413, %v717
      %v719 = vpop.f32.mrb[0].mxu0
      %v720 = vpop.f32.mrb[0].mxu0
      %v721 = vadd.f32 %v413, %v720
      %v722 = vpop.f32.mrb[0].mxu0
      %723 = vdwg.mxu0
      %v724 = vmax.f32 %v598, 0.0
      %v725 = vmax.f32 %v601, 0.0
      %v726 = vmax.f32 %v606, 0.0
      %v727 = vmax.f32 %v609, 0.0
      %v728 = vmax.f32 %v614, 0.0
      %v729 = vmax.f32 %v617, 0.0
      %v730 = vmax.f32 %v622, 0.0
      %v731 = vmax.f32 %v625, 0.0
      %v732 = vmax.f32 %v630, 0.0
      %v733 = vmax.f32 %v633, 0.0
      %v734 = vmax.f32 %v638, 0.0
      %v735 = vmax.f32 %v641, 0.0
      %v736 = vmax.f32 %v646, 0.0
      %v737 = vmax.f32 %v649, 0.0
      %v738 = vmax.f32 %v654, 0.0
      %v739 = vmax.f32 %v657, 0.0
      %v740 = vmax.f32 %v662, 0.0
      %v741 = vmax.f32 %v665, 0.0
      %v742 = vmax.f32 %v670, 0.0
      %v743 = vmax.f32 %v673, 0.0
      %v744 = vmax.f32 %v678, 0.0
      %v745 = vmax.f32 %v681, 0.0
      %v746 = vmax.f32 %v686, 0.0
      %v747 = vmax.f32 %v689, 0.0
      %v748 = vmax.f32 %v694, 0.0
      %v749 = vmax.f32 %v697, 0.0
      %v750 = vmax.f32 %v702, 0.0
      %v751 = vmax.f32 %v705, 0.0
      %v752 = vmax.f32 %v710, 0.0
      %v753 = vmax.f32 %v713, 0.0
      %v754 = vmax.f32 %v718, 0.0
      %v755 = vmax.f32 %v721, 0.0
      %v756 = vpack.c.bf16 %v725, %v724
      %v757 = vpack.c.bf16 %v727, %v726
      %v758 = vpack.c.bf16 %v729, %v728
      %v759 = vpack.c.bf16 %v731, %v730
      %v760 = vpack.c.bf16 %v733, %v732
      %v761 = vpack.c.bf16 %v735, %v734
      %v762 = vpack.c.bf16 %v737, %v736
      %v763 = vpack.c.bf16 %v739, %v738
      %v764 = vpack.c.bf16 %v741, %v740
      %v765 = vpack.c.bf16 %v743, %v742
      %v766 = vpack.c.bf16 %v745, %v744
      %v767 = vpack.c.bf16 %v747, %v746
      %v768 = vpack.c.bf16 %v749, %v748
      %v769 = vpack.c.bf16 %v751, %v750
      %v770 = vpack.c.bf16 %v753, %v752
      %v771 = vpack.c.bf16 %v755, %v754
      %v788 = vunpack.c.l.b16 %v756
      %v789 = vunpack.c.h.b16 %v756
      %v790 = vunpack.c.l.b16 %v757
      %v791 = vunpack.c.h.b16 %v757
      %v792 = vunpack.c.l.b16 %v758
      %v793 = vunpack.c.h.b16 %v758
      %v794 = vunpack.c.l.b16 %v759
      %v795 = vunpack.c.h.b16 %v759
      %v796 = vunpack.c.l.b16 %v760
      %v797 = vunpack.c.h.b16 %v760
      %v798 = vunpack.c.l.b16 %v761
      %v799 = vunpack.c.h.b16 %v761
      %v800 = vunpack.c.l.b16 %v762
      %v801 = vunpack.c.h.b16 %v762
      %v802 = vunpack.c.l.b16 %v763
      %v803 = vunpack.c.h.b16 %v763
      %v804 = vunpack.c.l.b16 %v764
      %v805 = vunpack.c.h.b16 %v764
      %v806 = vunpack.c.l.b16 %v765
      %v807 = vunpack.c.h.b16 %v765
      %v808 = vunpack.c.l.b16 %v766
      %v809 = vunpack.c.h.b16 %v766
      %v810 = vunpack.c.l.b16 %v767
      %v811 = vunpack.c.h.b16 %v767
      %v812 = vunpack.c.l.b16 %v768
      %v813 = vunpack.c.h.b16 %v768
      %v814 = vunpack.c.l.b16 %v769
      %v815 = vunpack.c.h.b16 %v769
      %v816 = vunpack.c.l.b16 %v770
      %v817 = vunpack.c.h.b16 %v770
      %v818 = vunpack.c.l.b16 %v771
      %v819 = vunpack.c.h.b16 %v771
      %v820 = vpack.c.b16 %v788, %v788
      %v821 = vpack.c.b16 %v789, %v789
      %v822 = vpack.c.b16 %v790, %v790
      %v823 = vpack.c.b16 %v791, %v791
      %v824 = vpack.c.b16 %v792, %v792
      %v825 = vpack.c.b16 %v793, %v793
      %v826 = vpack.c.b16 %v794, %v794
      %v827 = vpack.c.b16 %v795, %v795
      %v828 = vpack.c.b16 %v796, %v796
      %v829 = vpack.c.b16 %v797, %v797
      %v830 = vpack.c.b16 %v798, %v798
      %v831 = vpack.c.b16 %v799, %v799
      %v832 = vpack.c.b16 %v800, %v800
      %v833 = vpack.c.b16 %v801, %v801
      %v834 = vpack.c.b16 %v802, %v802
      %v835 = vpack.c.b16 %v803, %v803
      %v836 = vpack.c.b16 %v804, %v804
      %v837 = vpack.c.b16 %v805, %v805
      %v838 = vpack.c.b16 %v806, %v806
      %v839 = vpack.c.b16 %v807, %v807
      %v840 = vpack.c.b16 %v808, %v808
      %v841 = vpack.c.b16 %v809, %v809
      %v842 = vpack.c.b16 %v810, %v810
      %v843 = vpack.c.b16 %v811, %v811
      %v844 = vpack.c.b16 %v812, %v812
      %v845 = vpack.c.b16 %v813, %v813
      %v846 = vpack.c.b16 %v814, %v814
      %v847 = vpack.c.b16 %v815, %v815
      %v848 = vpack.c.b16 %v816, %v816
      %v849 = vpack.c.b16 %v817, %v817
      %v850 = vpack.c.b16 %v818, %v818
      %v851 = vpack.c.b16 %v819, %v819
      %884 = vst [vmem:[%s358] sm:$0xf] %v820
      %885 = vst [vmem:[%s358 + $0x4] sm:$0xf] %v821
      %886 = vst [vmem:[%s358 + $0x8] sm:$0xf] %v822
      %887 = vst [vmem:[%s358 + $0xc] sm:$0xf] %v823
      %888 = vst [vmem:[%s358 + $0x10] sm:$0xf] %v824
      %889 = vst [vmem:[%s358 + $0x14] sm:$0xf] %v825
      %890 = vst [vmem:[%s358 + $0x18] sm:$0xf] %v826
      %891 = vst [vmem:[%s358 + $0x1c] sm:$0xf] %v827
      %892 = vst [vmem:[%s358 + $0x20] sm:$0xf] %v828
      %893 = vst [vmem:[%s358 + $0x24] sm:$0xf] %v829
      %894 = vst [vmem:[%s358 + $0x28] sm:$0xf] %v830
      %895 = vst [vmem:[%s358 + $0x2c] sm:$0xf] %v831
      %896 = vst [vmem:[%s358 + $0x30] sm:$0xf] %v832
      %897 = vst [vmem:[%s358 + $0x34] sm:$0xf] %v833
      %898 = vst [vmem:[%s358 + $0x38] sm:$0xf] %v834
      %899 = vst [vmem:[%s358 + $0x3c] sm:$0xf] %v835
      %900 = vst [vmem:[%s358 + $0x40] sm:$0xf] %v836
      %901 = vst [vmem:[%s358 + $0x44] sm:$0xf] %v837
      %902 = vst [vmem:[%s358 + $0x48] sm:$0xf] %v838
      %903 = vst [vmem:[%s358 + $0x4c] sm:$0xf] %v839
      %904 = vst [vmem:[%s358 + $0x50] sm:$0xf] %v840
      %905 = vst [vmem:[%s358 + $0x54] sm:$0xf] %v841
      %906 = vst [vmem:[%s358 + $0x58] sm:$0xf] %v842
      %907 = vst [vmem:[%s358 + $0x5c] sm:$0xf] %v843
      %908 = vst [vmem:[%s358 + $0x60] sm:$0xf] %v844
      %909 = vst [vmem:[%s358 + $0x64] sm:$0xf] %v845
      %910 = vst [vmem:[%s358 + $0x68] sm:$0xf] %v846
      %911 = vst [vmem:[%s358 + $0x6c] sm:$0xf] %v847
      %912 = vst [vmem:[%s358 + $0x70] sm:$0xf] %v848
      %913 = vst [vmem:[%s358 + $0x74] sm:$0xf] %v849
      %914 = vst [vmem:[%s358 + $0x78] sm:$0xf] %v850
      %915 = vst [vmem:[%s358 + $0x7c] sm:$0xf] %v851
      %v916 = vld [vmem:[%s3] sm:$0xf]
      %v917 = vld [vmem:[%s3 + $0x4] sm:$0xf]
      %v918 = vld [vmem:[%s3 + $0x8] sm:$0xf]
      %v919 = vld [vmem:[%s3 + $0xc] sm:$0xf]
      %v920 = vld [vmem:[%s3 + $0x10] sm:$0x3]
      %v926 = vunpack.c.l.b16 %v916
      %v927 = vunpack.c.l.b16 %v917
      %v928 = vunpack.c.l.b16 %v918
      %v929 = vunpack.c.l.b16 %v919
      %v930 = vunpack.c.l.b16 %v920
      %v931 = vpack.c.b16 %v927, %v926
      %v932 = vpack.c.b16 %v929, %v928
      %v933 = vpack.c.b16 %v930, %v930
      %v937 = vsel %vm559, %v933, 0
      %939 = vmatprep.subr.bf16.mxu0 0
      %940 = vmatpush1.bf16.msra.mxu0 %v931
      %941 = vmatprep.subr.bf16.mxu0 0
      %942 = vmatpush1.bf16.msra.mxu0 %v932
      %943 = vmatprep.subr.bf16.mxu0 0
      %944 = vmatpush1.bf16.msra.mxu0 %v937
      %945 = vmatprep.subr.bf16.mxu0 0
      %946 = vmatpush1.bf16.msra.mxu0 0
      %947 = vmatprep.subr.bf16.mxu0 0
      %948 = vmatpush1.bf16.msra.mxu0 0
      %949 = vmatprep.subr.bf16.mxu0 0
      %950 = vmatpush1.bf16.msra.mxu0 0
      %951 = vmatprep.subr.bf16.mxu0 0
      %952 = vmatpush1.bf16.msra.mxu0 0
      %953 = vmatprep.subr.bf16.mxu0 0
      %954 = vmatpush1.bf16.msra.mxu0 0
      %955 = vmatprep.subr.bf16.mxu0 0
      %956 = vmatpush1.bf16.msra.mxu0 0
      %957 = vmatprep.subr.bf16.mxu0 0
      %958 = vmatpush1.bf16.msra.mxu0 0
      %959 = vmatprep.subr.bf16.mxu0 0
      %960 = vmatpush1.bf16.msra.mxu0 0
      %961 = vmatprep.subr.bf16.mxu0 0
      %962 = vmatpush1.bf16.msra.mxu0 0
      %963 = vmatprep.subr.bf16.mxu0 0
      %964 = vmatpush1.bf16.msra.mxu0 0
      %965 = vmatprep.subr.bf16.mxu0 0
      %966 = vmatpush1.bf16.msra.mxu0 0
      %967 = vmatprep.subr.bf16.mxu0 0
      %968 = vmatpush1.bf16.msra.mxu0 0
      %969 = vmatprep.subr.bf16.mxu0 0
      %970 = vmatpush1.bf16.msra.mxu0 0
      %971 = vmatprep.mubr.bf16.mxu0 0
      %972 = vmatmul.mubr.bf16.gmra.mrb[0].mxu0 %v512
      %v973 = vpop.f32.mrb[0].mxu0
      %v974 = vadd.f32 0.0, %v973
      %v975 = vpop.f32.mrb[0].mxu0
      %v976 = vpop.f32.mrb[0].mxu0
      %v977 = vadd.f32 0.0, %v976
      %v978 = vpop.f32.mrb[0].mxu0
      %979 = vmatprep.mubr.bf16.mxu0 0
      %980 = vmatmul.mubr.bf16.gmra.mrb[0].mxu0 %v515
      %v981 = vpop.f32.mrb[0].mxu0
      %v982 = vadd.f32 0.0, %v981
      %v983 = vpop.f32.mrb[0].mxu0
      %v984 = vpop.f32.mrb[0].mxu0
      %v985 = vadd.f32 0.0, %v984
      %v986 = vpop.f32.mrb[0].mxu0
      %987 = vmatprep.mubr.bf16.mxu0 0
      %988 = vmatmul.mubr.bf16.gmra.mrb[0].mxu0 %v518
      %v989 = vpop.f32.mrb[0].mxu0
      %v990 = vadd.f32 0.0, %v989
      %v991 = vpop.f32.mrb[0].mxu0
      %v992 = vpop.f32.mrb[0].mxu0
      %v993 = vadd.f32 0.0, %v992
      %v994 = vpop.f32.mrb[0].mxu0
      %995 = vmatprep.mubr.bf16.mxu0 0
      %996 = vmatmul.mubr.bf16.gmra.mrb[0].mxu0 %v521
      %v997 = vpop.f32.mrb[0].mxu0
      %v998 = vadd.f32 0.0, %v997
      %v999 = vpop.f32.mrb[0].mxu0
      %v1000 = vpop.f32.mrb[0].mxu0
      %v1001 = vadd.f32 0.0, %v1000
      %v1002 = vpop.f32.mrb[0].mxu0
      %1003 = vmatprep.mubr.bf16.mxu0 0
      %1004 = vmatmul.mubr.bf16.gmra.mrb[0].mxu0 %v524
      %v1005 = vpop.f32.mrb[0].mxu0
      %v1006 = vadd.f32 0.0, %v1005
      %v1007 = vpop.f32.mrb[0].mxu0
      %v1008 = vpop.f32.mrb[0].mxu0
      %v1009 = vadd.f32 0.0, %v1008
      %v1010 = vpop.f32.mrb[0].mxu0
      %1011 = vmatprep.mubr.bf16.mxu0 0
      %1012 = vmatmul.mubr.bf16.gmra.mrb[0].mxu0 %v527
      %v1013 = vpop.f32.mrb[0].mxu0
      %v1014 = vadd.f32 0.0, %v1013
      %v1015 = vpop.f32.mrb[0].mxu0
      %v1016 = vpop.f32.mrb[0].mxu0
      %v1017 = vadd.f32 0.0, %v1016
      %v1018 = vpop.f32.mrb[0].mxu0
      %1019 = vmatprep.mubr.bf16.mxu0 0
      %1020 = vmatmul.mubr.bf16.gmra.mrb[0].mxu0 %v530
      %v1021 = vpop.f32.mrb[0].mxu0
      %v1022 = vadd.f32 0.0, %v1021
      %v1023 = vpop.f32.mrb[0].mxu0
      %v1024 = vpop.f32.mrb[0].mxu0
      %v1025 = vadd.f32 0.0, %v1024
      %v1026 = vpop.f32.mrb[0].mxu0
      %1027 = vmatprep.mubr.bf16.mxu0 0
      %1028 = vmatmul.mubr.bf16.gmra.mrb[0].mxu0 %v533
      %v1029 = vpop.f32.mrb[0].mxu0
      %v1030 = vadd.f32 0.0, %v1029
      %v1031 = vpop.f32.mrb[0].mxu0
      %v1032 = vpop.f32.mrb[0].mxu0
      %v1033 = vadd.f32 0.0, %v1032
      %v1034 = vpop.f32.mrb[0].mxu0
      %1035 = vmatprep.mubr.bf16.mxu0 0
      %1036 = vmatmul.mubr.bf16.gmra.mrb[0].mxu0 %v536
      %v1037 = vpop.f32.mrb[0].mxu0
      %v1038 = vadd.f32 0.0, %v1037
      %v1039 = vpop.f32.mrb[0].mxu0
      %v1040 = vpop.f32.mrb[0].mxu0
      %v1041 = vadd.f32 0.0, %v1040
      %v1042 = vpop.f32.mrb[0].mxu0
      %1043 = vmatprep.mubr.bf16.mxu0 0
      %1044 = vmatmul.mubr.bf16.gmra.mrb[0].mxu0 %v539
      %v1045 = vpop.f32.mrb[0].mxu0
      %v1046 = vadd.f32 0.0, %v1045
      %v1047 = vpop.f32.mrb[0].mxu0
      %v1048 = vpop.f32.mrb[0].mxu0
      %v1049 = vadd.f32 0.0, %v1048
      %v1050 = vpop.f32.mrb[0].mxu0
      %1051 = vmatprep.mubr.bf16.mxu0 0
      %1052 = vmatmul.mubr.bf16.gmra.mrb[0].mxu0 %v542
      %v1053 = vpop.f32.mrb[0].mxu0
      %v1054 = vadd.f32 0.0, %v1053
      %v1055 = vpop.f32.mrb[0].mxu0
      %v1056 = vpop.f32.mrb[0].mxu0
      %v1057 = vadd.f32 0.0, %v1056
      %v1058 = vpop.f32.mrb[0].mxu0
      %1059 = vmatprep.mubr.bf16.mxu0 0
      %1060 = vmatmul.mubr.bf16.gmra.mrb[0].mxu0 %v545
      %v1061 = vpop.f32.mrb[0].mxu0
      %v1062 = vadd.f32 0.0, %v1061
      %v1063 = vpop.f32.mrb[0].mxu0
      %v1064 = vpop.f32.mrb[0].mxu0
      %v1065 = vadd.f32 0.0, %v1064
      %v1066 = vpop.f32.mrb[0].mxu0
      %1067 = vmatprep.mubr.bf16.mxu0 0
      %1068 = vmatmul.mubr.bf16.gmra.mrb[0].mxu0 %v548
      %v1069 = vpop.f32.mrb[0].mxu0
      %v1070 = vadd.f32 0.0, %v1069
      %v1071 = vpop.f32.mrb[0].mxu0
      %v1072 = vpop.f32.mrb[0].mxu0
      %v1073 = vadd.f32 0.0, %v1072
      %v1074 = vpop.f32.mrb[0].mxu0
      %1075 = vmatprep.mubr.bf16.mxu0 0
      %1076 = vmatmul.mubr.bf16.gmra.mrb[0].mxu0 %v551
      %v1077 = vpop.f32.mrb[0].mxu0
      %v1078 = vadd.f32 0.0, %v1077
      %v1079 = vpop.f32.mrb[0].mxu0
      %v1080 = vpop.f32.mrb[0].mxu0
      %v1081 = vadd.f32 0.0, %v1080
      %v1082 = vpop.f32.mrb[0].mxu0
      %1083 = vmatprep.mubr.bf16.mxu0 0
      %1084 = vmatmul.mubr.bf16.gmra.mrb[0].mxu0 %v554
      %v1085 = vpop.f32.mrb[0].mxu0
      %v1086 = vadd.f32 0.0, %v1085
      %v1087 = vpop.f32.mrb[0].mxu0
      %v1088 = vpop.f32.mrb[0].mxu0
      %v1089 = vadd.f32 0.0, %v1088
      %v1090 = vpop.f32.mrb[0].mxu0
      %1091 = vmatprep.mubr.bf16.mxu0 0
      %1092 = vmatmul.mubr.bf16.gmra.mrb[0].mxu0 %v557
      %v1093 = vpop.f32.mrb[0].mxu0
      %v1094 = vadd.f32 0.0, %v1093
      %v1095 = vpop.f32.mrb[0].mxu0
      %v1096 = vpop.f32.mrb[0].mxu0
      %v1097 = vadd.f32 0.0, %v1096
      %v1098 = vpop.f32.mrb[0].mxu0
      %1099 = vdwg.mxu0
      %v1100 = vld [vmem:[%s346] sm:$0x1]
      %v1102 = vlaneseq
      %v1103 = vshrl.u32 %v1102, 7
      %v1104 = vsub.s32 0, %v1103
      %v1105 = vrot.slane %v1100, %v1104
      %v1107 = vmul.f32 %v974, %v1105
      %v1108 = vmul.f32 %v977, %v1105
      %v1109 = vmul.f32 %v982, %v1105
      %v1110 = vmul.f32 %v985, %v1105
      %v1111 = vmul.f32 %v990, %v1105
      %v1112 = vmul.f32 %v993, %v1105
      %v1113 = vmul.f32 %v998, %v1105
      %v1114 = vmul.f32 %v1001, %v1105
      %v1115 = vmul.f32 %v1006, %v1105
      %v1116 = vmul.f32 %v1009, %v1105
      %v1117 = vmul.f32 %v1014, %v1105
      %v1118 = vmul.f32 %v1017, %v1105
      %v1119 = vmul.f32 %v1022, %v1105
      %v1120 = vmul.f32 %v1025, %v1105
      %v1121 = vmul.f32 %v1030, %v1105
      %v1122 = vmul.f32 %v1033, %v1105
      %v1123 = vmul.f32 %v1038, %v1105
      %v1124 = vmul.f32 %v1041, %v1105
      %v1125 = vmul.f32 %v1046, %v1105
      %v1126 = vmul.f32 %v1049, %v1105
      %v1127 = vmul.f32 %v1054, %v1105
      %v1128 = vmul.f32 %v1057, %v1105
      %v1129 = vmul.f32 %v1062, %v1105
      %v1130 = vmul.f32 %v1065, %v1105
      %v1131 = vmul.f32 %v1070, %v1105
      %v1132 = vmul.f32 %v1073, %v1105
      %v1133 = vmul.f32 %v1078, %v1105
      %v1134 = vmul.f32 %v1081, %v1105
      %v1135 = vmul.f32 %v1086, %v1105
      %v1136 = vmul.f32 %v1089, %v1105
      %v1137 = vmul.f32 %v1094, %v1105
      %v1138 = vmul.f32 %v1097, %v1105
      %1171 = vrot.lane.b32.xlu0 %v1107, 120
      %v1172 = vpop.permute.xlu0 %1171
      %1173 = vrot.lane.b32.xlu0 %v1108, 120
      %v1174 = vpop.permute.xlu0 %1173
      %1175 = vrot.lane.b32.xlu0 %v1109, 120
      %v1176 = vpop.permute.xlu0 %1175
      %1177 = vrot.lane.b32.xlu0 %v1110, 120
      %v1178 = vpop.permute.xlu0 %1177
      %1179 = vrot.lane.b32.xlu0 %v1111, 120
      %v1180 = vpop.permute.xlu0 %1179
      %1181 = vrot.lane.b32.xlu0 %v1112, 120
      %v1182 = vpop.permute.xlu0 %1181
      %1183 = vrot.lane.b32.xlu0 %v1113, 120
      %v1184 = vpop.permute.xlu0 %1183
      %1185 = vrot.lane.b32.xlu0 %v1114, 120
      %v1186 = vpop.permute.xlu0 %1185
      %1187 = vrot.lane.b32.xlu0 %v1115, 120
      %v1188 = vpop.permute.xlu0 %1187
      %1189 = vrot.lane.b32.xlu0 %v1116, 120
      %v1190 = vpop.permute.xlu0 %1189
      %1191 = vrot.lane.b32.xlu0 %v1117, 120
      %v1192 = vpop.permute.xlu0 %1191
      %1193 = vrot.lane.b32.xlu0 %v1118, 120
      %v1194 = vpop.permute.xlu0 %1193
      %1195 = vrot.lane.b32.xlu0 %v1119, 120
      %v1196 = vpop.permute.xlu0 %1195
      %1197 = vrot.lane.b32.xlu0 %v1120, 120
      %v1198 = vpop.permute.xlu0 %1197
      %1199 = vrot.lane.b32.xlu0 %v1121, 120
      %v1200 = vpop.permute.xlu0 %1199
      %1201 = vrot.lane.b32.xlu0 %v1122, 120
      %v1202 = vpop.permute.xlu0 %1201
      %1203 = vrot.lane.b32.xlu0 %v1123, 120
      %v1204 = vpop.permute.xlu0 %1203
      %1205 = vrot.lane.b32.xlu0 %v1124, 120
      %v1206 = vpop.permute.xlu0 %1205
      %1207 = vrot.lane.b32.xlu0 %v1125, 120
      %v1208 = vpop.permute.xlu0 %1207
      %1209 = vrot.lane.b32.xlu0 %v1126, 120
      %v1210 = vpop.permute.xlu0 %1209
      %1211 = vrot.lane.b32.xlu0 %v1127, 120
      %v1212 = vpop.permute.xlu0 %1211
      %1213 = vrot.lane.b32.xlu0 %v1128, 120
      %v1214 = vpop.permute.xlu0 %1213
      %1215 = vrot.lane.b32.xlu0 %v1129, 120
      %v1216 = vpop.permute.xlu0 %1215
      %1217 = vrot.lane.b32.xlu0 %v1130, 120
      %v1218 = vpop.permute.xlu0 %1217
      %1219 = vrot.lane.b32.xlu0 %v1131, 120
      %v1220 = vpop.permute.xlu0 %1219
      %1221 = vrot.lane.b32.xlu0 %v1132, 120
      %v1222 = vpop.permute.xlu0 %1221
      %1223 = vrot.lane.b32.xlu0 %v1133, 120
      %v1224 = vpop.permute.xlu0 %1223
      %1225 = vrot.lane.b32.xlu0 %v1134, 120
      %v1226 = vpop.permute.xlu0 %1225
      %1227 = vrot.lane.b32.xlu0 %v1135, 120
      %v1228 = vpop.permute.xlu0 %1227
      %1229 = vrot.lane.b32.xlu0 %v1136, 120
      %v1230 = vpop.permute.xlu0 %1229
      %1231 = vrot.lane.b32.xlu0 %v1137, 120
      %v1232 = vpop.permute.xlu0 %1231
      %1233 = vrot.lane.b32.xlu0 %v1138, 120
      %v1234 = vpop.permute.xlu0 %1233
      %v1267 = vadd.f32 %v1107, %v1172
      %v1268 = vadd.f32 %v1108, %v1174
      %v1269 = vadd.f32 %v1109, %v1176
      %v1270 = vadd.f32 %v1110, %v1178
      %v1271 = vadd.f32 %v1111, %v1180
      %v1272 = vadd.f32 %v1112, %v1182
      %v1273 = vadd.f32 %v1113, %v1184
      %v1274 = vadd.f32 %v1114, %v1186
      %v1275 = vadd.f32 %v1115, %v1188
      %v1276 = vadd.f32 %v1116, %v1190
      %v1277 = vadd.f32 %v1117, %v1192
      %v1278 = vadd.f32 %v1118, %v1194
      %v1279 = vadd.f32 %v1119, %v1196
      %v1280 = vadd.f32 %v1120, %v1198
      %v1281 = vadd.f32 %v1121, %v1200
      %v1282 = vadd.f32 %v1122, %v1202
      %v1283 = vadd.f32 %v1123, %v1204
      %v1284 = vadd.f32 %v1124, %v1206
      %v1285 = vadd.f32 %v1125, %v1208
      %v1286 = vadd.f32 %v1126, %v1210
      %v1287 = vadd.f32 %v1127, %v1212
      %v1288 = vadd.f32 %v1128, %v1214
      %v1289 = vadd.f32 %v1129, %v1216
      %v1290 = vadd.f32 %v1130, %v1218
      %v1291 = vadd.f32 %v1131, %v1220
      %v1292 = vadd.f32 %v1132, %v1222
      %v1293 = vadd.f32 %v1133, %v1224
      %v1294 = vadd.f32 %v1134, %v1226
      %v1295 = vadd.f32 %v1135, %v1228
      %v1296 = vadd.f32 %v1136, %v1230
      %v1297 = vadd.f32 %v1137, %v1232
      %v1298 = vadd.f32 %v1138, %v1234
      %1299 = vrot.lane.b32.xlu0 %v1107, 112
      %v1300 = vpop.permute.xlu0 %1299
      %1301 = vrot.lane.b32.xlu0 %v1108, 112
      %v1302 = vpop.permute.xlu0 %1301
      %1303 = vrot.lane.b32.xlu0 %v1109, 112
      %v1304 = vpop.permute.xlu0 %1303
      %1305 = vrot.lane.b32.xlu0 %v1110, 112
      %v1306 = vpop.permute.xlu0 %1305
      %1307 = vrot.lane.b32.xlu0 %v1111, 112
      %v1308 = vpop.permute.xlu0 %1307
      %1309 = vrot.lane.b32.xlu0 %v1112, 112
      %v1310 = vpop.permute.xlu0 %1309
      %1311 = vrot.lane.b32.xlu0 %v1113, 112
      %v1312 = vpop.permute.xlu0 %1311
      %1313 = vrot.lane.b32.xlu0 %v1114, 112
      %v1314 = vpop.permute.xlu0 %1313
      %1315 = vrot.lane.b32.xlu0 %v1115, 112
      %v1316 = vpop.permute.xlu0 %1315
      %1317 = vrot.lane.b32.xlu0 %v1116, 112
      %v1318 = vpop.permute.xlu0 %1317
      %1319 = vrot.lane.b32.xlu0 %v1117, 112
      %v1320 = vpop.permute.xlu0 %1319
      %1321 = vrot.lane.b32.xlu0 %v1118, 112
      %v1322 = vpop.permute.xlu0 %1321
      %1323 = vrot.lane.b32.xlu0 %v1119, 112
      %v1324 = vpop.permute.xlu0 %1323
      %1325 = vrot.lane.b32.xlu0 %v1120, 112
      %v1326 = vpop.permute.xlu0 %1325
      %1327 = vrot.lane.b32.xlu0 %v1121, 112
      %v1328 = vpop.permute.xlu0 %1327
      %1329 = vrot.lane.b32.xlu0 %v1122, 112
      %v1330 = vpop.permute.xlu0 %1329
      %1331 = vrot.lane.b32.xlu0 %v1123, 112
      %v1332 = vpop.permute.xlu0 %1331
      %1333 = vrot.lane.b32.xlu0 %v1124, 112
      %v1334 = vpop.permute.xlu0 %1333
      %1335 = vrot.lane.b32.xlu0 %v1125, 112
      %v1336 = vpop.permute.xlu0 %1335
      %1337 = vrot.lane.b32.xlu0 %v1126, 112
      %v1338 = vpop.permute.xlu0 %1337
      %1339 = vrot.lane.b32.xlu0 %v1127, 112
      %v1340 = vpop.permute.xlu0 %1339
      %1341 = vrot.lane.b32.xlu0 %v1128, 112
      %v1342 = vpop.permute.xlu0 %1341
      %1343 = vrot.lane.b32.xlu0 %v1129, 112
      %v1344 = vpop.permute.xlu0 %1343
      %1345 = vrot.lane.b32.xlu0 %v1130, 112
      %v1346 = vpop.permute.xlu0 %1345
      %1347 = vrot.lane.b32.xlu0 %v1131, 112
      %v1348 = vpop.permute.xlu0 %1347
      %1349 = vrot.lane.b32.xlu0 %v1132, 112
      %v1350 = vpop.permute.xlu0 %1349
      %1351 = vrot.lane.b32.xlu0 %v1133, 112
      %v1352 = vpop.permute.xlu0 %1351
      %1353 = vrot.lane.b32.xlu0 %v1134, 112
      %v1354 = vpop.permute.xlu0 %1353
      %1355 = vrot.lane.b32.xlu0 %v1135, 112
      %v1356 = vpop.permute.xlu0 %1355
      %1357 = vrot.lane.b32.xlu0 %v1136, 112
      %v1358 = vpop.permute.xlu0 %1357
      %1359 = vrot.lane.b32.xlu0 %v1137, 112
      %v1360 = vpop.permute.xlu0 %1359
      %1361 = vrot.lane.b32.xlu0 %v1138, 112
      %v1362 = vpop.permute.xlu0 %1361
      %v1395 = vadd.f32 %v1267, %v1300
      %v1396 = vadd.f32 %v1268, %v1302
      %v1397 = vadd.f32 %v1269, %v1304
      %v1398 = vadd.f32 %v1270, %v1306
      %v1399 = vadd.f32 %v1271, %v1308
      %v1400 = vadd.f32 %v1272, %v1310
      %v1401 = vadd.f32 %v1273, %v1312
      %v1402 = vadd.f32 %v1274, %v1314
      %v1403 = vadd.f32 %v1275, %v1316
      %v1404 = vadd.f32 %v1276, %v1318
      %v1405 = vadd.f32 %v1277, %v1320
      %v1406 = vadd.f32 %v1278, %v1322
      %v1407 = vadd.f32 %v1279, %v1324
      %v1408 = vadd.f32 %v1280, %v1326
      %v1409 = vadd.f32 %v1281, %v1328
      %v1410 = vadd.f32 %v1282, %v1330
      %v1411 = vadd.f32 %v1283, %v1332
      %v1412 = vadd.f32 %v1284, %v1334
      %v1413 = vadd.f32 %v1285, %v1336
      %v1414 = vadd.f32 %v1286, %v1338
      %v1415 = vadd.f32 %v1287, %v1340
      %v1416 = vadd.f32 %v1288, %v1342
      %v1417 = vadd.f32 %v1289, %v1344
      %v1418 = vadd.f32 %v1290, %v1346
      %v1419 = vadd.f32 %v1291, %v1348
      %v1420 = vadd.f32 %v1292, %v1350
      %v1421 = vadd.f32 %v1293, %v1352
      %v1422 = vadd.f32 %v1294, %v1354
      %v1423 = vadd.f32 %v1295, %v1356
      %v1424 = vadd.f32 %v1296, %v1358
      %v1425 = vadd.f32 %v1297, %v1360
      %v1426 = vadd.f32 %v1298, %v1362
      %1427 = vrot.lane.b32.xlu0 %v1107, 104
      %v1428 = vpop.permute.xlu0 %1427
      %1429 = vrot.lane.b32.xlu0 %v1108, 104
      %v1430 = vpop.permute.xlu0 %1429
      %1431 = vrot.lane.b32.xlu0 %v1109, 104
      %v1432 = vpop.permute.xlu0 %1431
      %1433 = vrot.lane.b32.xlu0 %v1110, 104
      %v1434 = vpop.permute.xlu0 %1433
      %1435 = vrot.lane.b32.xlu0 %v1111, 104
      %v1436 = vpop.permute.xlu0 %1435
      %1437 = vrot.lane.b32.xlu0 %v1112, 104
      %v1438 = vpop.permute.xlu0 %1437
      %1439 = vrot.lane.b32.xlu0 %v1113, 104
      %v1440 = vpop.permute.xlu0 %1439
      %1441 = vrot.lane.b32.xlu0 %v1114, 104
      %v1442 = vpop.permute.xlu0 %1441
      %1443 = vrot.lane.b32.xlu0 %v1115, 104
      %v1444 = vpop.permute.xlu0 %1443
      %1445 = vrot.lane.b32.xlu0 %v1116, 104
      %v1446 = vpop.permute.xlu0 %1445
      %1447 = vrot.lane.b32.xlu0 %v1117, 104
      %v1448 = vpop.permute.xlu0 %1447
      %1449 = vrot.lane.b32.xlu0 %v1118, 104
      %v1450 = vpop.permute.xlu0 %1449
      %1451 = vrot.lane.b32.xlu0 %v1119, 104
      %v1452 = vpop.permute.xlu0 %1451
      %1453 = vrot.lane.b32.xlu0 %v1120, 104
      %v1454 = vpop.permute.xlu0 %1453
      %1455 = vrot.lane.b32.xlu0 %v1121, 104
      %v1456 = vpop.permute.xlu0 %1455
      %1457 = vrot.lane.b32.xlu0 %v1122, 104
      %v1458 = vpop.permute.xlu0 %1457
      %1459 = vrot.lane.b32.xlu0 %v1123, 104
      %v1460 = vpop.permute.xlu0 %1459
      %1461 = vrot.lane.b32.xlu0 %v1124, 104
      %v1462 = vpop.permute.xlu0 %1461
      %1463 = vrot.lane.b32.xlu0 %v1125, 104
      %v1464 = vpop.permute.xlu0 %1463
      %1465 = vrot.lane.b32.xlu0 %v1126, 104
      %v1466 = vpop.permute.xlu0 %1465
      %1467 = vrot.lane.b32.xlu0 %v1127, 104
      %v1468 = vpop.permute.xlu0 %1467
      %1469 = vrot.lane.b32.xlu0 %v1128, 104
      %v1470 = vpop.permute.xlu0 %1469
      %1471 = vrot.lane.b32.xlu0 %v1129, 104
      %v1472 = vpop.permute.xlu0 %1471
      %1473 = vrot.lane.b32.xlu0 %v1130, 104
      %v1474 = vpop.permute.xlu0 %1473
      %1475 = vrot.lane.b32.xlu0 %v1131, 104
      %v1476 = vpop.permute.xlu0 %1475
      %1477 = vrot.lane.b32.xlu0 %v1132, 104
      %v1478 = vpop.permute.xlu0 %1477
      %1479 = vrot.lane.b32.xlu0 %v1133, 104
      %v1480 = vpop.permute.xlu0 %1479
      %1481 = vrot.lane.b32.xlu0 %v1134, 104
      %v1482 = vpop.permute.xlu0 %1481
      %1483 = vrot.lane.b32.xlu0 %v1135, 104
      %v1484 = vpop.permute.xlu0 %1483
      %1485 = vrot.lane.b32.xlu0 %v1136, 104
      %v1486 = vpop.permute.xlu0 %1485
      %1487 = vrot.lane.b32.xlu0 %v1137, 104
      %v1488 = vpop.permute.xlu0 %1487
      %1489 = vrot.lane.b32.xlu0 %v1138, 104
      %v1490 = vpop.permute.xlu0 %1489
      %v1523 = vadd.f32 %v1395, %v1428
      %v1524 = vadd.f32 %v1396, %v1430
      %v1525 = vadd.f32 %v1397, %v1432
      %v1526 = vadd.f32 %v1398, %v1434
      %v1527 = vadd.f32 %v1399, %v1436
      %v1528 = vadd.f32 %v1400, %v1438
      %v1529 = vadd.f32 %v1401, %v1440
      %v1530 = vadd.f32 %v1402, %v1442
      %v1531 = vadd.f32 %v1403, %v1444
      %v1532 = vadd.f32 %v1404, %v1446
      %v1533 = vadd.f32 %v1405, %v1448
      %v1534 = vadd.f32 %v1406, %v1450
      %v1535 = vadd.f32 %v1407, %v1452
      %v1536 = vadd.f32 %v1408, %v1454
      %v1537 = vadd.f32 %v1409, %v1456
      %v1538 = vadd.f32 %v1410, %v1458
      %v1539 = vadd.f32 %v1411, %v1460
      %v1540 = vadd.f32 %v1412, %v1462
      %v1541 = vadd.f32 %v1413, %v1464
      %v1542 = vadd.f32 %v1414, %v1466
      %v1543 = vadd.f32 %v1415, %v1468
      %v1544 = vadd.f32 %v1416, %v1470
      %v1545 = vadd.f32 %v1417, %v1472
      %v1546 = vadd.f32 %v1418, %v1474
      %v1547 = vadd.f32 %v1419, %v1476
      %v1548 = vadd.f32 %v1420, %v1478
      %v1549 = vadd.f32 %v1421, %v1480
      %v1550 = vadd.f32 %v1422, %v1482
      %v1551 = vadd.f32 %v1423, %v1484
      %v1552 = vadd.f32 %v1424, %v1486
      %v1553 = vadd.f32 %v1425, %v1488
      %v1554 = vadd.f32 %v1426, %v1490
      %v1555 = vld [vmem:[%s349] sm:$0x1]
      %v1557 = vlaneseq
      %v1558 = vshrl.u32 %v1557, 7
      %v1559 = vsub.s32 0, %v1558
      %v1560 = vrot.slane %v1555, %v1559
      %v1562 = vadd.f32 %v1523, %v1560
      %v1563 = vadd.f32 %v1524, %v1560
      %v1564 = vadd.f32 %v1525, %v1560
      %v1565 = vadd.f32 %v1526, %v1560
      %v1566 = vadd.f32 %v1527, %v1560
      %v1567 = vadd.f32 %v1528, %v1560
      %v1568 = vadd.f32 %v1529, %v1560
      %v1569 = vadd.f32 %v1530, %v1560
      %v1570 = vadd.f32 %v1531, %v1560
      %v1571 = vadd.f32 %v1532, %v1560
      %v1572 = vadd.f32 %v1533, %v1560
      %v1573 = vadd.f32 %v1534, %v1560
      %v1574 = vadd.f32 %v1535, %v1560
      %v1575 = vadd.f32 %v1536, %v1560
      %v1576 = vadd.f32 %v1537, %v1560
      %v1577 = vadd.f32 %v1538, %v1560
      %v1578 = vadd.f32 %v1539, %v1560
      %v1579 = vadd.f32 %v1540, %v1560
      %v1580 = vadd.f32 %v1541, %v1560
      %v1581 = vadd.f32 %v1542, %v1560
      %v1582 = vadd.f32 %v1543, %v1560
      %v1583 = vadd.f32 %v1544, %v1560
      %v1584 = vadd.f32 %v1545, %v1560
      %v1585 = vadd.f32 %v1546, %v1560
      %v1586 = vadd.f32 %v1547, %v1560
      %v1587 = vadd.f32 %v1548, %v1560
      %v1588 = vadd.f32 %v1549, %v1560
      %v1589 = vadd.f32 %v1550, %v1560
      %v1590 = vadd.f32 %v1551, %v1560
      %v1591 = vadd.f32 %v1552, %v1560
      %v1592 = vadd.f32 %v1553, %v1560
      %v1593 = vadd.f32 %v1554, %v1560
      %v1594 = vmax.f32 %v1562, 0.0
      %v1595 = vmax.f32 %v1563, 0.0
      %v1596 = vmax.f32 %v1564, 0.0
      %v1597 = vmax.f32 %v1565, 0.0
      %v1598 = vmax.f32 %v1566, 0.0
      %v1599 = vmax.f32 %v1567, 0.0
      %v1600 = vmax.f32 %v1568, 0.0
      %v1601 = vmax.f32 %v1569, 0.0
      %v1602 = vmax.f32 %v1570, 0.0
      %v1603 = vmax.f32 %v1571, 0.0
      %v1604 = vmax.f32 %v1572, 0.0
      %v1605 = vmax.f32 %v1573, 0.0
      %v1606 = vmax.f32 %v1574, 0.0
      %v1607 = vmax.f32 %v1575, 0.0
      %v1608 = vmax.f32 %v1576, 0.0
      %v1609 = vmax.f32 %v1577, 0.0
      %v1610 = vmax.f32 %v1578, 0.0
      %v1611 = vmax.f32 %v1579, 0.0
      %v1612 = vmax.f32 %v1580, 0.0
      %v1613 = vmax.f32 %v1581, 0.0
      %v1614 = vmax.f32 %v1582, 0.0
      %v1615 = vmax.f32 %v1583, 0.0
      %v1616 = vmax.f32 %v1584, 0.0
      %v1617 = vmax.f32 %v1585, 0.0
      %v1618 = vmax.f32 %v1586, 0.0
      %v1619 = vmax.f32 %v1587, 0.0
      %v1620 = vmax.f32 %v1588, 0.0
      %v1621 = vmax.f32 %v1589, 0.0
      %v1622 = vmax.f32 %v1590, 0.0
      %v1623 = vmax.f32 %v1591, 0.0
      %v1624 = vmax.f32 %v1592, 0.0
      %v1625 = vmax.f32 %v1593, 0.0
      %vm1626 = vcmask 64512
      %1627 = vst.msk [vmem:[%s368] sm:$0xff] %vm1626, %v1594
      %1628 = vst.msk [vmem:[%s368 + $0x8] sm:$0xff] %vm1626, %v1595
      %1629 = vst.msk [vmem:[%s368 + $0x10] sm:$0xff] %vm1626, %v1596
      %1630 = vst.msk [vmem:[%s368 + $0x18] sm:$0xff] %vm1626, %v1597
      %1631 = vst.msk [vmem:[%s368 + $0x20] sm:$0xff] %vm1626, %v1598
      %1632 = vst.msk [vmem:[%s368 + $0x28] sm:$0xff] %vm1626, %v1599
      %1633 = vst.msk [vmem:[%s368 + $0x30] sm:$0xff] %vm1626, %v1600
      %1634 = vst.msk [vmem:[%s368 + $0x38] sm:$0xff] %vm1626, %v1601
      %1635 = vst.msk [vmem:[%s368 + $0x40] sm:$0xff] %vm1626, %v1602
      %1636 = vst.msk [vmem:[%s368 + $0x48] sm:$0xff] %vm1626, %v1603
      %1637 = vst.msk [vmem:[%s368 + $0x50] sm:$0xff] %vm1626, %v1604
      %1638 = vst.msk [vmem:[%s368 + $0x58] sm:$0xff] %vm1626, %v1605
      %1639 = vst.msk [vmem:[%s368 + $0x60] sm:$0xff] %vm1626, %v1606
      %1640 = vst.msk [vmem:[%s368 + $0x68] sm:$0xff] %vm1626, %v1607
      %1641 = vst.msk [vmem:[%s368 + $0x70] sm:$0xff] %vm1626, %v1608
      %1642 = vst.msk [vmem:[%s368 + $0x78] sm:$0xff] %vm1626, %v1609
      %1643 = vst.msk [vmem:[%s368 + $0x80] sm:$0xff] %vm1626, %v1610
      %1644 = vst.msk [vmem:[%s368 + $0x88] sm:$0xff] %vm1626, %v1611
      %1645 = vst.msk [vmem:[%s368 + $0x90] sm:$0xff] %vm1626, %v1612
      %1646 = vst.msk [vmem:[%s368 + $0x98] sm:$0xff] %vm1626, %v1613
      %1647 = vst.msk [vmem:[%s368 + $0xa0] sm:$0xff] %vm1626, %v1614
      %1648 = vst.msk [vmem:[%s368 + $0xa8] sm:$0xff] %vm1626, %v1615
      %1649 = vst.msk [vmem:[%s368 + $0xb0] sm:$0xff] %vm1626, %v1616
      %1650 = vst.msk [vmem:[%s368 + $0xb8] sm:$0xff] %vm1626, %v1617
      %1651 = vst.msk [vmem:[%s368 + $0xc0] sm:$0xff] %vm1626, %v1618
      %1652 = vst.msk [vmem:[%s368 + $0xc8] sm:$0xff] %vm1626, %v1619
      %1653 = vst.msk [vmem:[%s368 + $0xd0] sm:$0xff] %vm1626, %v1620
      %1654 = vst.msk [vmem:[%s368 + $0xd8] sm:$0xff] %vm1626, %v1621
      %1655 = vst.msk [vmem:[%s368 + $0xe0] sm:$0xff] %vm1626, %v1622
      %1656 = vst.msk [vmem:[%s368 + $0xe8] sm:$0xff] %vm1626, %v1623
      %1657 = vst.msk [vmem:[%s368 + $0xf0] sm:$0xff] %vm1626, %v1624
      %1658 = vst.msk [vmem:[%s368 + $0xf8] sm:$0xff] %vm1626, %v1625
      %s1659 = smul.u32 32, %s24
      %p1660 = scmp.lt.s32.totalorder %s23, 1
      %s1661 = scalar_select %p1660, %s23, 1
      %p1662 = scmp.lt.s32.totalorder %s1659, 31
      %s1663 = scalar_select %p1662, %s1659, 31
      %s1664 = smul.addr %s1661, 32
      %s1665 = sadd.s32 %s1663, %s1664
      %s1666 = smul.addr %s1665, 4
      %s1667 = scalar_lea.vmem %s6, %s1666
      %s1668 = smul.u32 32, %s24
      %p1669 = scmp.lt.s32.totalorder %s23, 1
      %s1670 = scalar_select %p1669, %s23, 1
      %p1671 = scmp.lt.s32.totalorder %s1668, 31
      %s1672 = scalar_select %p1671, %s1668, 31
      %s1673 = smul.addr %s1670, 32
      %s1674 = sadd.s32 %s1672, %s1673
      %s1675 = smul.addr %s1674, 8
      %s1676 = scalar_lea.vmem %s7, %s1675
      // Predicated region
      $region45: #{one_conv_forward.3} parent=43 // pred_check
        %p1677 = pneg %p194
      $region46: #{one_conv_forward.3} parent=43 // pred_check_branch
        %1679 = sbr.rel (%p1677) target = $region48
      $region47: #{one_conv_forward.3} parent=43 // pred_region
        %s1680 = smul.u32 32, %s24
      $region48: #{one_conv_forward.3} parent=43 // pred_fallthru
        _
      // Predicated region
      $region49: #{one_conv_forward.3} parent=43 // pred_check
        %p1681 = pneg %p222
      $region50: #{one_conv_forward.3} parent=43 // pred_check_branch
        %1683 = sbr.rel (%p1681) target = $region52
      $region51: #{one_conv_forward.3} parent=43 // pred_region
        %s1684 = smul.u32 32, %s24
      $region52: #{one_conv_forward.3} parent=43 // pred_fallthru
        _
    $region44: #{one_conv_forward.3} parent=5 // pred_fallthru
      _
    %p1685 = scmp.le.s32.totalorder 2, %s14
    // Predicated region
    $region53: #{one_conv_forward.3} parent=5 // pred_check
      %p1686 = pneg %p1685
    $region54: #{one_conv_forward.3} parent=5 // pred_check_branch
      %1688 = sbr.rel (%p1686) target = $region56
    $region55: #{one_conv_forward.3} parent=5 // pred_region
      %s1689 = ssub.s32 %s14, 2
      // Predicated region
      $region57: #{one_conv_forward.3} parent=55 // pred_check
        %p1690 = pneg %p200
      $region58: #{one_conv_forward.3} parent=55 // pred_check_branch
        %1692 = sbr.rel (%p1690) target = $region60
      $region59: #{one_conv_forward.3} parent=55 // pred_region
        %s1693 = smul.u32 32, %s26
        %p1694 = scmp.lt.s32.totalorder %s25, 1
        %s1695 = scalar_select %p1694, %s25, 1
        %p1696 = scmp.lt.s32.totalorder %s1693, 31
        %s1697 = scalar_select %p1696, %s1693, 31
        %s1698 = smul.addr %s1695, 32
        %s1699 = sadd.s32 %s1697, %s1698
        %s1700 = smul.addr %s1699, 4
        %s1701 = scalar_lea.vmem %s6, %s1700
      $region60: #{one_conv_forward.3} parent=55 // pred_fallthru
        _
      // Predicated region
      $region61: #{one_conv_forward.3} parent=55 // pred_check
        %p1702 = pneg %p228
      $region62: #{one_conv_forward.3} parent=55 // pred_check_branch
        %1704 = sbr.rel (%p1702) target = $region64
      $region63: #{one_conv_forward.3} parent=55 // pred_region
        %s1705 = smul.u32 32, %s26
        %p1706 = scmp.lt.s32.totalorder %s25, 1
        %s1707 = scalar_select %p1706, %s25, 1
        %p1708 = scmp.lt.s32.totalorder %s1705, 31
        %s1709 = scalar_select %p1708, %s1705, 31
        %s1710 = smul.addr %s1707, 32
        %s1711 = sadd.s32 %s1709, %s1710
        %s1712 = smul.addr %s1711, 8
        %s1713 = scalar_lea.vmem %s7, %s1712
      $region64: #{one_conv_forward.3} parent=55 // pred_fallthru
        _
    $region56: #{one_conv_forward.3} parent=5 // pred_fallthru
      _
  $region6: #{one_conv_forward.3} parent=0 // loop_footer
    %s18 = sadd.s32 1, %s14
  $region7: #{one_conv_forward.3} parent=0 // loop_footer_branch
    %13 = sbr.rel target = $region3
  $region8: #{one_conv_forward.3} parent=0 // loop_exit
    _

// kernel: one_conv_forward.5
$region0: #{one_conv_forward.5}
  #allocation0 [shape = 'u32[]', space=smem, size = 0x4, offset = 0x4, fixed_abs, tag = 'smem constant byte address 0x4 - core index']
  #allocation1 [shape = 'u32[144,128]{1,0:T(1,128)}', space=vmem, size = 0x12000, scoped, tag = 'internal scratch']
  %s0 = inlined_call_operand.vmem [shape: bf16[2,256,72], index: 0, kind: input, shape index: {}]
  %s1 = inlined_call_operand.vmem [shape: bf16[72,32], index: 1, kind: input, shape index: {}]
  %s2 = inlined_call_operand.vmem [shape: f32[2,1,32], index: 2, kind: input, shape index: {}]
  %s3 = inlined_call_operand.vmem [shape: f32[2,1,8], index: 3, kind: input, shape index: {}]
  %s4 = inlined_call_operand.vmem [shape: f32[2,256,8], index: 4, kind: output, shape index: {}]
  %s5 = sld [smem:[#allocation0]]
  $region49: #{one_conv_forward.5} parent=0
    _
  %s7 = ssub.s32 1, %s5
  %s8 = scalar_select 0, %s7, %s5
  loop: start=0, step=1, limit=4
  $region2: #{one_conv_forward.5} parent=0 // loop_pre_header
    _
  $region3: #{one_conv_forward.5} parent=0 // loop_header
    %s10 = sphi 0, %s14
    %p11 = scmp.ge.s32.totalorder %s10, 4
    %s17 = sphi 0, %s29
    %s18 = sphi 0, %s25
    %s19 = sphi 0, %s17
    %s20 = sphi 0, %s18
    %s21 = sphi 0, %s19
    %s22 = sphi 0, %s20
    %s34 = sphi 0, %s36
    %s37 = sphi 0, %s34
    %s38 = sphi 0, %s37
    %s54 = sphi 0, %s38
    %s58 = sphi 0, %s58
    %s60 = sphi 0, %s58
    %s61 = sphi 0, %s60
    %s75 = sphi 0, %s61
    %s81 = sphi 0, %s83
    %s84 = sphi 0, %s81
    %s85 = sphi 0, %s84
    %s101 = sphi 0, %s85
    %s107 = sphi 0, %s109
    %s110 = sphi 0, %s107
    %s111 = sphi 0, %s110
    %s127 = sphi 0, %s111
    %s135 = sphi 0, %s137
    %s138 = sphi 0, %s135
    %s139 = sphi 0, %s138
    %s155 = sphi 0, %s139
  $region4: #{one_conv_forward.5} parent=0 // loop_header_branch
    %13 = sbr.rel (%p11) target = $region8
  $region5: #{one_conv_forward.5} parent=0 // loop_body
    %s15 = ssub.s32 %s10, 1
    %s16 = ssub.s32 %s10, 2
    %s23 = sadd.s32 1, %s18
    %p24 = scmp.ge.s32.totalorder %s23, 1
    %s25 = scalar_select %p24, 0, %s23
    %s26 = sadd.s32 1, %s17
    %s27 = scalar_select %p24, %s26, %s17
    %p28 = scmp.ge.s32.totalorder %s27, 2
    %s29 = scalar_select %p28, 0, %s27
    %s30 = ssub.s32 %s17, %s29
    %s31 = ssub.s32 %s18, %s25
    %s32 = sor.u32 %s30, %s31
    %p33 = scmp.eq.s32.totalorder %s32, 0
    %s35 = sadd.s32 %s34, 1
    %s36 = scalar_select %p33, %s34, %s35
    %p39 = pneg %p33
    %p40 = scmp.eq.s32.totalorder %s10, 1
    %p41 = por %p39, %p40
    %p42 = scmp.ne.s32.totalorder %s34, %s37
    %p43 = scmp.eq.s32.totalorder %s10, 0
    %p44 = por %p42, %p43
    %p45 = scmp.ne.s32.totalorder %s34, %s37
    %p46 = scmp.eq.s32.totalorder %s15, 1
    %p47 = por %p45, %p46
    %p48 = scmp.ne.s32.totalorder %s37, %s38
    %p49 = scmp.eq.s32.totalorder %s15, 0
    %p50 = por %p48, %p49
    %p51 = scmp.ne.s32.totalorder %s37, %s38
    %p52 = scmp.eq.s32.totalorder %s16, 1
    %p53 = por %p51, %p52
    %p55 = scmp.ne.s32.totalorder %s38, %s54
    %p56 = scmp.eq.s32.totalorder %s16, 0
    %p57 = por %p55, %p56
    %s59 = sadd.s32 %s58, 1
    %p62 = scmp.eq.s32.totalorder %s10, 1
    %p63 = scmp.ne.s32.totalorder %s58, %s60
    %p64 = scmp.eq.s32.totalorder %s10, 0
    %p65 = por %p63, %p64
    %p66 = scmp.ne.s32.totalorder %s58, %s60
    %p67 = scmp.eq.s32.totalorder %s15, 1
    %p68 = por %p66, %p67
    %p69 = scmp.ne.s32.totalorder %s60, %s61
    %p70 = scmp.eq.s32.totalorder %s15, 0
    %p71 = por %p69, %p70
    %p72 = scmp.ne.s32.totalorder %s60, %s61
    %p73 = scmp.eq.s32.totalorder %s16, 1
    %p74 = por %p72, %p73
    %p76 = scmp.ne.s32.totalorder %s61, %s75
    %p77 = scmp.eq.s32.totalorder %s16, 0
    %p78 = por %p76, %p77
    %s79 = ssub.s32 %s17, %s29
    %p80 = scmp.eq.s32.totalorder %s79, 0
    %s82 = sadd.s32 %s81, 1
    %s83 = scalar_select %p80, %s81, %s82
    %p86 = pneg %p80
    %p87 = scmp.eq.s32.totalorder %s10, 1
    %p88 = por %p86, %p87
    %p89 = scmp.ne.s32.totalorder %s81, %s84
    %p90 = scmp.eq.s32.totalorder %s10, 0
    %p91 = por %p89, %p90
    %p92 = scmp.ne.s32.totalorder %s81, %s84
    %p93 = scmp.eq.s32.totalorder %s15, 1
    %p94 = por %p92, %p93
    %p95 = scmp.ne.s32.totalorder %s84, %s85
    %p96 = scmp.eq.s32.totalorder %s15, 0
    %p97 = por %p95, %p96
    %p98 = scmp.ne.s32.totalorder %s84, %s85
    %p99 = scmp.eq.s32.totalorder %s16, 1
    %p100 = por %p98, %p99
    %p102 = scmp.ne.s32.totalorder %s85, %s101
    %p103 = scmp.eq.s32.totalorder %s16, 0
    %p104 = por %p102, %p103
    %s105 = ssub.s32 %s17, %s29
    %p106 = scmp.eq.s32.totalorder %s105, 0
    %s108 = sadd.s32 %s107, 1
    %s109 = scalar_select %p106, %s107, %s108
    %p112 = pneg %p106
    %p113 = scmp.eq.s32.totalorder %s10, 1
    %p114 = por %p112, %p113
    %p115 = scmp.ne.s32.totalorder %s107, %s110
    %p116 = scmp.eq.s32.totalorder %s10, 0
    %p117 = por %p115, %p116
    %p118 = scmp.ne.s32.totalorder %s107, %s110
    %p119 = scmp.eq.s32.totalorder %s15, 1
    %p120 = por %p118, %p119
    %p121 = scmp.ne.s32.totalorder %s110, %s111
    %p122 = scmp.eq.s32.totalorder %s15, 0
    %p123 = por %p121, %p122
    %p124 = scmp.ne.s32.totalorder %s110, %s111
    %p125 = scmp.eq.s32.totalorder %s16, 1
    %p126 = por %p124, %p125
    %p128 = scmp.ne.s32.totalorder %s111, %s127
    %p129 = scmp.eq.s32.totalorder %s16, 0
    %p130 = por %p128, %p129
    %s131 = ssub.s32 %s17, %s29
    %s132 = ssub.s32 %s18, %s25
    %s133 = sor.u32 %s131, %s132
    %p134 = scmp.eq.s32.totalorder %s133, 0
    %s136 = sadd.s32 %s135, 1
    %s137 = scalar_select %p134, %s135, %s136
    %p140 = pneg %p134
    %p141 = scmp.eq.s32.totalorder %s10, 1
    %p142 = por %p140, %p141
    %p143 = scmp.ne.s32.totalorder %s135, %s138
    %p144 = scmp.eq.s32.totalorder %s10, 0
    %p145 = por %p143, %p144
    %p146 = scmp.ne.s32.totalorder %s135, %s138
    %p147 = scmp.eq.s32.totalorder %s15, 1
    %p148 = por %p146, %p147
    %p149 = scmp.ne.s32.totalorder %s138, %s139
    %p150 = scmp.eq.s32.totalorder %s15, 0
    %p151 = por %p149, %p150
    %p152 = scmp.ne.s32.totalorder %s138, %s139
    %p153 = scmp.eq.s32.totalorder %s16, 1
    %p154 = por %p152, %p153
    %p156 = scmp.ne.s32.totalorder %s139, %s155
    %p157 = scmp.eq.s32.totalorder %s16, 0
    %p158 = por %p156, %p157
    %p159 = scmp.le.s32.totalorder 1, %s10
    %p160 = scmp.lt.s32.totalorder %s10, 3
    %p161 = pnand %p159, %p160
    %p162 = pneg %p161
    // Predicated region
    $region9: #{one_conv_forward.5} parent=5 // pred_check
      _
    $region10: #{one_conv_forward.5} parent=5 // pred_check_branch
      %164 = sbr.rel (%p161) target = $region12
    $region11: #{one_conv_forward.5} parent=5 // pred_region
      %s165 = ssub.s32 %s10, 1
      // Predicated region
      $region13: #{one_conv_forward.5} parent=11 // pred_check
        %p166 = pneg %p71
      $region14: #{one_conv_forward.5} parent=11 // pred_check_branch
        %168 = sbr.rel (%p166) target = $region16
      $region15: #{one_conv_forward.5} parent=11 // pred_region
        _
      $region16: #{one_conv_forward.5} parent=11 // pred_fallthru
        _
    $region12: #{one_conv_forward.5} parent=5 // pred_fallthru
      _
    %p169 = scmp.lt.s32.totalorder %s10, 2
    // Predicated region
    $region17: #{one_conv_forward.5} parent=5 // pred_check
      %p170 = pneg %p169
    $region18: #{one_conv_forward.5} parent=5 // pred_check_branch
      %172 = sbr.rel (%p170) target = $region20
    $region19: #{one_conv_forward.5} parent=5 // pred_region
      // Predicated region
      $region21: #{one_conv_forward.5} parent=19 // pred_check
        %p173 = pneg %p44
      $region22: #{one_conv_forward.5} parent=19 // pred_check_branch
        %175 = sbr.rel (%p173) target = $region24
      $region23: #{one_conv_forward.5} parent=19 // pred_region
        %s176 = smul.u32 32, %s18
        %p177 = scmp.lt.s32.totalorder %s17, 1
        %s178 = scalar_select %p177, %s17, 1
        %p179 = scmp.lt.s32.totalorder %s176, 31
        %s180 = scalar_select %p179, %s176, 31
        %s181 = smul.addr %s178, 32
        %s182 = sadd.s32 %s180, %s181
        %s183 = smul.addr %s182, 4
        %s184 = scalar_lea.vmem %s0, %s183
        %s185 = smul.u32 32, %s18
      $region24: #{one_conv_forward.5} parent=19 // pred_fallthru
        _
      // Predicated region
      $region25: #{one_conv_forward.5} parent=19 // pred_check
        %p186 = pneg %p91
      $region26: #{one_conv_forward.5} parent=19 // pred_check_branch
        %188 = sbr.rel (%p186) target = $region28
      $region27: #{one_conv_forward.5} parent=19 // pred_region
        %p189 = scmp.lt.s32.totalorder %s17, 1
        %s190 = scalar_select %p189, %s17, 1
        %s191 = scalar_lea.vmem %s2, %s190
      $region28: #{one_conv_forward.5} parent=19 // pred_fallthru
        _
      // Predicated region
      $region29: #{one_conv_forward.5} parent=19 // pred_check
        %p192 = pneg %p117
      $region30: #{one_conv_forward.5} parent=19 // pred_check_branch
        %194 = sbr.rel (%p192) target = $region32
      $region31: #{one_conv_forward.5} parent=19 // pred_region
        %p195 = scmp.lt.s32.totalorder %s17, 1
        %s196 = scalar_select %p195, %s17, 1
        %s197 = scalar_lea.vmem %s3, %s196
      $region32: #{one_conv_forward.5} parent=19 // pred_fallthru
        _
    $region20: #{one_conv_forward.5} parent=5 // pred_fallthru
      _
    %p198 = scmp.le.s32.totalorder 1, %s10
    %p199 = scmp.lt.s32.totalorder %s10, 3
    %p200 = pnand %p198, %p199
    %p201 = pneg %p200
    // Predicated region
    $region33: #{one_conv_forward.5} parent=5 // pred_check
      _
    $region34: #{one_conv_forward.5} parent=5 // pred_check_branch
      %203 = sbr.rel (%p200) target = $region36
    $region35: #{one_conv_forward.5} parent=5 // pred_region
      %s204 = ssub.s32 %s10, 1
      %s205 = smul.u32 32, %s20
      %p206 = scmp.lt.s32.totalorder %s19, 1
      %s207 = scalar_select %p206, %s19, 1
      %p208 = scmp.lt.s32.totalorder %s205, 31
      %s209 = scalar_select %p208, %s205, 31
      %s210 = smul.addr %s207, 32
      %s211 = sadd.s32 %s209, %s210
      %s212 = smul.addr %s211, 4
      %s213 = scalar_lea.vmem %s0, %s212
      %p214 = pneg %p50
      %p215 = pneg %p47
      %p216 = pneg %p71
      %p217 = pneg %p68
      %p218 = scmp.lt.s32.totalorder %s19, 1
      %s219 = scalar_select %p218, %s19, 1
      %s220 = scalar_lea.vmem %s2, %s219
      %p221 = pneg %p97
      %p222 = pneg %p94
      %p223 = scmp.lt.s32.totalorder %s19, 1
      %s224 = scalar_select %p223, %s19, 1
      %s225 = scalar_lea.vmem %s3, %s224
      %p226 = pneg %p123
      %p227 = pneg %p120
      %p228 = pneg %p151
      %p229 = pneg %p148
      %s230 = smul.u32 32, %s20
      %p231 = scmp.lt.s32.totalorder %s19, 1
      %s232 = scalar_select %p231, %s19, 1
      %p233 = scmp.lt.s32.totalorder %s230, 31
      %s234 = scalar_select %p233, %s230, 31
      %s235 = smul.addr %s232, 32
      %s236 = sadd.s32 %s234, %s235
      %s237 = smul.addr %s236, 8
      %s238 = scalar_lea.vmem %s4, %s237
      %s239 = smul.u32 32, %s20
      %p240 = scmp.lt.s32.totalorder %s19, 1
      %s241 = scalar_select %p240, %s19, 1
      %p242 = scmp.lt.s32.totalorder %s239, 31
      %s243 = scalar_select %p242, %s239, 31
      %s244 = smul.addr %s241, 32
      %s245 = sadd.s32 %s243, %s244
      %s246 = smul.addr %s245, 4
      %s247 = scalar_lea.vmem %s0, %s246
      %s248 = smul.u32 32, %s20
      %p249 = scmp.lt.s32.totalorder %s19, 1
      %s250 = scalar_select %p249, %s19, 1
      %s251 = scalar_lea.vmem %s2, %s250
      %p252 = scmp.lt.s32.totalorder %s19, 1
      %s253 = scalar_select %p252, %s19, 1
      %s254 = scalar_lea.vmem %s3, %s253
      %s255 = smul.u32 32, %s20
      %p256 = scmp.lt.s32.totalorder %s19, 1
      %s257 = scalar_select %p256, %s19, 1
      %p258 = scmp.lt.s32.totalorder %s255, 31
      %s259 = scalar_select %p258, %s255, 31
      %s260 = smul.addr %s257, 32
      %s261 = sadd.s32 %s259, %s260
      %s262 = smul.addr %s261, 8
      %s263 = scalar_lea.vmem %s4, %s262
      %s264 = smul.u32 32, %s20
      %v266 = vld [vmem:[%s247] sm:$0xf]
      %v267 = vld [vmem:[%s247 + $0x4] sm:$0xf]
      %v268 = vld [vmem:[%s247 + $0x8] sm:$0xf]
      %v269 = vld [vmem:[%s247 + $0xc] sm:$0xf]
      %v270 = vld [vmem:[%s247 + $0x10] sm:$0xf]
      %v271 = vld [vmem:[%s247 + $0x14] sm:$0xf]
      %v272 = vld [vmem:[%s247 + $0x18] sm:$0xf]
      %v273 = vld [vmem:[%s247 + $0x1c] sm:$0xf]
      %v274 = vld [vmem:[%s247 + $0x20] sm:$0xf]
      %v275 = vld [vmem:[%s247 + $0x24] sm:$0xf]
      %v276 = vld [vmem:[%s247 + $0x28] sm:$0xf]
      %v277 = vld [vmem:[%s247 + $0x2c] sm:$0xf]
      %v278 = vld [vmem:[%s247 + $0x30] sm:$0xf]
      %v279 = vld [vmem:[%s247 + $0x34] sm:$0xf]
      %v280 = vld [vmem:[%s247 + $0x38] sm:$0xf]
      %v281 = vld [vmem:[%s247 + $0x3c] sm:$0xf]
      %v282 = vld [vmem:[%s247 + $0x40] sm:$0xf]
      %v283 = vld [vmem:[%s247 + $0x44] sm:$0xf]
      %v284 = vld [vmem:[%s247 + $0x48] sm:$0xf]
      %v285 = vld [vmem:[%s247 + $0x4c] sm:$0xf]
      %v286 = vld [vmem:[%s247 + $0x50] sm:$0xf]
      %v287 = vld [vmem:[%s247 + $0x54] sm:$0xf]
      %v288 = vld [vmem:[%s247 + $0x58] sm:$0xf]
      %v289 = vld [vmem:[%s247 + $0x5c] sm:$0xf]
      %v290 = vld [vmem:[%s247 + $0x60] sm:$0xf]
      %v291 = vld [vmem:[%s247 + $0x64] sm:$0xf]
      %v292 = vld [vmem:[%s247 + $0x68] sm:$0xf]
      %v293 = vld [vmem:[%s247 + $0x6c] sm:$0xf]
      %v294 = vld [vmem:[%s247 + $0x70] sm:$0xf]
      %v295 = vld [vmem:[%s247 + $0x74] sm:$0xf]
      %v296 = vld [vmem:[%s247 + $0x78] sm:$0xf]
      %v297 = vld [vmem:[%s247 + $0x7c] sm:$0xf]
      %v298 = vld [vmem:[%s1] sm:$0xf]
      %v299 = vld [vmem:[%s1 + $0x4] sm:$0xf]
      %v300 = vld [vmem:[%s1 + $0x8] sm:$0xf]
      %v301 = vld [vmem:[%s1 + $0xc] sm:$0xf]
      %v302 = vld [vmem:[%s1 + $0x10] sm:$0xf]
      %v303 = vld [vmem:[%s1 + $0x14] sm:$0xf]
      %v304 = vld [vmem:[%s1 + $0x18] sm:$0xf]
      %v305 = vld [vmem:[%s1 + $0x1c] sm:$0xf]
      %v306 = vld [vmem:[%s1 + $0x20] sm:$0xf]
      %v339 = vunpack.c.l.b16 %v266
      %v340 = vunpack.c.l.b16 %v267
      %v341 = vunpack.c.l.b16 %v268
      %v342 = vunpack.c.l.b16 %v269
      %v343 = vunpack.c.l.b16 %v270
      %v344 = vunpack.c.l.b16 %v271
      %v345 = vunpack.c.l.b16 %v272
      %v346 = vunpack.c.l.b16 %v273
      %v347 = vunpack.c.l.b16 %v274
      %v348 = vunpack.c.l.b16 %v275
      %v349 = vunpack.c.l.b16 %v276
      %v350 = vunpack.c.l.b16 %v277
      %v351 = vunpack.c.l.b16 %v278
      %v352 = vunpack.c.l.b16 %v279
      %v353 = vunpack.c.l.b16 %v280
      %v354 = vunpack.c.l.b16 %v281
      %v355 = vunpack.c.l.b16 %v282
      %v356 = vunpack.c.l.b16 %v283
      %v357 = vunpack.c.l.b16 %v284
      %v358 = vunpack.c.l.b16 %v285
      %v359 = vunpack.c.l.b16 %v286
      %v360 = vunpack.c.l.b16 %v287
      %v361 = vunpack.c.l.b16 %v288
      %v362 = vunpack.c.l.b16 %v289
      %v363 = vunpack.c.l.b16 %v290
      %v364 = vunpack.c.l.b16 %v291
      %v365 = vunpack.c.l.b16 %v292
      %v366 = vunpack.c.l.b16 %v293
      %v367 = vunpack.c.l.b16 %v294
      %v368 = vunpack.c.l.b16 %v295
      %v369 = vunpack.c.l.b16 %v296
      %v370 = vunpack.c.l.b16 %v297
      %v371 = vpack.c.b16 %v340, %v339
      %v372 = vpack.c.b16 %v342, %v341
      %v373 = vpack.c.b16 %v344, %v343
      %v374 = vpack.c.b16 %v346, %v345
      %v375 = vpack.c.b16 %v348, %v347
      %v376 = vpack.c.b16 %v350, %v349
      %v377 = vpack.c.b16 %v352, %v351
      %v378 = vpack.c.b16 %v354, %v353
      %v379 = vpack.c.b16 %v356, %v355
      %v380 = vpack.c.b16 %v358, %v357
      %v381 = vpack.c.b16 %v360, %v359
      %v382 = vpack.c.b16 %v362, %v361
      %v383 = vpack.c.b16 %v364, %v363
      %v384 = vpack.c.b16 %v366, %v365
      %v385 = vpack.c.b16 %v368, %v367
      %v386 = vpack.c.b16 %v370, %v369
      %v396 = vunpack.c.l.b16 %v298
      %v397 = vunpack.c.l.b16 %v299
      %v398 = vunpack.c.l.b16 %v300
      %v399 = vunpack.c.l.b16 %v301
      %v400 = vunpack.c.l.b16 %v302
      %v401 = vunpack.c.l.b16 %v303
      %v402 = vunpack.c.l.b16 %v304
      %v403 = vunpack.c.l.b16 %v305
      %v404 = vunpack.c.l.b16 %v306
      %v405 = vpack.c.b16 %v397, %v396
      %v406 = vpack.c.b16 %v399, %v398
      %v407 = vpack.c.b16 %v401, %v400
      %v408 = vpack.c.b16 %v403, %v402
      %v409 = vpack.c.b16 %v404, %v404
      %vm414 = vcmask 588800
      %v416 = vsel %vm414, %v371, 0
      %v419 = vsel %vm414, %v372, 0
      %v422 = vsel %vm414, %v373, 0
      %v425 = vsel %vm414, %v374, 0
      %v428 = vsel %vm414, %v375, 0
      %v431 = vsel %vm414, %v376, 0
      %v434 = vsel %vm414, %v377, 0
      %v437 = vsel %vm414, %v378, 0
      %v440 = vsel %vm414, %v379, 0
      %v443 = vsel %vm414, %v380, 0
      %v446 = vsel %vm414, %v381, 0
      %v449 = vsel %vm414, %v382, 0
      %v452 = vsel %vm414, %v383, 0
      %v455 = vsel %vm414, %v384, 0
      %v458 = vsel %vm414, %v385, 0
      %v461 = vsel %vm414, %v386, 0
      %vm463 = vcmask 1043456
      %v465 = vsel %vm463, %v409, 0
      %467 = vmatprep.subr.bf16.mxu0 0
      %468 = vmatpush1.bf16.msra.mxu0 %v405
      %469 = vmatprep.subr.bf16.mxu0 0
      %470 = vmatpush1.bf16.msra.mxu0 %v406
      %471 = vmatprep.subr.bf16.mxu0 0
      %472 = vmatpush1.bf16.msra.mxu0 %v407
      %473 = vmatprep.subr.bf16.mxu0 0
      %474 = vmatpush1.bf16.msra.mxu0 %v408
      %475 = vmatprep.subr.bf16.mxu0 0
      %476 = vmatpush1.bf16.msra.mxu0 %v465
      %477 = vmatprep.subr.bf16.mxu0 0
      %478 = vmatpush1.bf16.msra.mxu0 0
      %479 = vmatprep.subr.bf16.mxu0 0
      %480 = vmatpush1.bf16.msra.mxu0 0
      %481 = vmatprep.subr.bf16.mxu0 0
      %482 = vmatpush1.bf16.msra.mxu0 0
      %483 = vmatprep.subr.bf16.mxu0 0
      %484 = vmatpush1.bf16.msra.mxu0 0
      %485 = vmatprep.subr.bf16.mxu0 0
      %486 = vmatpush1.bf16.msra.mxu0 0
      %487 = vmatprep.subr.bf16.mxu0 0
      %488 = vmatpush1.bf16.msra.mxu0 0
      %489 = vmatprep.subr.bf16.mxu0 0
      %490 = vmatpush1.bf16.msra.mxu0 0
      %491 = vmatprep.subr.bf16.mxu0 0
      %492 = vmatpush1.bf16.msra.mxu0 0
      %493 = vmatprep.subr.bf16.mxu0 0
      %494 = vmatpush1.bf16.msra.mxu0 0
      %495 = vmatprep.subr.bf16.mxu0 0
      %496 = vmatpush1.bf16.msra.mxu0 0
      %497 = vmatprep.subr.bf16.mxu0 0
      %498 = vmatpush1.bf16.msra.mxu0 0
      %499 = vmatprep.mubr.bf16.mxu0 0
      %500 = vmatmul.mubr.bf16.gmra.mrb[0].mxu0 %v416
      %v501 = vpop.f32.mrb[0].mxu0
      %v502 = vadd.f32 0.0, %v501
      %v503 = vpop.f32.mrb[0].mxu0
      %v504 = vpop.f32.mrb[0].mxu0
      %v505 = vadd.f32 0.0, %v504
      %v506 = vpop.f32.mrb[0].mxu0
      %507 = vmatprep.mubr.bf16.mxu0 0
      %508 = vmatmul.mubr.bf16.gmra.mrb[0].mxu0 %v419
      %v509 = vpop.f32.mrb[0].mxu0
      %v510 = vadd.f32 0.0, %v509
      %v511 = vpop.f32.mrb[0].mxu0
      %v512 = vpop.f32.mrb[0].mxu0
      %v513 = vadd.f32 0.0, %v512
      %v514 = vpop.f32.mrb[0].mxu0
      %515 = vmatprep.mubr.bf16.mxu0 0
      %516 = vmatmul.mubr.bf16.gmra.mrb[0].mxu0 %v422
      %v517 = vpop.f32.mrb[0].mxu0
      %v518 = vadd.f32 0.0, %v517
      %v519 = vpop.f32.mrb[0].mxu0
      %v520 = vpop.f32.mrb[0].mxu0
      %v521 = vadd.f32 0.0, %v520
      %v522 = vpop.f32.mrb[0].mxu0
      %523 = vmatprep.mubr.bf16.mxu0 0
      %524 = vmatmul.mubr.bf16.gmra.mrb[0].mxu0 %v425
      %v525 = vpop.f32.mrb[0].mxu0
      %v526 = vadd.f32 0.0, %v525
      %v527 = vpop.f32.mrb[0].mxu0
      %v528 = vpop.f32.mrb[0].mxu0
      %v529 = vadd.f32 0.0, %v528
      %v530 = vpop.f32.mrb[0].mxu0
      %531 = vmatprep.mubr.bf16.mxu0 0
      %532 = vmatmul.mubr.bf16.gmra.mrb[0].mxu0 %v428
      %v533 = vpop.f32.mrb[0].mxu0
      %v534 = vadd.f32 0.0, %v533
      %v535 = vpop.f32.mrb[0].mxu0
      %v536 = vpop.f32.mrb[0].mxu0
      %v537 = vadd.f32 0.0, %v536
      %v538 = vpop.f32.mrb[0].mxu0
      %539 = vmatprep.mubr.bf16.mxu0 0
      %540 = vmatmul.mubr.bf16.gmra.mrb[0].mxu0 %v431
      %v541 = vpop.f32.mrb[0].mxu0
      %v542 = vadd.f32 0.0, %v541
      %v543 = vpop.f32.mrb[0].mxu0
      %v544 = vpop.f32.mrb[0].mxu0
      %v545 = vadd.f32 0.0, %v544
      %v546 = vpop.f32.mrb[0].mxu0
      %547 = vmatprep.mubr.bf16.mxu0 0
      %548 = vmatmul.mubr.bf16.gmra.mrb[0].mxu0 %v434
      %v549 = vpop.f32.mrb[0].mxu0
      %v550 = vadd.f32 0.0, %v549
      %v551 = vpop.f32.mrb[0].mxu0
      %v552 = vpop.f32.mrb[0].mxu0
      %v553 = vadd.f32 0.0, %v552
      %v554 = vpop.f32.mrb[0].mxu0
      %555 = vmatprep.mubr.bf16.mxu0 0
      %556 = vmatmul.mubr.bf16.gmra.mrb[0].mxu0 %v437
      %v557 = vpop.f32.mrb[0].mxu0
      %v558 = vadd.f32 0.0, %v557
      %v559 = vpop.f32.mrb[0].mxu0
      %v560 = vpop.f32.mrb[0].mxu0
      %v561 = vadd.f32 0.0, %v560
      %v562 = vpop.f32.mrb[0].mxu0
      %563 = vmatprep.mubr.bf16.mxu0 0
      %564 = vmatmul.mubr.bf16.gmra.mrb[0].mxu0 %v440
      %v565 = vpop.f32.mrb[0].mxu0
      %v566 = vadd.f32 0.0, %v565
      %v567 = vpop.f32.mrb[0].mxu0
      %v568 = vpop.f32.mrb[0].mxu0
      %v569 = vadd.f32 0.0, %v568
      %v570 = vpop.f32.mrb[0].mxu0
      %571 = vmatprep.mubr.bf16.mxu0 0
      %572 = vmatmul.mubr.bf16.gmra.mrb[0].mxu0 %v443
      %v573 = vpop.f32.mrb[0].mxu0
      %v574 = vadd.f32 0.0, %v573
      %v575 = vpop.f32.mrb[0].mxu0
      %v576 = vpop.f32.mrb[0].mxu0
      %v577 = vadd.f32 0.0, %v576
      %v578 = vpop.f32.mrb[0].mxu0
      %579 = vmatprep.mubr.bf16.mxu0 0
      %580 = vmatmul.mubr.bf16.gmra.mrb[0].mxu0 %v446
      %v581 = vpop.f32.mrb[0].mxu0
      %v582 = vadd.f32 0.0, %v581
      %v583 = vpop.f32.mrb[0].mxu0
      %v584 = vpop.f32.mrb[0].mxu0
      %v585 = vadd.f32 0.0, %v584
      %v586 = vpop.f32.mrb[0].mxu0
      %587 = vmatprep.mubr.bf16.mxu0 0
      %588 = vmatmul.mubr.bf16.gmra.mrb[0].mxu0 %v449
      %v589 = vpop.f32.mrb[0].mxu0
      %v590 = vadd.f32 0.0, %v589
      %v591 = vpop.f32.mrb[0].mxu0
      %v592 = vpop.f32.mrb[0].mxu0
      %v593 = vadd.f32 0.0, %v592
      %v594 = vpop.f32.mrb[0].mxu0
      %595 = vmatprep.mubr.bf16.mxu0 0
      %596 = vmatmul.mubr.bf16.gmra.mrb[0].mxu0 %v452
      %v597 = vpop.f32.mrb[0].mxu0
      %v598 = vadd.f32 0.0, %v597
      %v599 = vpop.f32.mrb[0].mxu0
      %v600 = vpop.f32.mrb[0].mxu0
      %v601 = vadd.f32 0.0, %v600
      %v602 = vpop.f32.mrb[0].mxu0
      %603 = vmatprep.mubr.bf16.mxu0 0
      %604 = vmatmul.mubr.bf16.gmra.mrb[0].mxu0 %v455
      %v605 = vpop.f32.mrb[0].mxu0
      %v606 = vadd.f32 0.0, %v605
      %v607 = vpop.f32.mrb[0].mxu0
      %v608 = vpop.f32.mrb[0].mxu0
      %v609 = vadd.f32 0.0, %v608
      %v610 = vpop.f32.mrb[0].mxu0
      %611 = vmatprep.mubr.bf16.mxu0 0
      %612 = vmatmul.mubr.bf16.gmra.mrb[0].mxu0 %v458
      %v613 = vpop.f32.mrb[0].mxu0
      %v614 = vadd.f32 0.0, %v613
      %v615 = vpop.f32.mrb[0].mxu0
      %v616 = vpop.f32.mrb[0].mxu0
      %v617 = vadd.f32 0.0, %v616
      %v618 = vpop.f32.mrb[0].mxu0
      %619 = vmatprep.mubr.bf16.mxu0 0
      %620 = vmatmul.mubr.bf16.gmra.mrb[0].mxu0 %v461
      %v621 = vpop.f32.mrb[0].mxu0
      %v622 = vadd.f32 0.0, %v621
      %v623 = vpop.f32.mrb[0].mxu0
      %v624 = vpop.f32.mrb[0].mxu0
      %v625 = vadd.f32 0.0, %v624
      %v626 = vpop.f32.mrb[0].mxu0
      %627 = vdwg.mxu0
      %v628 = vld [vmem:[%s251] sm:$0x1]
      %v630 = vlaneseq
      %v631 = vshrl.u32 %v630, 7
      %v632 = vsub.s32 0, %v631
      %v633 = vrot.slane %v628, %v632
      %v635 = vmul.f32 %v502, %v633
      %v636 = vmul.f32 %v505, %v633
      %v637 = vmul.f32 %v510, %v633
      %v638 = vmul.f32 %v513, %v633
      %v639 = vmul.f32 %v518, %v633
      %v640 = vmul.f32 %v521, %v633
      %v641 = vmul.f32 %v526, %v633
      %v642 = vmul.f32 %v529, %v633
      %v643 = vmul.f32 %v534, %v633
      %v644 = vmul.f32 %v537, %v633
      %v645 = vmul.f32 %v542, %v633
      %v646 = vmul.f32 %v545, %v633
      %v647 = vmul.f32 %v550, %v633
      %v648 = vmul.f32 %v553, %v633
      %v649 = vmul.f32 %v558, %v633
      %v650 = vmul.f32 %v561, %v633
      %v651 = vmul.f32 %v566, %v633
      %v652 = vmul.f32 %v569, %v633
      %v653 = vmul.f32 %v574, %v633
      %v654 = vmul.f32 %v577, %v633
      %v655 = vmul.f32 %v582, %v633
      %v656 = vmul.f32 %v585, %v633
      %v657 = vmul.f32 %v590, %v633
      %v658 = vmul.f32 %v593, %v633
      %v659 = vmul.f32 %v598, %v633
      %v660 = vmul.f32 %v601, %v633
      %v661 = vmul.f32 %v606, %v633
      %v662 = vmul.f32 %v609, %v633
      %v663 = vmul.f32 %v614, %v633
      %v664 = vmul.f32 %v617, %v633
      %v665 = vmul.f32 %v622, %v633
      %v666 = vmul.f32 %v625, %v633
      %699 = vrot.lane.b32.xlu0 %v635, 120
      %v700 = vpop.permute.xlu0 %699
      %701 = vrot.lane.b32.xlu0 %v636, 120
      %v702 = vpop.permute.xlu0 %701
      %703 = vrot.lane.b32.xlu0 %v637, 120
      %v704 = vpop.permute.xlu0 %703
      %705 = vrot.lane.b32.xlu0 %v638, 120
      %v706 = vpop.permute.xlu0 %705
      %707 = vrot.lane.b32.xlu0 %v639, 120
      %v708 = vpop.permute.xlu0 %707
      %709 = vrot.lane.b32.xlu0 %v640, 120
      %v710 = vpop.permute.xlu0 %709
      %711 = vrot.lane.b32.xlu0 %v641, 120
      %v712 = vpop.permute.xlu0 %711
      %713 = vrot.lane.b32.xlu0 %v642, 120
      %v714 = vpop.permute.xlu0 %713
      %715 = vrot.lane.b32.xlu0 %v643, 120
      %v716 = vpop.permute.xlu0 %715
      %717 = vrot.lane.b32.xlu0 %v644, 120
      %v718 = vpop.permute.xlu0 %717
      %719 = vrot.lane.b32.xlu0 %v645, 120
      %v720 = vpop.permute.xlu0 %719
      %721 = vrot.lane.b32.xlu0 %v646, 120
      %v722 = vpop.permute.xlu0 %721
      %723 = vrot.lane.b32.xlu0 %v647, 120
      %v724 = vpop.permute.xlu0 %723
      %725 = vrot.lane.b32.xlu0 %v648, 120
      %v726 = vpop.permute.xlu0 %725
      %727 = vrot.lane.b32.xlu0 %v649, 120
      %v728 = vpop.permute.xlu0 %727
      %729 = vrot.lane.b32.xlu0 %v650, 120
      %v730 = vpop.permute.xlu0 %729
      %731 = vrot.lane.b32.xlu0 %v651, 120
      %v732 = vpop.permute.xlu0 %731
      %733 = vrot.lane.b32.xlu0 %v652, 120
      %v734 = vpop.permute.xlu0 %733
      %735 = vrot.lane.b32.xlu0 %v653, 120
      %v736 = vpop.permute.xlu0 %735
      %737 = vrot.lane.b32.xlu0 %v654, 120
      %v738 = vpop.permute.xlu0 %737
      %739 = vrot.lane.b32.xlu0 %v655, 120
      %v740 = vpop.permute.xlu0 %739
      %741 = vrot.lane.b32.xlu0 %v656, 120
      %v742 = vpop.permute.xlu0 %741
      %743 = vrot.lane.b32.xlu0 %v657, 120
      %v744 = vpop.permute.xlu0 %743
      %745 = vrot.lane.b32.xlu0 %v658, 120
      %v746 = vpop.permute.xlu0 %745
      %747 = vrot.lane.b32.xlu0 %v659, 120
      %v748 = vpop.permute.xlu0 %747
      %749 = vrot.lane.b32.xlu0 %v660, 120
      %v750 = vpop.permute.xlu0 %749
      %751 = vrot.lane.b32.xlu0 %v661, 120
      %v752 = vpop.permute.xlu0 %751
      %753 = vrot.lane.b32.xlu0 %v662, 120
      %v754 = vpop.permute.xlu0 %753
      %755 = vrot.lane.b32.xlu0 %v663, 120
      %v756 = vpop.permute.xlu0 %755
      %757 = vrot.lane.b32.xlu0 %v664, 120
      %v758 = vpop.permute.xlu0 %757
      %759 = vrot.lane.b32.xlu0 %v665, 120
      %v760 = vpop.permute.xlu0 %759
      %761 = vrot.lane.b32.xlu0 %v666, 120
      %v762 = vpop.permute.xlu0 %761
      %v795 = vadd.f32 %v635, %v700
      %v796 = vadd.f32 %v636, %v702
      %v797 = vadd.f32 %v637, %v704
      %v798 = vadd.f32 %v638, %v706
      %v799 = vadd.f32 %v639, %v708
      %v800 = vadd.f32 %v640, %v710
      %v801 = vadd.f32 %v641, %v712
      %v802 = vadd.f32 %v642, %v714
      %v803 = vadd.f32 %v643, %v716
      %v804 = vadd.f32 %v644, %v718
      %v805 = vadd.f32 %v645, %v720
      %v806 = vadd.f32 %v646, %v722
      %v807 = vadd.f32 %v647, %v724
      %v808 = vadd.f32 %v648, %v726
      %v809 = vadd.f32 %v649, %v728
      %v810 = vadd.f32 %v650, %v730
      %v811 = vadd.f32 %v651, %v732
      %v812 = vadd.f32 %v652, %v734
      %v813 = vadd.f32 %v653, %v736
      %v814 = vadd.f32 %v654, %v738
      %v815 = vadd.f32 %v655, %v740
      %v816 = vadd.f32 %v656, %v742
      %v817 = vadd.f32 %v657, %v744
      %v818 = vadd.f32 %v658, %v746
      %v819 = vadd.f32 %v659, %v748
      %v820 = vadd.f32 %v660, %v750
      %v821 = vadd.f32 %v661, %v752
      %v822 = vadd.f32 %v662, %v754
      %v823 = vadd.f32 %v663, %v756
      %v824 = vadd.f32 %v664, %v758
      %v825 = vadd.f32 %v665, %v760
      %v826 = vadd.f32 %v666, %v762
      %827 = vrot.lane.b32.xlu0 %v635, 112
      %v828 = vpop.permute.xlu0 %827
      %829 = vrot.lane.b32.xlu0 %v636, 112
      %v830 = vpop.permute.xlu0 %829
      %831 = vrot.lane.b32.xlu0 %v637, 112
      %v832 = vpop.permute.xlu0 %831
      %833 = vrot.lane.b32.xlu0 %v638, 112
      %v834 = vpop.permute.xlu0 %833
      %835 = vrot.lane.b32.xlu0 %v639, 112
      %v836 = vpop.permute.xlu0 %835
      %837 = vrot.lane.b32.xlu0 %v640, 112
      %v838 = vpop.permute.xlu0 %837
      %839 = vrot.lane.b32.xlu0 %v641, 112
      %v840 = vpop.permute.xlu0 %839
      %841 = vrot.lane.b32.xlu0 %v642, 112
      %v842 = vpop.permute.xlu0 %841
      %843 = vrot.lane.b32.xlu0 %v643, 112
      %v844 = vpop.permute.xlu0 %843
      %845 = vrot.lane.b32.xlu0 %v644, 112
      %v846 = vpop.permute.xlu0 %845
      %847 = vrot.lane.b32.xlu0 %v645, 112
      %v848 = vpop.permute.xlu0 %847
      %849 = vrot.lane.b32.xlu0 %v646, 112
      %v850 = vpop.permute.xlu0 %849
      %851 = vrot.lane.b32.xlu0 %v647, 112
      %v852 = vpop.permute.xlu0 %851
      %853 = vrot.lane.b32.xlu0 %v648, 112
      %v854 = vpop.permute.xlu0 %853
      %855 = vrot.lane.b32.xlu0 %v649, 112
      %v856 = vpop.permute.xlu0 %855
      %857 = vrot.lane.b32.xlu0 %v650, 112
      %v858 = vpop.permute.xlu0 %857
      %859 = vrot.lane.b32.xlu0 %v651, 112
      %v860 = vpop.permute.xlu0 %859
      %861 = vrot.lane.b32.xlu0 %v652, 112
      %v862 = vpop.permute.xlu0 %861
      %863 = vrot.lane.b32.xlu0 %v653, 112
      %v864 = vpop.permute.xlu0 %863
      %865 = vrot.lane.b32.xlu0 %v654, 112
      %v866 = vpop.permute.xlu0 %865
      %867 = vrot.lane.b32.xlu0 %v655, 112
      %v868 = vpop.permute.xlu0 %867
      %869 = vrot.lane.b32.xlu0 %v656, 112
      %v870 = vpop.permute.xlu0 %869
      %871 = vrot.lane.b32.xlu0 %v657, 112
      %v872 = vpop.permute.xlu0 %871
      %873 = vrot.lane.b32.xlu0 %v658, 112
      %v874 = vpop.permute.xlu0 %873
      %875 = vrot.lane.b32.xlu0 %v659, 112
      %v876 = vpop.permute.xlu0 %875
      %877 = vrot.lane.b32.xlu0 %v660, 112
      %v878 = vpop.permute.xlu0 %877
      %879 = vrot.lane.b32.xlu0 %v661, 112
      %v880 = vpop.permute.xlu0 %879
      %881 = vrot.lane.b32.xlu0 %v662, 112
      %v882 = vpop.permute.xlu0 %881
      %883 = vrot.lane.b32.xlu0 %v663, 112
      %v884 = vpop.permute.xlu0 %883
      %885 = vrot.lane.b32.xlu0 %v664, 112
      %v886 = vpop.permute.xlu0 %885
      %887 = vrot.lane.b32.xlu0 %v665, 112
      %v888 = vpop.permute.xlu0 %887
      %889 = vrot.lane.b32.xlu0 %v666, 112
      %v890 = vpop.permute.xlu0 %889
      %v923 = vadd.f32 %v795, %v828
      %v924 = vadd.f32 %v796, %v830
      %v925 = vadd.f32 %v797, %v832
      %v926 = vadd.f32 %v798, %v834
      %v927 = vadd.f32 %v799, %v836
      %v928 = vadd.f32 %v800, %v838
      %v929 = vadd.f32 %v801, %v840
      %v930 = vadd.f32 %v802, %v842
      %v931 = vadd.f32 %v803, %v844
      %v932 = vadd.f32 %v804, %v846
      %v933 = vadd.f32 %v805, %v848
      %v934 = vadd.f32 %v806, %v850
      %v935 = vadd.f32 %v807, %v852
      %v936 = vadd.f32 %v808, %v854
      %v937 = vadd.f32 %v809, %v856
      %v938 = vadd.f32 %v810, %v858
      %v939 = vadd.f32 %v811, %v860
      %v940 = vadd.f32 %v812, %v862
      %v941 = vadd.f32 %v813, %v864
      %v942 = vadd.f32 %v814, %v866
      %v943 = vadd.f32 %v815, %v868
      %v944 = vadd.f32 %v816, %v870
      %v945 = vadd.f32 %v817, %v872
      %v946 = vadd.f32 %v818, %v874
      %v947 = vadd.f32 %v819, %v876
      %v948 = vadd.f32 %v820, %v878
      %v949 = vadd.f32 %v821, %v880
      %v950 = vadd.f32 %v822, %v882
      %v951 = vadd.f32 %v823, %v884
      %v952 = vadd.f32 %v824, %v886
      %v953 = vadd.f32 %v825, %v888
      %v954 = vadd.f32 %v826, %v890
      %955 = vrot.lane.b32.xlu0 %v635, 104
      %v956 = vpop.permute.xlu0 %955
      %957 = vrot.lane.b32.xlu0 %v636, 104
      %v958 = vpop.permute.xlu0 %957
      %959 = vrot.lane.b32.xlu0 %v637, 104
      %v960 = vpop.permute.xlu0 %959
      %961 = vrot.lane.b32.xlu0 %v638, 104
      %v962 = vpop.permute.xlu0 %961
      %963 = vrot.lane.b32.xlu0 %v639, 104
      %v964 = vpop.permute.xlu0 %963
      %965 = vrot.lane.b32.xlu0 %v640, 104
      %v966 = vpop.permute.xlu0 %965
      %967 = vrot.lane.b32.xlu0 %v641, 104
      %v968 = vpop.permute.xlu0 %967
      %969 = vrot.lane.b32.xlu0 %v642, 104
      %v970 = vpop.permute.xlu0 %969
      %971 = vrot.lane.b32.xlu0 %v643, 104
      %v972 = vpop.permute.xlu0 %971
      %973 = vrot.lane.b32.xlu0 %v644, 104
      %v974 = vpop.permute.xlu0 %973
      %975 = vrot.lane.b32.xlu0 %v645, 104
      %v976 = vpop.permute.xlu0 %975
      %977 = vrot.lane.b32.xlu0 %v646, 104
      %v978 = vpop.permute.xlu0 %977
      %979 = vrot.lane.b32.xlu0 %v647, 104
      %v980 = vpop.permute.xlu0 %979
      %981 = vrot.lane.b32.xlu0 %v648, 104
      %v982 = vpop.permute.xlu0 %981
      %983 = vrot.lane.b32.xlu0 %v649, 104
      %v984 = vpop.permute.xlu0 %983
      %985 = vrot.lane.b32.xlu0 %v650, 104
      %v986 = vpop.permute.xlu0 %985
      %987 = vrot.lane.b32.xlu0 %v651, 104
      %v988 = vpop.permute.xlu0 %987
      %989 = vrot.lane.b32.xlu0 %v652, 104
      %v990 = vpop.permute.xlu0 %989
      %991 = vrot.lane.b32.xlu0 %v653, 104
      %v992 = vpop.permute.xlu0 %991
      %993 = vrot.lane.b32.xlu0 %v654, 104
      %v994 = vpop.permute.xlu0 %993
      %995 = vrot.lane.b32.xlu0 %v655, 104
      %v996 = vpop.permute.xlu0 %995
      %997 = vrot.lane.b32.xlu0 %v656, 104
      %v998 = vpop.permute.xlu0 %997
      %999 = vrot.lane.b32.xlu0 %v657, 104
      %v1000 = vpop.permute.xlu0 %999
      %1001 = vrot.lane.b32.xlu0 %v658, 104
      %v1002 = vpop.permute.xlu0 %1001
      %1003 = vrot.lane.b32.xlu0 %v659, 104
      %v1004 = vpop.permute.xlu0 %1003
      %1005 = vrot.lane.b32.xlu0 %v660, 104
      %v1006 = vpop.permute.xlu0 %1005
      %1007 = vrot.lane.b32.xlu0 %v661, 104
      %v1008 = vpop.permute.xlu0 %1007
      %1009 = vrot.lane.b32.xlu0 %v662, 104
      %v1010 = vpop.permute.xlu0 %1009
      %1011 = vrot.lane.b32.xlu0 %v663, 104
      %v1012 = vpop.permute.xlu0 %1011
      %1013 = vrot.lane.b32.xlu0 %v664, 104
      %v1014 = vpop.permute.xlu0 %1013
      %1015 = vrot.lane.b32.xlu0 %v665, 104
      %v1016 = vpop.permute.xlu0 %1015
      %1017 = vrot.lane.b32.xlu0 %v666, 104
      %v1018 = vpop.permute.xlu0 %1017
      %v1051 = vadd.f32 %v923, %v956
      %v1052 = vadd.f32 %v924, %v958
      %v1053 = vadd.f32 %v925, %v960
      %v1054 = vadd.f32 %v926, %v962
      %v1055 = vadd.f32 %v927, %v964
      %v1056 = vadd.f32 %v928, %v966
      %v1057 = vadd.f32 %v929, %v968
      %v1058 = vadd.f32 %v930, %v970
      %v1059 = vadd.f32 %v931, %v972
      %v1060 = vadd.f32 %v932, %v974
      %v1061 = vadd.f32 %v933, %v976
      %v1062 = vadd.f32 %v934, %v978
      %v1063 = vadd.f32 %v935, %v980
      %v1064 = vadd.f32 %v936, %v982
      %v1065 = vadd.f32 %v937, %v984
      %v1066 = vadd.f32 %v938, %v986
      %v1067 = vadd.f32 %v939, %v988
      %v1068 = vadd.f32 %v940, %v990
      %v1069 = vadd.f32 %v941, %v992
      %v1070 = vadd.f32 %v942, %v994
      %v1071 = vadd.f32 %v943, %v996
      %v1072 = vadd.f32 %v944, %v998
      %v1073 = vadd.f32 %v945, %v1000
      %v1074 = vadd.f32 %v946, %v1002
      %v1075 = vadd.f32 %v947, %v1004
      %v1076 = vadd.f32 %v948, %v1006
      %v1077 = vadd.f32 %v949, %v1008
      %v1078 = vadd.f32 %v950, %v1010
      %v1079 = vadd.f32 %v951, %v1012
      %v1080 = vadd.f32 %v952, %v1014
      %v1081 = vadd.f32 %v953, %v1016
      %v1082 = vadd.f32 %v954, %v1018
      %v1083 = vld [vmem:[%s254] sm:$0x1]
      %v1085 = vlaneseq
      %v1086 = vshrl.u32 %v1085, 7
      %v1087 = vsub.s32 0, %v1086
      %v1088 = vrot.slane %v1083, %v1087
      %v1090 = vadd.f32 %v1051, %v1088
      %v1091 = vadd.f32 %v1052, %v1088
      %v1092 = vadd.f32 %v1053, %v1088
      %v1093 = vadd.f32 %v1054, %v1088
      %v1094 = vadd.f32 %v1055, %v1088
      %v1095 = vadd.f32 %v1056, %v1088
      %v1096 = vadd.f32 %v1057, %v1088
      %v1097 = vadd.f32 %v1058, %v1088
      %v1098 = vadd.f32 %v1059, %v1088
      %v1099 = vadd.f32 %v1060, %v1088
      %v1100 = vadd.f32 %v1061, %v1088
      %v1101 = vadd.f32 %v1062, %v1088
      %v1102 = vadd.f32 %v1063, %v1088
      %v1103 = vadd.f32 %v1064, %v1088
      %v1104 = vadd.f32 %v1065, %v1088
      %v1105 = vadd.f32 %v1066, %v1088
      %v1106 = vadd.f32 %v1067, %v1088
      %v1107 = vadd.f32 %v1068, %v1088
      %v1108 = vadd.f32 %v1069, %v1088
      %v1109 = vadd.f32 %v1070, %v1088
      %v1110 = vadd.f32 %v1071, %v1088
      %v1111 = vadd.f32 %v1072, %v1088
      %v1112 = vadd.f32 %v1073, %v1088
      %v1113 = vadd.f32 %v1074, %v1088
      %v1114 = vadd.f32 %v1075, %v1088
      %v1115 = vadd.f32 %v1076, %v1088
      %v1116 = vadd.f32 %v1077, %v1088
      %v1117 = vadd.f32 %v1078, %v1088
      %v1118 = vadd.f32 %v1079, %v1088
      %v1119 = vadd.f32 %v1080, %v1088
      %v1120 = vadd.f32 %v1081, %v1088
      %v1121 = vadd.f32 %v1082, %v1088
      %v1122 = vmax.f32 %v1090, 0.0
      %v1123 = vmax.f32 %v1091, 0.0
      %v1124 = vmax.f32 %v1092, 0.0
      %v1125 = vmax.f32 %v1093, 0.0
      %v1126 = vmax.f32 %v1094, 0.0
      %v1127 = vmax.f32 %v1095, 0.0
      %v1128 = vmax.f32 %v1096, 0.0
      %v1129 = vmax.f32 %v1097, 0.0
      %v1130 = vmax.f32 %v1098, 0.0
      %v1131 = vmax.f32 %v1099, 0.0
      %v1132 = vmax.f32 %v1100, 0.0
      %v1133 = vmax.f32 %v1101, 0.0
      %v1134 = vmax.f32 %v1102, 0.0
      %v1135 = vmax.f32 %v1103, 0.0
      %v1136 = vmax.f32 %v1104, 0.0
      %v1137 = vmax.f32 %v1105, 0.0
      %v1138 = vmax.f32 %v1106, 0.0
      %v1139 = vmax.f32 %v1107, 0.0
      %v1140 = vmax.f32 %v1108, 0.0
      %v1141 = vmax.f32 %v1109, 0.0
      %v1142 = vmax.f32 %v1110, 0.0
      %v1143 = vmax.f32 %v1111, 0.0
      %v1144 = vmax.f32 %v1112, 0.0
      %v1145 = vmax.f32 %v1113, 0.0
      %v1146 = vmax.f32 %v1114, 0.0
      %v1147 = vmax.f32 %v1115, 0.0
      %v1148 = vmax.f32 %v1116, 0.0
      %v1149 = vmax.f32 %v1117, 0.0
      %v1150 = vmax.f32 %v1118, 0.0
      %v1151 = vmax.f32 %v1119, 0.0
      %v1152 = vmax.f32 %v1120, 0.0
      %v1153 = vmax.f32 %v1121, 0.0
      %vm1154 = vcmask 64512
      %1155 = vst.msk [vmem:[%s263] sm:$0xff] %vm1154, %v1122
      %1156 = vst.msk [vmem:[%s263 + $0x8] sm:$0xff] %vm1154, %v1123
      %1157 = vst.msk [vmem:[%s263 + $0x10] sm:$0xff] %vm1154, %v1124
      %1158 = vst.msk [vmem:[%s263 + $0x18] sm:$0xff] %vm1154, %v1125
      %1159 = vst.msk [vmem:[%s263 + $0x20] sm:$0xff] %vm1154, %v1126
      %1160 = vst.msk [vmem:[%s263 + $0x28] sm:$0xff] %vm1154, %v1127
      %1161 = vst.msk [vmem:[%s263 + $0x30] sm:$0xff] %vm1154, %v1128
      %1162 = vst.msk [vmem:[%s263 + $0x38] sm:$0xff] %vm1154, %v1129
      %1163 = vst.msk [vmem:[%s263 + $0x40] sm:$0xff] %vm1154, %v1130
      %1164 = vst.msk [vmem:[%s263 + $0x48] sm:$0xff] %vm1154, %v1131
      %1165 = vst.msk [vmem:[%s263 + $0x50] sm:$0xff] %vm1154, %v1132
      %1166 = vst.msk [vmem:[%s263 + $0x58] sm:$0xff] %vm1154, %v1133
      %1167 = vst.msk [vmem:[%s263 + $0x60] sm:$0xff] %vm1154, %v1134
      %1168 = vst.msk [vmem:[%s263 + $0x68] sm:$0xff] %vm1154, %v1135
      %1169 = vst.msk [vmem:[%s263 + $0x70] sm:$0xff] %vm1154, %v1136
      %1170 = vst.msk [vmem:[%s263 + $0x78] sm:$0xff] %vm1154, %v1137
      %1171 = vst.msk [vmem:[%s263 + $0x80] sm:$0xff] %vm1154, %v1138
      %1172 = vst.msk [vmem:[%s263 + $0x88] sm:$0xff] %vm1154, %v1139
      %1173 = vst.msk [vmem:[%s263 + $0x90] sm:$0xff] %vm1154, %v1140
      %1174 = vst.msk [vmem:[%s263 + $0x98] sm:$0xff] %vm1154, %v1141
      %1175 = vst.msk [vmem:[%s263 + $0xa0] sm:$0xff] %vm1154, %v1142
      %1176 = vst.msk [vmem:[%s263 + $0xa8] sm:$0xff] %vm1154, %v1143
      %1177 = vst.msk [vmem:[%s263 + $0xb0] sm:$0xff] %vm1154, %v1144
      %1178 = vst.msk [vmem:[%s263 + $0xb8] sm:$0xff] %vm1154, %v1145
      %1179 = vst.msk [vmem:[%s263 + $0xc0] sm:$0xff] %vm1154, %v1146
      %1180 = vst.msk [vmem:[%s263 + $0xc8] sm:$0xff] %vm1154, %v1147
      %1181 = vst.msk [vmem:[%s263 + $0xd0] sm:$0xff] %vm1154, %v1148
      %1182 = vst.msk [vmem:[%s263 + $0xd8] sm:$0xff] %vm1154, %v1149
      %1183 = vst.msk [vmem:[%s263 + $0xe0] sm:$0xff] %vm1154, %v1150
      %1184 = vst.msk [vmem:[%s263 + $0xe8] sm:$0xff] %vm1154, %v1151
      %1185 = vst.msk [vmem:[%s263 + $0xf0] sm:$0xff] %vm1154, %v1152
      %1186 = vst.msk [vmem:[%s263 + $0xf8] sm:$0xff] %vm1154, %v1153
      %s1187 = smul.u32 32, %s20
      %p1188 = scmp.lt.s32.totalorder %s19, 1
      %s1189 = scalar_select %p1188, %s19, 1
      %p1190 = scmp.lt.s32.totalorder %s1187, 31
      %s1191 = scalar_select %p1190, %s1187, 31
      %s1192 = smul.addr %s1189, 32
      %s1193 = sadd.s32 %s1191, %s1192
      %s1194 = smul.addr %s1193, 8
      %s1195 = scalar_lea.vmem %s4, %s1194
      // Predicated region
      $region37: #{one_conv_forward.5} parent=35 // pred_check
        %p1196 = pneg %p148
      $region38: #{one_conv_forward.5} parent=35 // pred_check_branch
        %1198 = sbr.rel (%p1196) target = $region40
      $region39: #{one_conv_forward.5} parent=35 // pred_region
        %s1199 = smul.u32 32, %s20
      $region40: #{one_conv_forward.5} parent=35 // pred_fallthru
        _
    $region36: #{one_conv_forward.5} parent=5 // pred_fallthru
      _
    %p1200 = scmp.le.s32.totalorder 2, %s10
    // Predicated region
    $region41: #{one_conv_forward.5} parent=5 // pred_check
      %p1201 = pneg %p1200
    $region42: #{one_conv_forward.5} parent=5 // pred_check_branch
      %1203 = sbr.rel (%p1201) target = $region44
    $region43: #{one_conv_forward.5} parent=5 // pred_region
      %s1204 = ssub.s32 %s10, 2
      // Predicated region
      $region45: #{one_conv_forward.5} parent=43 // pred_check
        %p1205 = pneg %p154
      $region46: #{one_conv_forward.5} parent=43 // pred_check_branch
        %1207 = sbr.rel (%p1205) target = $region48
      $region47: #{one_conv_forward.5} parent=43 // pred_region
        %s1208 = smul.u32 32, %s22
        %p1209 = scmp.lt.s32.totalorder %s21, 1
        %s1210 = scalar_select %p1209, %s21, 1
        %p1211 = scmp.lt.s32.totalorder %s1208, 31
        %s1212 = scalar_select %p1211, %s1208, 31
        %s1213 = smul.addr %s1210, 32
        %s1214 = sadd.s32 %s1212, %s1213
        %s1215 = smul.addr %s1214, 8
        %s1216 = scalar_lea.vmem %s4, %s1215
      $region48: #{one_conv_forward.5} parent=43 // pred_fallthru
        _
    $region44: #{one_conv_forward.5} parent=5 // pred_fallthru
      _
  $region6: #{one_conv_forward.5} parent=0 // loop_footer
    %s14 = sadd.s32 1, %s10
  $region7: #{one_conv_forward.5} parent=0 // loop_footer_branch
    %9 = sbr.rel target = $region3
  $region8: #{one_conv_forward.5} parent=0 // loop_exit
    _

// kernel: one_conv_forward.4
$region0: #{one_conv_forward.4}
  #allocation0 [shape = 'u32[]', space=smem, size = 0x4, offset = 0x4, fixed_abs, tag = 'smem constant byte address 0x4 - core index']
  #allocation1 [shape = 'u32[144,128]{1,0:T(1,128)}', space=vmem, size = 0x12000, scoped, tag = 'internal scratch']
  %s0 = inlined_call_operand.vmem [shape: bf16[2,256,8], index: 0, kind: input, shape index: {}]
  %s1 = inlined_call_operand.vmem [shape: bf16[8,32], index: 1, kind: input, shape index: {}]
  %s2 = inlined_call_operand.vmem [shape: f32[2,1,32], index: 2, kind: input, shape index: {}]
  %s3 = inlined_call_operand.vmem [shape: f32[2,1,8], index: 3, kind: input, shape index: {}]
  %s4 = inlined_call_operand.vmem [shape: f32[2,256,8], index: 4, kind: output, shape index: {}]
  %s5 = sld [smem:[#allocation0]]
  $region49: #{one_conv_forward.4} parent=0
    _
  %s7 = ssub.s32 1, %s5
  %s8 = scalar_select 0, %s7, %s5
  loop: start=0, step=1, limit=4
  $region2: #{one_conv_forward.4} parent=0 // loop_pre_header
    _
  $region3: #{one_conv_forward.4} parent=0 // loop_header
    %s10 = sphi 0, %s14
    %p11 = scmp.ge.s32.totalorder %s10, 4
    %s17 = sphi 0, %s29
    %s18 = sphi 0, %s25
    %s19 = sphi 0, %s17
    %s20 = sphi 0, %s18
    %s21 = sphi 0, %s19
    %s22 = sphi 0, %s20
    %s34 = sphi 0, %s36
    %s37 = sphi 0, %s34
    %s38 = sphi 0, %s37
    %s54 = sphi 0, %s38
    %s58 = sphi 0, %s58
    %s60 = sphi 0, %s58
    %s61 = sphi 0, %s60
    %s75 = sphi 0, %s61
    %s81 = sphi 0, %s83
    %s84 = sphi 0, %s81
    %s85 = sphi 0, %s84
    %s101 = sphi 0, %s85
    %s107 = sphi 0, %s109
    %s110 = sphi 0, %s107
    %s111 = sphi 0, %s110
    %s127 = sphi 0, %s111
    %s135 = sphi 0, %s137
    %s138 = sphi 0, %s135
    %s139 = sphi 0, %s138
    %s155 = sphi 0, %s139
  $region4: #{one_conv_forward.4} parent=0 // loop_header_branch
    %13 = sbr.rel (%p11) target = $region8
  $region5: #{one_conv_forward.4} parent=0 // loop_body
    %s15 = ssub.s32 %s10, 1
    %s16 = ssub.s32 %s10, 2
    %s23 = sadd.s32 1, %s18
    %p24 = scmp.ge.s32.totalorder %s23, 1
    %s25 = scalar_select %p24, 0, %s23
    %s26 = sadd.s32 1, %s17
    %s27 = scalar_select %p24, %s26, %s17
    %p28 = scmp.ge.s32.totalorder %s27, 2
    %s29 = scalar_select %p28, 0, %s27
    %s30 = ssub.s32 %s17, %s29
    %s31 = ssub.s32 %s18, %s25
    %s32 = sor.u32 %s30, %s31
    %p33 = scmp.eq.s32.totalorder %s32, 0
    %s35 = sadd.s32 %s34, 1
    %s36 = scalar_select %p33, %s34, %s35
    %p39 = pneg %p33
    %p40 = scmp.eq.s32.totalorder %s10, 1
    %p41 = por %p39, %p40
    %p42 = scmp.ne.s32.totalorder %s34, %s37
    %p43 = scmp.eq.s32.totalorder %s10, 0
    %p44 = por %p42, %p43
    %p45 = scmp.ne.s32.totalorder %s34, %s37
    %p46 = scmp.eq.s32.totalorder %s15, 1
    %p47 = por %p45, %p46
    %p48 = scmp.ne.s32.totalorder %s37, %s38
    %p49 = scmp.eq.s32.totalorder %s15, 0
    %p50 = por %p48, %p49
    %p51 = scmp.ne.s32.totalorder %s37, %s38
    %p52 = scmp.eq.s32.totalorder %s16, 1
    %p53 = por %p51, %p52
    %p55 = scmp.ne.s32.totalorder %s38, %s54
    %p56 = scmp.eq.s32.totalorder %s16, 0
    %p57 = por %p55, %p56
    %s59 = sadd.s32 %s58, 1
    %p62 = scmp.eq.s32.totalorder %s10, 1
    %p63 = scmp.ne.s32.totalorder %s58, %s60
    %p64 = scmp.eq.s32.totalorder %s10, 0
    %p65 = por %p63, %p64
    %p66 = scmp.ne.s32.totalorder %s58, %s60
    %p67 = scmp.eq.s32.totalorder %s15, 1
    %p68 = por %p66, %p67
    %p69 = scmp.ne.s32.totalorder %s60, %s61
    %p70 = scmp.eq.s32.totalorder %s15, 0
    %p71 = por %p69, %p70
    %p72 = scmp.ne.s32.totalorder %s60, %s61
    %p73 = scmp.eq.s32.totalorder %s16, 1
    %p74 = por %p72, %p73
    %p76 = scmp.ne.s32.totalorder %s61, %s75
    %p77 = scmp.eq.s32.totalorder %s16, 0
    %p78 = por %p76, %p77
    %s79 = ssub.s32 %s17, %s29
    %p80 = scmp.eq.s32.totalorder %s79, 0
    %s82 = sadd.s32 %s81, 1
    %s83 = scalar_select %p80, %s81, %s82
    %p86 = pneg %p80
    %p87 = scmp.eq.s32.totalorder %s10, 1
    %p88 = por %p86, %p87
    %p89 = scmp.ne.s32.totalorder %s81, %s84
    %p90 = scmp.eq.s32.totalorder %s10, 0
    %p91 = por %p89, %p90
    %p92 = scmp.ne.s32.totalorder %s81, %s84
    %p93 = scmp.eq.s32.totalorder %s15, 1
    %p94 = por %p92, %p93
    %p95 = scmp.ne.s32.totalorder %s84, %s85
    %p96 = scmp.eq.s32.totalorder %s15, 0
    %p97 = por %p95, %p96
    %p98 = scmp.ne.s32.totalorder %s84, %s85
    %p99 = scmp.eq.s32.totalorder %s16, 1
    %p100 = por %p98, %p99
    %p102 = scmp.ne.s32.totalorder %s85, %s101
    %p103 = scmp.eq.s32.totalorder %s16, 0
    %p104 = por %p102, %p103
    %s105 = ssub.s32 %s17, %s29
    %p106 = scmp.eq.s32.totalorder %s105, 0
    %s108 = sadd.s32 %s107, 1
    %s109 = scalar_select %p106, %s107, %s108
    %p112 = pneg %p106
    %p113 = scmp.eq.s32.totalorder %s10, 1
    %p114 = por %p112, %p113
    %p115 = scmp.ne.s32.totalorder %s107, %s110
    %p116 = scmp.eq.s32.totalorder %s10, 0
    %p117 = por %p115, %p116
    %p118 = scmp.ne.s32.totalorder %s107, %s110
    %p119 = scmp.eq.s32.totalorder %s15, 1
    %p120 = por %p118, %p119
    %p121 = scmp.ne.s32.totalorder %s110, %s111
    %p122 = scmp.eq.s32.totalorder %s15, 0
    %p123 = por %p121, %p122
    %p124 = scmp.ne.s32.totalorder %s110, %s111
    %p125 = scmp.eq.s32.totalorder %s16, 1
    %p126 = por %p124, %p125
    %p128 = scmp.ne.s32.totalorder %s111, %s127
    %p129 = scmp.eq.s32.totalorder %s16, 0
    %p130 = por %p128, %p129
    %s131 = ssub.s32 %s17, %s29
    %s132 = ssub.s32 %s18, %s25
    %s133 = sor.u32 %s131, %s132
    %p134 = scmp.eq.s32.totalorder %s133, 0
    %s136 = sadd.s32 %s135, 1
    %s137 = scalar_select %p134, %s135, %s136
    %p140 = pneg %p134
    %p141 = scmp.eq.s32.totalorder %s10, 1
    %p142 = por %p140, %p141
    %p143 = scmp.ne.s32.totalorder %s135, %s138
    %p144 = scmp.eq.s32.totalorder %s10, 0
    %p145 = por %p143, %p144
    %p146 = scmp.ne.s32.totalorder %s135, %s138
    %p147 = scmp.eq.s32.totalorder %s15, 1
    %p148 = por %p146, %p147
    %p149 = scmp.ne.s32.totalorder %s138, %s139
    %p150 = scmp.eq.s32.totalorder %s15, 0
    %p151 = por %p149, %p150
    %p152 = scmp.ne.s32.totalorder %s138, %s139
    %p153 = scmp.eq.s32.totalorder %s16, 1
    %p154 = por %p152, %p153
    %p156 = scmp.ne.s32.totalorder %s139, %s155
    %p157 = scmp.eq.s32.totalorder %s16, 0
    %p158 = por %p156, %p157
    %p159 = scmp.le.s32.totalorder 1, %s10
    %p160 = scmp.lt.s32.totalorder %s10, 3
    %p161 = pnand %p159, %p160
    %p162 = pneg %p161
    // Predicated region
    $region9: #{one_conv_forward.4} parent=5 // pred_check
      _
    $region10: #{one_conv_forward.4} parent=5 // pred_check_branch
      %164 = sbr.rel (%p161) target = $region12
    $region11: #{one_conv_forward.4} parent=5 // pred_region
      %s165 = ssub.s32 %s10, 1
      // Predicated region
      $region13: #{one_conv_forward.4} parent=11 // pred_check
        %p166 = pneg %p71
      $region14: #{one_conv_forward.4} parent=11 // pred_check_branch
        %168 = sbr.rel (%p166) target = $region16
      $region15: #{one_conv_forward.4} parent=11 // pred_region
        _
      $region16: #{one_conv_forward.4} parent=11 // pred_fallthru
        _
    $region12: #{one_conv_forward.4} parent=5 // pred_fallthru
      _
    %p169 = scmp.lt.s32.totalorder %s10, 2
    // Predicated region
    $region17: #{one_conv_forward.4} parent=5 // pred_check
      %p170 = pneg %p169
    $region18: #{one_conv_forward.4} parent=5 // pred_check_branch
      %172 = sbr.rel (%p170) target = $region20
    $region19: #{one_conv_forward.4} parent=5 // pred_region
      // Predicated region
      $region21: #{one_conv_forward.4} parent=19 // pred_check
        %p173 = pneg %p44
      $region22: #{one_conv_forward.4} parent=19 // pred_check_branch
        %175 = sbr.rel (%p173) target = $region24
      $region23: #{one_conv_forward.4} parent=19 // pred_region
        %s176 = smul.u32 32, %s18
        %p177 = scmp.lt.s32.totalorder %s17, 1
        %s178 = scalar_select %p177, %s17, 1
        %p179 = scmp.lt.s32.totalorder %s176, 31
        %s180 = scalar_select %p179, %s176, 31
        %s181 = smul.addr %s178, 32
        %s182 = sadd.s32 %s180, %s181
        %s183 = smul.addr %s182, 4
        %s184 = scalar_lea.vmem %s0, %s183
        %s185 = smul.u32 32, %s18
      $region24: #{one_conv_forward.4} parent=19 // pred_fallthru
        _
      // Predicated region
      $region25: #{one_conv_forward.4} parent=19 // pred_check
        %p186 = pneg %p91
      $region26: #{one_conv_forward.4} parent=19 // pred_check_branch
        %188 = sbr.rel (%p186) target = $region28
      $region27: #{one_conv_forward.4} parent=19 // pred_region
        %p189 = scmp.lt.s32.totalorder %s17, 1
        %s190 = scalar_select %p189, %s17, 1
        %s191 = scalar_lea.vmem %s2, %s190
      $region28: #{one_conv_forward.4} parent=19 // pred_fallthru
        _
      // Predicated region
      $region29: #{one_conv_forward.4} parent=19 // pred_check
        %p192 = pneg %p117
      $region30: #{one_conv_forward.4} parent=19 // pred_check_branch
        %194 = sbr.rel (%p192) target = $region32
      $region31: #{one_conv_forward.4} parent=19 // pred_region
        %p195 = scmp.lt.s32.totalorder %s17, 1
        %s196 = scalar_select %p195, %s17, 1
        %s197 = scalar_lea.vmem %s3, %s196
      $region32: #{one_conv_forward.4} parent=19 // pred_fallthru
        _
    $region20: #{one_conv_forward.4} parent=5 // pred_fallthru
      _
    %p198 = scmp.le.s32.totalorder 1, %s10
    %p199 = scmp.lt.s32.totalorder %s10, 3
    %p200 = pnand %p198, %p199
    %p201 = pneg %p200
    // Predicated region
    $region33: #{one_conv_forward.4} parent=5 // pred_check
      _
    $region34: #{one_conv_forward.4} parent=5 // pred_check_branch
      %203 = sbr.rel (%p200) target = $region36
    $region35: #{one_conv_forward.4} parent=5 // pred_region
      %s204 = ssub.s32 %s10, 1
      %s205 = smul.u32 32, %s20
      %p206 = scmp.lt.s32.totalorder %s19, 1
      %s207 = scalar_select %p206, %s19, 1
      %p208 = scmp.lt.s32.totalorder %s205, 31
      %s209 = scalar_select %p208, %s205, 31
      %s210 = smul.addr %s207, 32
      %s211 = sadd.s32 %s209, %s210
      %s212 = smul.addr %s211, 4
      %s213 = scalar_lea.vmem %s0, %s212
      %p214 = pneg %p50
      %p215 = pneg %p47
      %p216 = pneg %p71
      %p217 = pneg %p68
      %p218 = scmp.lt.s32.totalorder %s19, 1
      %s219 = scalar_select %p218, %s19, 1
      %s220 = scalar_lea.vmem %s2, %s219
      %p221 = pneg %p97
      %p222 = pneg %p94
      %p223 = scmp.lt.s32.totalorder %s19, 1
      %s224 = scalar_select %p223, %s19, 1
      %s225 = scalar_lea.vmem %s3, %s224
      %p226 = pneg %p123
      %p227 = pneg %p120
      %p228 = pneg %p151
      %p229 = pneg %p148
      %s230 = smul.u32 32, %s20
      %p231 = scmp.lt.s32.totalorder %s19, 1
      %s232 = scalar_select %p231, %s19, 1
      %p233 = scmp.lt.s32.totalorder %s230, 31
      %s234 = scalar_select %p233, %s230, 31
      %s235 = smul.addr %s232, 32
      %s236 = sadd.s32 %s234, %s235
      %s237 = smul.addr %s236, 8
      %s238 = scalar_lea.vmem %s4, %s237
      %s239 = smul.u32 32, %s20
      %p240 = scmp.lt.s32.totalorder %s19, 1
      %s241 = scalar_select %p240, %s19, 1
      %p242 = scmp.lt.s32.totalorder %s239, 31
      %s243 = scalar_select %p242, %s239, 31
      %s244 = smul.addr %s241, 32
      %s245 = sadd.s32 %s243, %s244
      %s246 = smul.addr %s245, 4
      %s247 = scalar_lea.vmem %s0, %s246
      %s248 = smul.u32 32, %s20
      %p249 = scmp.lt.s32.totalorder %s19, 1
      %s250 = scalar_select %p249, %s19, 1
      %s251 = scalar_lea.vmem %s2, %s250
      %p252 = scmp.lt.s32.totalorder %s19, 1
      %s253 = scalar_select %p252, %s19, 1
      %s254 = scalar_lea.vmem %s3, %s253
      %s255 = smul.u32 32, %s20
      %p256 = scmp.lt.s32.totalorder %s19, 1
      %s257 = scalar_select %p256, %s19, 1
      %p258 = scmp.lt.s32.totalorder %s255, 31
      %s259 = scalar_select %p258, %s255, 31
      %s260 = smul.addr %s257, 32
      %s261 = sadd.s32 %s259, %s260
      %s262 = smul.addr %s261, 8
      %s263 = scalar_lea.vmem %s4, %s262
      %s264 = smul.u32 32, %s20
      %v266 = vld [vmem:[%s247] sm:$0xf]
      %v267 = vld [vmem:[%s247 + $0x4] sm:$0xf]
      %v268 = vld [vmem:[%s247 + $0x8] sm:$0xf]
      %v269 = vld [vmem:[%s247 + $0xc] sm:$0xf]
      %v270 = vld [vmem:[%s247 + $0x10] sm:$0xf]
      %v271 = vld [vmem:[%s247 + $0x14] sm:$0xf]
      %v272 = vld [vmem:[%s247 + $0x18] sm:$0xf]
      %v273 = vld [vmem:[%s247 + $0x1c] sm:$0xf]
      %v274 = vld [vmem:[%s247 + $0x20] sm:$0xf]
      %v275 = vld [vmem:[%s247 + $0x24] sm:$0xf]
      %v276 = vld [vmem:[%s247 + $0x28] sm:$0xf]
      %v277 = vld [vmem:[%s247 + $0x2c] sm:$0xf]
      %v278 = vld [vmem:[%s247 + $0x30] sm:$0xf]
      %v279 = vld [vmem:[%s247 + $0x34] sm:$0xf]
      %v280 = vld [vmem:[%s247 + $0x38] sm:$0xf]
      %v281 = vld [vmem:[%s247 + $0x3c] sm:$0xf]
      %v282 = vld [vmem:[%s247 + $0x40] sm:$0xf]
      %v283 = vld [vmem:[%s247 + $0x44] sm:$0xf]
      %v284 = vld [vmem:[%s247 + $0x48] sm:$0xf]
      %v285 = vld [vmem:[%s247 + $0x4c] sm:$0xf]
      %v286 = vld [vmem:[%s247 + $0x50] sm:$0xf]
      %v287 = vld [vmem:[%s247 + $0x54] sm:$0xf]
      %v288 = vld [vmem:[%s247 + $0x58] sm:$0xf]
      %v289 = vld [vmem:[%s247 + $0x5c] sm:$0xf]
      %v290 = vld [vmem:[%s247 + $0x60] sm:$0xf]
      %v291 = vld [vmem:[%s247 + $0x64] sm:$0xf]
      %v292 = vld [vmem:[%s247 + $0x68] sm:$0xf]
      %v293 = vld [vmem:[%s247 + $0x6c] sm:$0xf]
      %v294 = vld [vmem:[%s247 + $0x70] sm:$0xf]
      %v295 = vld [vmem:[%s247 + $0x74] sm:$0xf]
      %v296 = vld [vmem:[%s247 + $0x78] sm:$0xf]
      %v297 = vld [vmem:[%s247 + $0x7c] sm:$0xf]
      %v298 = vld [vmem:[%s1] sm:$0xf]
      %v331 = vunpack.c.l.b16 %v266
      %v332 = vunpack.c.l.b16 %v267
      %v333 = vunpack.c.l.b16 %v268
      %v334 = vunpack.c.l.b16 %v269
      %v335 = vunpack.c.l.b16 %v270
      %v336 = vunpack.c.l.b16 %v271
      %v337 = vunpack.c.l.b16 %v272
      %v338 = vunpack.c.l.b16 %v273
      %v339 = vunpack.c.l.b16 %v274
      %v340 = vunpack.c.l.b16 %v275
      %v341 = vunpack.c.l.b16 %v276
      %v342 = vunpack.c.l.b16 %v277
      %v343 = vunpack.c.l.b16 %v278
      %v344 = vunpack.c.l.b16 %v279
      %v345 = vunpack.c.l.b16 %v280
      %v346 = vunpack.c.l.b16 %v281
      %v347 = vunpack.c.l.b16 %v282
      %v348 = vunpack.c.l.b16 %v283
      %v349 = vunpack.c.l.b16 %v284
      %v350 = vunpack.c.l.b16 %v285
      %v351 = vunpack.c.l.b16 %v286
      %v352 = vunpack.c.l.b16 %v287
      %v353 = vunpack.c.l.b16 %v288
      %v354 = vunpack.c.l.b16 %v289
      %v355 = vunpack.c.l.b16 %v290
      %v356 = vunpack.c.l.b16 %v291
      %v357 = vunpack.c.l.b16 %v292
      %v358 = vunpack.c.l.b16 %v293
      %v359 = vunpack.c.l.b16 %v294
      %v360 = vunpack.c.l.b16 %v295
      %v361 = vunpack.c.l.b16 %v296
      %v362 = vunpack.c.l.b16 %v297
      %v363 = vpack.c.b16 %v332, %v331
      %v364 = vpack.c.b16 %v334, %v333
      %v365 = vpack.c.b16 %v336, %v335
      %v366 = vpack.c.b16 %v338, %v337
      %v367 = vpack.c.b16 %v340, %v339
      %v368 = vpack.c.b16 %v342, %v341
      %v369 = vpack.c.b16 %v344, %v343
      %v370 = vpack.c.b16 %v346, %v345
      %v371 = vpack.c.b16 %v348, %v347
      %v372 = vpack.c.b16 %v350, %v349
      %v373 = vpack.c.b16 %v352, %v351
      %v374 = vpack.c.b16 %v354, %v353
      %v375 = vpack.c.b16 %v356, %v355
      %v376 = vpack.c.b16 %v358, %v357
      %v377 = vpack.c.b16 %v360, %v359
      %v378 = vpack.c.b16 %v362, %v361
      %vm379 = vcmask 64512
      %v381 = vsel %vm379, %v363, 0
      %v384 = vsel %vm379, %v364, 0
      %v387 = vsel %vm379, %v365, 0
      %v390 = vsel %vm379, %v366, 0
      %v393 = vsel %vm379, %v367, 0
      %v396 = vsel %vm379, %v368, 0
      %v399 = vsel %vm379, %v369, 0
      %v402 = vsel %vm379, %v370, 0
      %v405 = vsel %vm379, %v371, 0
      %v408 = vsel %vm379, %v372, 0
      %v411 = vsel %vm379, %v373, 0
      %v414 = vsel %vm379, %v374, 0
      %v417 = vsel %vm379, %v375, 0
      %v420 = vsel %vm379, %v376, 0
      %v423 = vsel %vm379, %v377, 0
      %v426 = vsel %vm379, %v378, 0
      %vm428 = vcmask 1043456
      %v430 = vsel %vm428, %v298, 0
      %432 = vmatprep.subr.bf16.mxu0 0
      %433 = vmatpush1.bf16.msra.mxu0 %v430
      %434 = vmatprep.subr.bf16.mxu0 0
      %435 = vmatpush1.bf16.msra.mxu0 0
      %436 = vmatprep.subr.bf16.mxu0 0
      %437 = vmatpush1.bf16.msra.mxu0 0
      %438 = vmatprep.subr.bf16.mxu0 0
      %439 = vmatpush1.bf16.msra.mxu0 0
      %440 = vmatprep.subr.bf16.mxu0 0
      %441 = vmatpush1.bf16.msra.mxu0 0
      %442 = vmatprep.subr.bf16.mxu0 0
      %443 = vmatpush1.bf16.msra.mxu0 0
      %444 = vmatprep.subr.bf16.mxu0 0
      %445 = vmatpush1.bf16.msra.mxu0 0
      %446 = vmatprep.subr.bf16.mxu0 0
      %447 = vmatpush1.bf16.msra.mxu0 0
      %448 = vmatprep.subr.bf16.mxu0 0
      %449 = vmatpush1.bf16.msra.mxu0 0
      %450 = vmatprep.subr.bf16.mxu0 0
      %451 = vmatpush1.bf16.msra.mxu0 0
      %452 = vmatprep.subr.bf16.mxu0 0
      %453 = vmatpush1.bf16.msra.mxu0 0
      %454 = vmatprep.subr.bf16.mxu0 0
      %455 = vmatpush1.bf16.msra.mxu0 0
      %456 = vmatprep.subr.bf16.mxu0 0
      %457 = vmatpush1.bf16.msra.mxu0 0
      %458 = vmatprep.subr.bf16.mxu0 0
      %459 = vmatpush1.bf16.msra.mxu0 0
      %460 = vmatprep.subr.bf16.mxu0 0
      %461 = vmatpush1.bf16.msra.mxu0 0
      %462 = vmatprep.subr.bf16.mxu0 0
      %463 = vmatpush1.bf16.msra.mxu0 0
      %464 = vmatprep.mubr.bf16.mxu0 0
      %465 = vmatmul.mubr.bf16.gmra.mrb[0].mxu0 %v381
      %v466 = vpop.f32.mrb[0].mxu0
      %v467 = vadd.f32 0.0, %v466
      %v468 = vpop.f32.mrb[0].mxu0
      %v469 = vpop.f32.mrb[0].mxu0
      %v470 = vadd.f32 0.0, %v469
      %v471 = vpop.f32.mrb[0].mxu0
      %472 = vmatprep.mubr.bf16.mxu0 0
      %473 = vmatmul.mubr.bf16.gmra.mrb[0].mxu0 %v384
      %v474 = vpop.f32.mrb[0].mxu0
      %v475 = vadd.f32 0.0, %v474
      %v476 = vpop.f32.mrb[0].mxu0
      %v477 = vpop.f32.mrb[0].mxu0
      %v478 = vadd.f32 0.0, %v477
      %v479 = vpop.f32.mrb[0].mxu0
      %480 = vmatprep.mubr.bf16.mxu0 0
      %481 = vmatmul.mubr.bf16.gmra.mrb[0].mxu0 %v387
      %v482 = vpop.f32.mrb[0].mxu0
      %v483 = vadd.f32 0.0, %v482
      %v484 = vpop.f32.mrb[0].mxu0
      %v485 = vpop.f32.mrb[0].mxu0
      %v486 = vadd.f32 0.0, %v485
      %v487 = vpop.f32.mrb[0].mxu0
      %488 = vmatprep.mubr.bf16.mxu0 0
      %489 = vmatmul.mubr.bf16.gmra.mrb[0].mxu0 %v390
      %v490 = vpop.f32.mrb[0].mxu0
      %v491 = vadd.f32 0.0, %v490
      %v492 = vpop.f32.mrb[0].mxu0
      %v493 = vpop.f32.mrb[0].mxu0
      %v494 = vadd.f32 0.0, %v493
      %v495 = vpop.f32.mrb[0].mxu0
      %496 = vmatprep.mubr.bf16.mxu0 0
      %497 = vmatmul.mubr.bf16.gmra.mrb[0].mxu0 %v393
      %v498 = vpop.f32.mrb[0].mxu0
      %v499 = vadd.f32 0.0, %v498
      %v500 = vpop.f32.mrb[0].mxu0
      %v501 = vpop.f32.mrb[0].mxu0
      %v502 = vadd.f32 0.0, %v501
      %v503 = vpop.f32.mrb[0].mxu0
      %504 = vmatprep.mubr.bf16.mxu0 0
      %505 = vmatmul.mubr.bf16.gmra.mrb[0].mxu0 %v396
      %v506 = vpop.f32.mrb[0].mxu0
      %v507 = vadd.f32 0.0, %v506
      %v508 = vpop.f32.mrb[0].mxu0
      %v509 = vpop.f32.mrb[0].mxu0
      %v510 = vadd.f32 0.0, %v509
      %v511 = vpop.f32.mrb[0].mxu0
      %512 = vmatprep.mubr.bf16.mxu0 0
      %513 = vmatmul.mubr.bf16.gmra.mrb[0].mxu0 %v399
      %v514 = vpop.f32.mrb[0].mxu0
      %v515 = vadd.f32 0.0, %v514
      %v516 = vpop.f32.mrb[0].mxu0
      %v517 = vpop.f32.mrb[0].mxu0
      %v518 = vadd.f32 0.0, %v517
      %v519 = vpop.f32.mrb[0].mxu0
      %520 = vmatprep.mubr.bf16.mxu0 0
      %521 = vmatmul.mubr.bf16.gmra.mrb[0].mxu0 %v402
      %v522 = vpop.f32.mrb[0].mxu0
      %v523 = vadd.f32 0.0, %v522
      %v524 = vpop.f32.mrb[0].mxu0
      %v525 = vpop.f32.mrb[0].mxu0
      %v526 = vadd.f32 0.0, %v525
      %v527 = vpop.f32.mrb[0].mxu0
      %528 = vmatprep.mubr.bf16.mxu0 0
      %529 = vmatmul.mubr.bf16.gmra.mrb[0].mxu0 %v405
      %v530 = vpop.f32.mrb[0].mxu0
      %v531 = vadd.f32 0.0, %v530
      %v532 = vpop.f32.mrb[0].mxu0
      %v533 = vpop.f32.mrb[0].mxu0
      %v534 = vadd.f32 0.0, %v533
      %v535 = vpop.f32.mrb[0].mxu0
      %536 = vmatprep.mubr.bf16.mxu0 0
      %537 = vmatmul.mubr.bf16.gmra.mrb[0].mxu0 %v408
      %v538 = vpop.f32.mrb[0].mxu0
      %v539 = vadd.f32 0.0, %v538
      %v540 = vpop.f32.mrb[0].mxu0
      %v541 = vpop.f32.mrb[0].mxu0
      %v542 = vadd.f32 0.0, %v541
      %v543 = vpop.f32.mrb[0].mxu0
      %544 = vmatprep.mubr.bf16.mxu0 0
      %545 = vmatmul.mubr.bf16.gmra.mrb[0].mxu0 %v411
      %v546 = vpop.f32.mrb[0].mxu0
      %v547 = vadd.f32 0.0, %v546
      %v548 = vpop.f32.mrb[0].mxu0
      %v549 = vpop.f32.mrb[0].mxu0
      %v550 = vadd.f32 0.0, %v549
      %v551 = vpop.f32.mrb[0].mxu0
      %552 = vmatprep.mubr.bf16.mxu0 0
      %553 = vmatmul.mubr.bf16.gmra.mrb[0].mxu0 %v414
      %v554 = vpop.f32.mrb[0].mxu0
      %v555 = vadd.f32 0.0, %v554
      %v556 = vpop.f32.mrb[0].mxu0
      %v557 = vpop.f32.mrb[0].mxu0
      %v558 = vadd.f32 0.0, %v557
      %v559 = vpop.f32.mrb[0].mxu0
      %560 = vmatprep.mubr.bf16.mxu0 0
      %561 = vmatmul.mubr.bf16.gmra.mrb[0].mxu0 %v417
      %v562 = vpop.f32.mrb[0].mxu0
      %v563 = vadd.f32 0.0, %v562
      %v564 = vpop.f32.mrb[0].mxu0
      %v565 = vpop.f32.mrb[0].mxu0
      %v566 = vadd.f32 0.0, %v565
      %v567 = vpop.f32.mrb[0].mxu0
      %568 = vmatprep.mubr.bf16.mxu0 0
      %569 = vmatmul.mubr.bf16.gmra.mrb[0].mxu0 %v420
      %v570 = vpop.f32.mrb[0].mxu0
      %v571 = vadd.f32 0.0, %v570
      %v572 = vpop.f32.mrb[0].mxu0
      %v573 = vpop.f32.mrb[0].mxu0
      %v574 = vadd.f32 0.0, %v573
      %v575 = vpop.f32.mrb[0].mxu0
      %576 = vmatprep.mubr.bf16.mxu0 0
      %577 = vmatmul.mubr.bf16.gmra.mrb[0].mxu0 %v423
      %v578 = vpop.f32.mrb[0].mxu0
      %v579 = vadd.f32 0.0, %v578
      %v580 = vpop.f32.mrb[0].mxu0
      %v581 = vpop.f32.mrb[0].mxu0
      %v582 = vadd.f32 0.0, %v581
      %v583 = vpop.f32.mrb[0].mxu0
      %584 = vmatprep.mubr.bf16.mxu0 0
      %585 = vmatmul.mubr.bf16.gmra.mrb[0].mxu0 %v426
      %v586 = vpop.f32.mrb[0].mxu0
      %v587 = vadd.f32 0.0, %v586
      %v588 = vpop.f32.mrb[0].mxu0
      %v589 = vpop.f32.mrb[0].mxu0
      %v590 = vadd.f32 0.0, %v589
      %v591 = vpop.f32.mrb[0].mxu0
      %592 = vdwg.mxu0
      %v593 = vld [vmem:[%s251] sm:$0x1]
      %v595 = vlaneseq
      %v596 = vshrl.u32 %v595, 7
      %v597 = vsub.s32 0, %v596
      %v598 = vrot.slane %v593, %v597
      %v600 = vmul.f32 %v467, %v598
      %v601 = vmul.f32 %v470, %v598
      %v602 = vmul.f32 %v475, %v598
      %v603 = vmul.f32 %v478, %v598
      %v604 = vmul.f32 %v483, %v598
      %v605 = vmul.f32 %v486, %v598
      %v606 = vmul.f32 %v491, %v598
      %v607 = vmul.f32 %v494, %v598
      %v608 = vmul.f32 %v499, %v598
      %v609 = vmul.f32 %v502, %v598
      %v610 = vmul.f32 %v507, %v598
      %v611 = vmul.f32 %v510, %v598
      %v612 = vmul.f32 %v515, %v598
      %v613 = vmul.f32 %v518, %v598
      %v614 = vmul.f32 %v523, %v598
      %v615 = vmul.f32 %v526, %v598
      %v616 = vmul.f32 %v531, %v598
      %v617 = vmul.f32 %v534, %v598
      %v618 = vmul.f32 %v539, %v598
      %v619 = vmul.f32 %v542, %v598
      %v620 = vmul.f32 %v547, %v598
      %v621 = vmul.f32 %v550, %v598
      %v622 = vmul.f32 %v555, %v598
      %v623 = vmul.f32 %v558, %v598
      %v624 = vmul.f32 %v563, %v598
      %v625 = vmul.f32 %v566, %v598
      %v626 = vmul.f32 %v571, %v598
      %v627 = vmul.f32 %v574, %v598
      %v628 = vmul.f32 %v579, %v598
      %v629 = vmul.f32 %v582, %v598
      %v630 = vmul.f32 %v587, %v598
      %v631 = vmul.f32 %v590, %v598
      %664 = vrot.lane.b32.xlu0 %v600, 120
      %v665 = vpop.permute.xlu0 %664
      %666 = vrot.lane.b32.xlu0 %v601, 120
      %v667 = vpop.permute.xlu0 %666
      %668 = vrot.lane.b32.xlu0 %v602, 120
      %v669 = vpop.permute.xlu0 %668
      %670 = vrot.lane.b32.xlu0 %v603, 120
      %v671 = vpop.permute.xlu0 %670
      %672 = vrot.lane.b32.xlu0 %v604, 120
      %v673 = vpop.permute.xlu0 %672
      %674 = vrot.lane.b32.xlu0 %v605, 120
      %v675 = vpop.permute.xlu0 %674
      %676 = vrot.lane.b32.xlu0 %v606, 120
      %v677 = vpop.permute.xlu0 %676
      %678 = vrot.lane.b32.xlu0 %v607, 120
      %v679 = vpop.permute.xlu0 %678
      %680 = vrot.lane.b32.xlu0 %v608, 120
      %v681 = vpop.permute.xlu0 %680
      %682 = vrot.lane.b32.xlu0 %v609, 120
      %v683 = vpop.permute.xlu0 %682
      %684 = vrot.lane.b32.xlu0 %v610, 120
      %v685 = vpop.permute.xlu0 %684
      %686 = vrot.lane.b32.xlu0 %v611, 120
      %v687 = vpop.permute.xlu0 %686
      %688 = vrot.lane.b32.xlu0 %v612, 120
      %v689 = vpop.permute.xlu0 %688
      %690 = vrot.lane.b32.xlu0 %v613, 120
      %v691 = vpop.permute.xlu0 %690
      %692 = vrot.lane.b32.xlu0 %v614, 120
      %v693 = vpop.permute.xlu0 %692
      %694 = vrot.lane.b32.xlu0 %v615, 120
      %v695 = vpop.permute.xlu0 %694
      %696 = vrot.lane.b32.xlu0 %v616, 120
      %v697 = vpop.permute.xlu0 %696
      %698 = vrot.lane.b32.xlu0 %v617, 120
      %v699 = vpop.permute.xlu0 %698
      %700 = vrot.lane.b32.xlu0 %v618, 120
      %v701 = vpop.permute.xlu0 %700
      %702 = vrot.lane.b32.xlu0 %v619, 120
      %v703 = vpop.permute.xlu0 %702
      %704 = vrot.lane.b32.xlu0 %v620, 120
      %v705 = vpop.permute.xlu0 %704
      %706 = vrot.lane.b32.xlu0 %v621, 120
      %v707 = vpop.permute.xlu0 %706
      %708 = vrot.lane.b32.xlu0 %v622, 120
      %v709 = vpop.permute.xlu0 %708
      %710 = vrot.lane.b32.xlu0 %v623, 120
      %v711 = vpop.permute.xlu0 %710
      %712 = vrot.lane.b32.xlu0 %v624, 120
      %v713 = vpop.permute.xlu0 %712
      %714 = vrot.lane.b32.xlu0 %v625, 120
      %v715 = vpop.permute.xlu0 %714
      %716 = vrot.lane.b32.xlu0 %v626, 120
      %v717 = vpop.permute.xlu0 %716
      %718 = vrot.lane.b32.xlu0 %v627, 120
      %v719 = vpop.permute.xlu0 %718
      %720 = vrot.lane.b32.xlu0 %v628, 120
      %v721 = vpop.permute.xlu0 %720
      %722 = vrot.lane.b32.xlu0 %v629, 120
      %v723 = vpop.permute.xlu0 %722
      %724 = vrot.lane.b32.xlu0 %v630, 120
      %v725 = vpop.permute.xlu0 %724
      %726 = vrot.lane.b32.xlu0 %v631, 120
      %v727 = vpop.permute.xlu0 %726
      %v760 = vadd.f32 %v600, %v665
      %v761 = vadd.f32 %v601, %v667
      %v762 = vadd.f32 %v602, %v669
      %v763 = vadd.f32 %v603, %v671
      %v764 = vadd.f32 %v604, %v673
      %v765 = vadd.f32 %v605, %v675
      %v766 = vadd.f32 %v606, %v677
      %v767 = vadd.f32 %v607, %v679
      %v768 = vadd.f32 %v608, %v681
      %v769 = vadd.f32 %v609, %v683
      %v770 = vadd.f32 %v610, %v685
      %v771 = vadd.f32 %v611, %v687
      %v772 = vadd.f32 %v612, %v689
      %v773 = vadd.f32 %v613, %v691
      %v774 = vadd.f32 %v614, %v693
      %v775 = vadd.f32 %v615, %v695
      %v776 = vadd.f32 %v616, %v697
      %v777 = vadd.f32 %v617, %v699
      %v778 = vadd.f32 %v618, %v701
      %v779 = vadd.f32 %v619, %v703
      %v780 = vadd.f32 %v620, %v705
      %v781 = vadd.f32 %v621, %v707
      %v782 = vadd.f32 %v622, %v709
      %v783 = vadd.f32 %v623, %v711
      %v784 = vadd.f32 %v624, %v713
      %v785 = vadd.f32 %v625, %v715
      %v786 = vadd.f32 %v626, %v717
      %v787 = vadd.f32 %v627, %v719
      %v788 = vadd.f32 %v628, %v721
      %v789 = vadd.f32 %v629, %v723
      %v790 = vadd.f32 %v630, %v725
      %v791 = vadd.f32 %v631, %v727
      %792 = vrot.lane.b32.xlu0 %v600, 112
      %v793 = vpop.permute.xlu0 %792
      %794 = vrot.lane.b32.xlu0 %v601, 112
      %v795 = vpop.permute.xlu0 %794
      %796 = vrot.lane.b32.xlu0 %v602, 112
      %v797 = vpop.permute.xlu0 %796
      %798 = vrot.lane.b32.xlu0 %v603, 112
      %v799 = vpop.permute.xlu0 %798
      %800 = vrot.lane.b32.xlu0 %v604, 112
      %v801 = vpop.permute.xlu0 %800
      %802 = vrot.lane.b32.xlu0 %v605, 112
      %v803 = vpop.permute.xlu0 %802
      %804 = vrot.lane.b32.xlu0 %v606, 112
      %v805 = vpop.permute.xlu0 %804
      %806 = vrot.lane.b32.xlu0 %v607, 112
      %v807 = vpop.permute.xlu0 %806
      %808 = vrot.lane.b32.xlu0 %v608, 112
      %v809 = vpop.permute.xlu0 %808
      %810 = vrot.lane.b32.xlu0 %v609, 112
      %v811 = vpop.permute.xlu0 %810
      %812 = vrot.lane.b32.xlu0 %v610, 112
      %v813 = vpop.permute.xlu0 %812
      %814 = vrot.lane.b32.xlu0 %v611, 112
      %v815 = vpop.permute.xlu0 %814
      %816 = vrot.lane.b32.xlu0 %v612, 112
      %v817 = vpop.permute.xlu0 %816
      %818 = vrot.lane.b32.xlu0 %v613, 112
      %v819 = vpop.permute.xlu0 %818
      %820 = vrot.lane.b32.xlu0 %v614, 112
      %v821 = vpop.permute.xlu0 %820
      %822 = vrot.lane.b32.xlu0 %v615, 112
      %v823 = vpop.permute.xlu0 %822
      %824 = vrot.lane.b32.xlu0 %v616, 112
      %v825 = vpop.permute.xlu0 %824
      %826 = vrot.lane.b32.xlu0 %v617, 112
      %v827 = vpop.permute.xlu0 %826
      %828 = vrot.lane.b32.xlu0 %v618, 112
      %v829 = vpop.permute.xlu0 %828
      %830 = vrot.lane.b32.xlu0 %v619, 112
      %v831 = vpop.permute.xlu0 %830
      %832 = vrot.lane.b32.xlu0 %v620, 112
      %v833 = vpop.permute.xlu0 %832
      %834 = vrot.lane.b32.xlu0 %v621, 112
      %v835 = vpop.permute.xlu0 %834
      %836 = vrot.lane.b32.xlu0 %v622, 112
      %v837 = vpop.permute.xlu0 %836
      %838 = vrot.lane.b32.xlu0 %v623, 112
      %v839 = vpop.permute.xlu0 %838
      %840 = vrot.lane.b32.xlu0 %v624, 112
      %v841 = vpop.permute.xlu0 %840
      %842 = vrot.lane.b32.xlu0 %v625, 112
      %v843 = vpop.permute.xlu0 %842
      %844 = vrot.lane.b32.xlu0 %v626, 112
      %v845 = vpop.permute.xlu0 %844
      %846 = vrot.lane.b32.xlu0 %v627, 112
      %v847 = vpop.permute.xlu0 %846
      %848 = vrot.lane.b32.xlu0 %v628, 112
      %v849 = vpop.permute.xlu0 %848
      %850 = vrot.lane.b32.xlu0 %v629, 112
      %v851 = vpop.permute.xlu0 %850
      %852 = vrot.lane.b32.xlu0 %v630, 112
      %v853 = vpop.permute.xlu0 %852
      %854 = vrot.lane.b32.xlu0 %v631, 112
      %v855 = vpop.permute.xlu0 %854
      %v888 = vadd.f32 %v760, %v793
      %v889 = vadd.f32 %v761, %v795
      %v890 = vadd.f32 %v762, %v797
      %v891 = vadd.f32 %v763, %v799
      %v892 = vadd.f32 %v764, %v801
      %v893 = vadd.f32 %v765, %v803
      %v894 = vadd.f32 %v766, %v805
      %v895 = vadd.f32 %v767, %v807
      %v896 = vadd.f32 %v768, %v809
      %v897 = vadd.f32 %v769, %v811
      %v898 = vadd.f32 %v770, %v813
      %v899 = vadd.f32 %v771, %v815
      %v900 = vadd.f32 %v772, %v817
      %v901 = vadd.f32 %v773, %v819
      %v902 = vadd.f32 %v774, %v821
      %v903 = vadd.f32 %v775, %v823
      %v904 = vadd.f32 %v776, %v825
      %v905 = vadd.f32 %v777, %v827
      %v906 = vadd.f32 %v778, %v829
      %v907 = vadd.f32 %v779, %v831
      %v908 = vadd.f32 %v780, %v833
      %v909 = vadd.f32 %v781, %v835
      %v910 = vadd.f32 %v782, %v837
      %v911 = vadd.f32 %v783, %v839
      %v912 = vadd.f32 %v784, %v841
      %v913 = vadd.f32 %v785, %v843
      %v914 = vadd.f32 %v786, %v845
      %v915 = vadd.f32 %v787, %v847
      %v916 = vadd.f32 %v788, %v849
      %v917 = vadd.f32 %v789, %v851
      %v918 = vadd.f32 %v790, %v853
      %v919 = vadd.f32 %v791, %v855
      %920 = vrot.lane.b32.xlu0 %v600, 104
      %v921 = vpop.permute.xlu0 %920
      %922 = vrot.lane.b32.xlu0 %v601, 104
      %v923 = vpop.permute.xlu0 %922
      %924 = vrot.lane.b32.xlu0 %v602, 104
      %v925 = vpop.permute.xlu0 %924
      %926 = vrot.lane.b32.xlu0 %v603, 104
      %v927 = vpop.permute.xlu0 %926
      %928 = vrot.lane.b32.xlu0 %v604, 104
      %v929 = vpop.permute.xlu0 %928
      %930 = vrot.lane.b32.xlu0 %v605, 104
      %v931 = vpop.permute.xlu0 %930
      %932 = vrot.lane.b32.xlu0 %v606, 104
      %v933 = vpop.permute.xlu0 %932
      %934 = vrot.lane.b32.xlu0 %v607, 104
      %v935 = vpop.permute.xlu0 %934
      %936 = vrot.lane.b32.xlu0 %v608, 104
      %v937 = vpop.permute.xlu0 %936
      %938 = vrot.lane.b32.xlu0 %v609, 104
      %v939 = vpop.permute.xlu0 %938
      %940 = vrot.lane.b32.xlu0 %v610, 104
      %v941 = vpop.permute.xlu0 %940
      %942 = vrot.lane.b32.xlu0 %v611, 104
      %v943 = vpop.permute.xlu0 %942
      %944 = vrot.lane.b32.xlu0 %v612, 104
      %v945 = vpop.permute.xlu0 %944
      %946 = vrot.lane.b32.xlu0 %v613, 104
      %v947 = vpop.permute.xlu0 %946
      %948 = vrot.lane.b32.xlu0 %v614, 104
      %v949 = vpop.permute.xlu0 %948
      %950 = vrot.lane.b32.xlu0 %v615, 104
      %v951 = vpop.permute.xlu0 %950
      %952 = vrot.lane.b32.xlu0 %v616, 104
      %v953 = vpop.permute.xlu0 %952
      %954 = vrot.lane.b32.xlu0 %v617, 104
      %v955 = vpop.permute.xlu0 %954
      %956 = vrot.lane.b32.xlu0 %v618, 104
      %v957 = vpop.permute.xlu0 %956
      %958 = vrot.lane.b32.xlu0 %v619, 104
      %v959 = vpop.permute.xlu0 %958
      %960 = vrot.lane.b32.xlu0 %v620, 104
      %v961 = vpop.permute.xlu0 %960
      %962 = vrot.lane.b32.xlu0 %v621, 104
      %v963 = vpop.permute.xlu0 %962
      %964 = vrot.lane.b32.xlu0 %v622, 104
      %v965 = vpop.permute.xlu0 %964
      %966 = vrot.lane.b32.xlu0 %v623, 104
      %v967 = vpop.permute.xlu0 %966
      %968 = vrot.lane.b32.xlu0 %v624, 104
      %v969 = vpop.permute.xlu0 %968
      %970 = vrot.lane.b32.xlu0 %v625, 104
      %v971 = vpop.permute.xlu0 %970
      %972 = vrot.lane.b32.xlu0 %v626, 104
      %v973 = vpop.permute.xlu0 %972
      %974 = vrot.lane.b32.xlu0 %v627, 104
      %v975 = vpop.permute.xlu0 %974
      %976 = vrot.lane.b32.xlu0 %v628, 104
      %v977 = vpop.permute.xlu0 %976
      %978 = vrot.lane.b32.xlu0 %v629, 104
      %v979 = vpop.permute.xlu0 %978
      %980 = vrot.lane.b32.xlu0 %v630, 104
      %v981 = vpop.permute.xlu0 %980
      %982 = vrot.lane.b32.xlu0 %v631, 104
      %v983 = vpop.permute.xlu0 %982
      %v1016 = vadd.f32 %v888, %v921
      %v1017 = vadd.f32 %v889, %v923
      %v1018 = vadd.f32 %v890, %v925
      %v1019 = vadd.f32 %v891, %v927
      %v1020 = vadd.f32 %v892, %v929
      %v1021 = vadd.f32 %v893, %v931
      %v1022 = vadd.f32 %v894, %v933
      %v1023 = vadd.f32 %v895, %v935
      %v1024 = vadd.f32 %v896, %v937
      %v1025 = vadd.f32 %v897, %v939
      %v1026 = vadd.f32 %v898, %v941
      %v1027 = vadd.f32 %v899, %v943
      %v1028 = vadd.f32 %v900, %v945
      %v1029 = vadd.f32 %v901, %v947
      %v1030 = vadd.f32 %v902, %v949
      %v1031 = vadd.f32 %v903, %v951
      %v1032 = vadd.f32 %v904, %v953
      %v1033 = vadd.f32 %v905, %v955
      %v1034 = vadd.f32 %v906, %v957
      %v1035 = vadd.f32 %v907, %v959
      %v1036 = vadd.f32 %v908, %v961
      %v1037 = vadd.f32 %v909, %v963
      %v1038 = vadd.f32 %v910, %v965
      %v1039 = vadd.f32 %v911, %v967
      %v1040 = vadd.f32 %v912, %v969
      %v1041 = vadd.f32 %v913, %v971
      %v1042 = vadd.f32 %v914, %v973
      %v1043 = vadd.f32 %v915, %v975
      %v1044 = vadd.f32 %v916, %v977
      %v1045 = vadd.f32 %v917, %v979
      %v1046 = vadd.f32 %v918, %v981
      %v1047 = vadd.f32 %v919, %v983
      %v1048 = vld [vmem:[%s254] sm:$0x1]
      %v1050 = vlaneseq
      %v1051 = vshrl.u32 %v1050, 7
      %v1052 = vsub.s32 0, %v1051
      %v1053 = vrot.slane %v1048, %v1052
      %v1055 = vadd.f32 %v1016, %v1053
      %v1056 = vadd.f32 %v1017, %v1053
      %v1057 = vadd.f32 %v1018, %v1053
      %v1058 = vadd.f32 %v1019, %v1053
      %v1059 = vadd.f32 %v1020, %v1053
      %v1060 = vadd.f32 %v1021, %v1053
      %v1061 = vadd.f32 %v1022, %v1053
      %v1062 = vadd.f32 %v1023, %v1053
      %v1063 = vadd.f32 %v1024, %v1053
      %v1064 = vadd.f32 %v1025, %v1053
      %v1065 = vadd.f32 %v1026, %v1053
      %v1066 = vadd.f32 %v1027, %v1053
      %v1067 = vadd.f32 %v1028, %v1053
      %v1068 = vadd.f32 %v1029, %v1053
      %v1069 = vadd.f32 %v1030, %v1053
      %v1070 = vadd.f32 %v1031, %v1053
      %v1071 = vadd.f32 %v1032, %v1053
      %v1072 = vadd.f32 %v1033, %v1053
      %v1073 = vadd.f32 %v1034, %v1053
      %v1074 = vadd.f32 %v1035, %v1053
      %v1075 = vadd.f32 %v1036, %v1053
      %v1076 = vadd.f32 %v1037, %v1053
      %v1077 = vadd.f32 %v1038, %v1053
      %v1078 = vadd.f32 %v1039, %v1053
      %v1079 = vadd.f32 %v1040, %v1053
      %v1080 = vadd.f32 %v1041, %v1053
      %v1081 = vadd.f32 %v1042, %v1053
      %v1082 = vadd.f32 %v1043, %v1053
      %v1083 = vadd.f32 %v1044, %v1053
      %v1084 = vadd.f32 %v1045, %v1053
      %v1085 = vadd.f32 %v1046, %v1053
      %v1086 = vadd.f32 %v1047, %v1053
      %v1087 = vmax.f32 %v1055, 0.0
      %v1088 = vmax.f32 %v1056, 0.0
      %v1089 = vmax.f32 %v1057, 0.0
      %v1090 = vmax.f32 %v1058, 0.0
      %v1091 = vmax.f32 %v1059, 0.0
      %v1092 = vmax.f32 %v1060, 0.0
      %v1093 = vmax.f32 %v1061, 0.0
      %v1094 = vmax.f32 %v1062, 0.0
      %v1095 = vmax.f32 %v1063, 0.0
      %v1096 = vmax.f32 %v1064, 0.0
      %v1097 = vmax.f32 %v1065, 0.0
      %v1098 = vmax.f32 %v1066, 0.0
      %v1099 = vmax.f32 %v1067, 0.0
      %v1100 = vmax.f32 %v1068, 0.0
      %v1101 = vmax.f32 %v1069, 0.0
      %v1102 = vmax.f32 %v1070, 0.0
      %v1103 = vmax.f32 %v1071, 0.0
      %v1104 = vmax.f32 %v1072, 0.0
      %v1105 = vmax.f32 %v1073, 0.0
      %v1106 = vmax.f32 %v1074, 0.0
      %v1107 = vmax.f32 %v1075, 0.0
      %v1108 = vmax.f32 %v1076, 0.0
      %v1109 = vmax.f32 %v1077, 0.0
      %v1110 = vmax.f32 %v1078, 0.0
      %v1111 = vmax.f32 %v1079, 0.0
      %v1112 = vmax.f32 %v1080, 0.0
      %v1113 = vmax.f32 %v1081, 0.0
      %v1114 = vmax.f32 %v1082, 0.0
      %v1115 = vmax.f32 %v1083, 0.0
      %v1116 = vmax.f32 %v1084, 0.0
      %v1117 = vmax.f32 %v1085, 0.0
      %v1118 = vmax.f32 %v1086, 0.0
      %1119 = vst.msk [vmem:[%s263] sm:$0xff] %vm379, %v1087
      %1120 = vst.msk [vmem:[%s263 + $0x8] sm:$0xff] %vm379, %v1088
      %1121 = vst.msk [vmem:[%s263 + $0x10] sm:$0xff] %vm379, %v1089
      %1122 = vst.msk [vmem:[%s263 + $0x18] sm:$0xff] %vm379, %v1090
      %1123 = vst.msk [vmem:[%s263 + $0x20] sm:$0xff] %vm379, %v1091
      %1124 = vst.msk [vmem:[%s263 + $0x28] sm:$0xff] %vm379, %v1092
      %1125 = vst.msk [vmem:[%s263 + $0x30] sm:$0xff] %vm379, %v1093
      %1126 = vst.msk [vmem:[%s263 + $0x38] sm:$0xff] %vm379, %v1094
      %1127 = vst.msk [vmem:[%s263 + $0x40] sm:$0xff] %vm379, %v1095
      %1128 = vst.msk [vmem:[%s263 + $0x48] sm:$0xff] %vm379, %v1096
      %1129 = vst.msk [vmem:[%s263 + $0x50] sm:$0xff] %vm379, %v1097
      %1130 = vst.msk [vmem:[%s263 + $0x58] sm:$0xff] %vm379, %v1098
      %1131 = vst.msk [vmem:[%s263 + $0x60] sm:$0xff] %vm379, %v1099
      %1132 = vst.msk [vmem:[%s263 + $0x68] sm:$0xff] %vm379, %v1100
      %1133 = vst.msk [vmem:[%s263 + $0x70] sm:$0xff] %vm379, %v1101
      %1134 = vst.msk [vmem:[%s263 + $0x78] sm:$0xff] %vm379, %v1102
      %1135 = vst.msk [vmem:[%s263 + $0x80] sm:$0xff] %vm379, %v1103
      %1136 = vst.msk [vmem:[%s263 + $0x88] sm:$0xff] %vm379, %v1104
      %1137 = vst.msk [vmem:[%s263 + $0x90] sm:$0xff] %vm379, %v1105
      %1138 = vst.msk [vmem:[%s263 + $0x98] sm:$0xff] %vm379, %v1106
      %1139 = vst.msk [vmem:[%s263 + $0xa0] sm:$0xff] %vm379, %v1107
      %1140 = vst.msk [vmem:[%s263 + $0xa8] sm:$0xff] %vm379, %v1108
      %1141 = vst.msk [vmem:[%s263 + $0xb0] sm:$0xff] %vm379, %v1109
      %1142 = vst.msk [vmem:[%s263 + $0xb8] sm:$0xff] %vm379, %v1110
      %1143 = vst.msk [vmem:[%s263 + $0xc0] sm:$0xff] %vm379, %v1111
      %1144 = vst.msk [vmem:[%s263 + $0xc8] sm:$0xff] %vm379, %v1112
      %1145 = vst.msk [vmem:[%s263 + $0xd0] sm:$0xff] %vm379, %v1113
      %1146 = vst.msk [vmem:[%s263 + $0xd8] sm:$0xff] %vm379, %v1114
      %1147 = vst.msk [vmem:[%s263 + $0xe0] sm:$0xff] %vm379, %v1115
      %1148 = vst.msk [vmem:[%s263 + $0xe8] sm:$0xff] %vm379, %v1116
      %1149 = vst.msk [vmem:[%s263 + $0xf0] sm:$0xff] %vm379, %v1117
      %1150 = vst.msk [vmem:[%s263 + $0xf8] sm:$0xff] %vm379, %v1118
      %s1151 = smul.u32 32, %s20
      %p1152 = scmp.lt.s32.totalorder %s19, 1
      %s1153 = scalar_select %p1152, %s19, 1
      %p1154 = scmp.lt.s32.totalorder %s1151, 31
      %s1155 = scalar_select %p1154, %s1151, 31
      %s1156 = smul.addr %s1153, 32
      %s1157 = sadd.s32 %s1155, %s1156
      %s1158 = smul.addr %s1157, 8
      %s1159 = scalar_lea.vmem %s4, %s1158
      // Predicated region
      $region37: #{one_conv_forward.4} parent=35 // pred_check
        %p1160 = pneg %p148
      $region38: #{one_conv_forward.4} parent=35 // pred_check_branch
        %1162 = sbr.rel (%p1160) target = $region40
      $region39: #{one_conv_forward.4} parent=35 // pred_region
        %s1163 = smul.u32 32, %s20
      $region40: #{one_conv_forward.4} parent=35 // pred_fallthru
        _
    $region36: #{one_conv_forward.4} parent=5 // pred_fallthru
      _
    %p1164 = scmp.le.s32.totalorder 2, %s10
    // Predicated region
    $region41: #{one_conv_forward.4} parent=5 // pred_check
      %p1165 = pneg %p1164
    $region42: #{one_conv_forward.4} parent=5 // pred_check_branch
      %1167 = sbr.rel (%p1165) target = $region44
    $region43: #{one_conv_forward.4} parent=5 // pred_region
      %s1168 = ssub.s32 %s10, 2
      // Predicated region
      $region45: #{one_conv_forward.4} parent=43 // pred_check
        %p1169 = pneg %p154
      $region46: #{one_conv_forward.4} parent=43 // pred_check_branch
        %1171 = sbr.rel (%p1169) target = $region48
      $region47: #{one_conv_forward.4} parent=43 // pred_region
        %s1172 = smul.u32 32, %s22
        %p1173 = scmp.lt.s32.totalorder %s21, 1
        %s1174 = scalar_select %p1173, %s21, 1
        %p1175 = scmp.lt.s32.totalorder %s1172, 31
        %s1176 = scalar_select %p1175, %s1172, 31
        %s1177 = smul.addr %s1174, 32
        %s1178 = sadd.s32 %s1176, %s1177
        %s1179 = smul.addr %s1178, 8
        %s1180 = scalar_lea.vmem %s4, %s1179
      $region48: #{one_conv_forward.4} parent=43 // pred_fallthru
        _
    $region44: #{one_conv_forward.4} parent=5 // pred_fallthru
      _
  $region6: #{one_conv_forward.4} parent=0 // loop_footer
    %s14 = sadd.s32 1, %s10
  $region7: #{one_conv_forward.4} parent=0 // loop_footer_branch
    %9 = sbr.rel target = $region3
  $region8: #{one_conv_forward.4} parent=0 // loop_exit
    _

</llo_original>
